<compile_context>
chip_gen: v5e
topology: v5e:2x2
jax: 0.10.0
libtpu: 0.0.40
codegen_flags: <defaults>
</compile_context>

<pallas_src>
import jax
import jax.numpy as jnp
from jax.experimental import pallas as pl
from jax.experimental.pallas import tpu as pltpu

EPS = 1e-5  # PyTorch LayerNorm default eps


# ----------------------------- helpers (traced inside kernels) -------------- #
def _leaky(x, slope):
    return jnp.where(x >= 0, x, slope * x)


def _ln_rows(y, g, b):
    # LayerNorm over the last dim of a 2-D tile (per row).
    mu = jnp.mean(y, axis=-1, keepdims=True)
    var = jnp.mean((y - mu) ** 2, axis=-1, keepdims=True)
    return (y - mu) * jax.lax.rsqrt(var + EPS) * g + b


def _ln_cm(y, g, b):
    # Per-sample LayerNorm over (channel, spatial) of a channel-major (C, bt, S)
    # tile; stats reduce over axes (0, 2), params broadcast as (C, 1, S).
    mu = jnp.mean(jnp.mean(y, axis=2, keepdims=True), axis=0, keepdims=True)
    d = y - mu
    var = jnp.mean(jnp.mean(d * d, axis=2, keepdims=True), axis=0, keepdims=True)
    return d * jax.lax.rsqrt(var + EPS) * g + b


# ----------------------------- host-side helpers ----------------------------- #
def _round_up(x, m):
    return ((x + m - 1) // m) * m


def _vmem_limit(bytes_needed):
    # Generation-aware scoped-VMEM limit: generous on v5e/v6e (128 MiB physical),
    # conservative on v7x (64 MiB per core, leave double-buffer headroom).
    ceiling = 48 * 1024 * 1024
    try:
        cap = int(pltpu.get_tpu_info().vmem_capacity_bytes)
        if cap >= 100 * 1024 * 1024:
            ceiling = 100 * 1024 * 1024
        else:
            ceiling = min(ceiling, int(cap * 3 // 4))
    except Exception:
        pass
    want = max(4 * int(bytes_needed), 32 * 1024 * 1024)
    return int(min(want, ceiling))


def _cparams(vmem_bytes, parallel_axes=0, arbitrary_axes=0):
    sem = ("parallel",) * parallel_axes + ("arbitrary",) * arbitrary_axes
    kwargs = dict(vmem_limit_bytes=_vmem_limit(vmem_bytes))
    if sem:
        kwargs["dimension_semantics"] = sem
    return pltpu.CompilerParams(**kwargs)


def _choose_batch_tiling(B, per_sample_bytes, cap=64):
    # Pad B to a multiple of 8 (sublane tile), with at least two batch tiles so
    # a "parallel" batch grid can be sharded across both v7x TensorCores.
    Bp = max(16, _round_up(B, 8))
    bt = min(cap, Bp // 2)
    bt = max(8, (bt // 8) * 8)
    while Bp % bt:
        bt -= 8
    budget = 12 * 1024 * 1024  # keep the per-step working set comfortably small
    while bt > 8 and bt * per_sample_bytes > budget:
        bt -= 8
        while Bp % bt:
            bt -= 8
    return Bp, bt


def _choose_dout_tile(dout, cap=2048):
    if dout <= cap:
        return dout
    tn = (cap // 128) * 128
    while tn >= 128 and dout % tn:
        tn -= 128
    return tn if (tn >= 128 and dout % tn == 0) else dout


_SMEM_SPEC = pl.BlockSpec(memory_space=pltpu.MemorySpace.SMEM)


def _full_spec(shape):
    shape = tuple(shape)
    return pl.BlockSpec(shape, lambda i, _nd=len(shape): (0,) * _nd)


# ----------------------------- Pallas kernels ------------------------------- #
def molconv_kernel(gm_ref, featn_ref, featc_ref,
                   wd_ref, wgm_ref,
                   dlng_ref, dlnb_ref, glng_ref, glnb_ref,
                   wupd_ref, ulng_ref, ulnb_ref,
                   out_ref):
    # gm:    (k,   bt, k*n)   gram channels; gm[0] doubles as the dist gate input
    # featn: (cin, bt, k*n)   gathered neighbour features
    # featc: (cin, bt, n)     centre features (broadcast over k in VMEM)
    k = gm_ref.shape[0]
    cin = featn_ref.shape[0]
    cout, _, n = out_ref.shape

    # distance gate: 1x1 conv (scalar SMEM weight) + per-sample LN + sigmoid
    gm0 = gm_ref[0]                                               # (bt, k*n)
    w1 = jax.nn.sigmoid(_ln_rows(gm0 * wd_ref[0], dlng_ref[...], dlnb_ref[...]))

    # gram gate: 1x1 conv over the k gram channels (scalar FMAs on the VPU)
    g = wgm_ref[0] * gm0
    for c in range(1, k):
        g = g + wgm_ref[c] * gm_ref[c]
    w2 = jax.nn.sigmoid(_ln_rows(g, glng_ref[...], glnb_ref[...]))

    w = w1 * w2
    omw = 1.0 - w

    # blend centre/neighbour features and apply the 1x1 update conv as
    # cin x cout scalar-broadcast FMAs (channel counts are tiny, so the VPU
    # beats a K=M<=16 MXU matmul and needs no weight broadcast / relayout).
    accs = [None] * cout
    for c in range(cin):
        fc = jnp.concatenate([featc_ref[c]] * k, axis=-1)          # (bt, k*n)
        f = w * featn_ref[c] + omw * fc
        for o in range(cout):
            t = wupd_ref[o, c] * f
            accs[o] = t if accs[o] is None else accs[o] + t
    y = jnp.stack(accs, axis=0)                                    # (cout, bt, k*n)

    y = _leaky(_ln_cm(y, ulng_ref[...], ulnb_ref[...]), 0.02)

    # mean over the k neighbours: k contiguous lane slabs of width n (VPU adds)
    acc = y[:, :, 0:n]
    for j in range(1, k):
        acc = acc + y[:, :, j * n:(j + 1) * n]
    out_ref[...] = acc * (1.0 / k)


def _make_pool_kernel(n_layers):
    def kernel(*refs):
        xs = refs[:n_layers]                            # (C_i, bt, N) each
        mask_ref = refs[n_layers]                       # (bt, N)
        w_refs = refs[n_layers + 1:2 * n_layers + 1]    # SMEM (E, C_i) each
        g_ref = refs[2 * n_layers + 1]                  # (E, 1, N)
        b_ref = refs[2 * n_layers + 2]
        out_ref = refs[-1]                              # (bt, E)
        E = out_ref.shape[1]

        # Conv1d(emb, emb, 1, bias=False) with the weight split by input group:
        # summing the per-group contributions == implicit channel concat of the
        # per-layer encoder outputs (never materialised in HBM).
        ys = []
        for e in range(E):
            acc = None
            for xr, wr in zip(xs, w_refs):
                for c in range(xr.shape[0]):
                    t = wr[e, c] * xr[c]
                    acc = t if acc is None else acc + t
            ys.append(acc)                              # (bt, N)
        y = jnp.stack(ys, axis=0)                       # (E, bt, N)
        y = _leaky(_ln_cm(y, g_ref[...], b_ref[...]), 0.2)

        # masked max (-inf fill) + masked mean with the 0.1 count clamp
        m = mask_ref[...]                               # (bt, N) 0/1
        max_p = jnp.max(jnp.where(m[None] > 0, y, -jnp.inf), axis=2)   # (E, bt)
        sum_p = jnp.sum(y * m[None], axis=2)                            # (E, bt)
        cnt = jnp.maximum(jnp.sum(m, axis=1, keepdims=True), 0.1)       # (bt, 1)
        out_ref[...] = jnp.transpose(max_p) + jnp.transpose(sum_p) / cnt
    return kernel


def _make_decoder_kernel(n_blocks, identity_res):
    def kernel(*refs):
        x_ref = refs[0]
        pos = 1
        blocks = []
        for bi in range(n_blocks):
            if identity_res[bi]:
                blocks.append((None,) + tuple(refs[pos:pos + 9]))
                pos += 9
            else:
                blocks.append(tuple(refs[pos:pos + 10]))
                pos += 10
        wfc_ref = refs[pos]
        bfc_ref = refs[pos + 1]
        out_ref = refs[pos + 2]
        h_scr = refs[pos + 3]

        # The FCResBlock stack runs once (first dout tile) and stays resident in
        # VMEM scratch; every grid step streams one lane-dense tile of the final
        # Linear weight (MSDecoder.blocks + MSDecoder.fc fused in one call).
        @pl.when(pl.program_id(0) == 0)
        def _():
            h = x_ref[...]                                          # (B, in0) f32
            for bi, (P, W1, g1, b1, W2, g2, b2, W3, g3, b3) in enumerate(blocks):
                out_d = W1.shape[1]
                if identity_res[bi]:
                    idres = h[:, :out_d]        # nearest-interp == prefix slice
                else:
                    idres = jnp.dot(h, P[...], preferred_element_type=jnp.float32)
                t = jnp.dot(h.astype(jnp.bfloat16), W1[...],
                            preferred_element_type=jnp.float32)
                t = _leaky(_ln_rows(t, g1[...], b1[...]), 0.2)
                t = jnp.dot(t.astype(jnp.bfloat16), W2[...],
                            preferred_element_type=jnp.float32)
                t = _leaky(_ln_rows(t, g2[...], b2[...]), 0.2)
                t = jnp.dot(t.astype(jnp.bfloat16), W3[...],
                            preferred_element_type=jnp.float32)
                t = _ln_rows(t, g3[...], b3[...])
                h = _leaky(t + idres, 0.2)
            h_scr[...] = h

        out_ref[...] = (jnp.dot(h_scr[...].astype(jnp.bfloat16), wfc_ref[...],
                                preferred_element_type=jnp.float32) + bfc_ref[...])
    return kernel


# ----------------------------- JAX glue: MolConv3 feature generation -------- #
def generate_feat(x_cm, k, remove_xyz):
    # x_cm: (C, B, N) channel-major point set.  Returns channel-major tensors
    # with the per-neighbour axis flattened k-major / point-minor (spatial=k*N).
    C, B, N = x_cm.shape
    xt = jnp.transpose(x_cm, (1, 2, 0))                         # (B, N, C)
    x_bcn = jnp.transpose(x_cm, (1, 0, 2))                      # (B, C, N)
    inner = -2.0 * jnp.matmul(xt, x_bcn)                        # (B, N, N)
    xx = jnp.sum(x_bcn * x_bcn, axis=1, keepdims=True)          # (B, 1, N)
    pairwise = -xx - inner - jnp.swapaxes(xx, 1, 2)
    _, idx = jax.lax.top_k(pairwise, k)                         # (B, N, k)
    idx_base = (jnp.arange(B, dtype=idx.dtype) * N).reshape(B, 1, 1)
    idx = (idx + idx_base).reshape(-1)
    graph_feat = xt.reshape(B * N, C)[idx].reshape(B, N, k, C)  # neighbour feats
    gm4 = jnp.matmul(graph_feat, jnp.swapaxes(graph_feat, 2, 3))  # (B, N, k, k)
    gm = jnp.transpose(gm4, (3, 0, 2, 1)).reshape(k, B, k * N)  # gm[0] == dist gate

    if remove_xyz:
        feat_c = x_cm[3:]
        fn_src = graph_feat[..., 3:]
    else:
        feat_c = x_cm
        fn_src = graph_feat
    cin = feat_c.shape[0]
    feat_n = jnp.transpose(fn_src, (3, 0, 2, 1)).reshape(cin, B, k * N)
    return gm, feat_n, feat_c


# ----------------------------- module application --------------------------- #
def molconv_apply(lp, x_cm, k, bt):
    gm, feat_n, feat_c = generate_feat(x_cm, k, lp['remove_xyz'])
    cin, B, N = feat_c.shape
    cout = lp['out_dim']
    kn = k * N
    nb = B // bt

    def cm(c, s):
        return pl.BlockSpec((c, bt, s), lambda i: (0, i, 0))

    vbytes = 4 * (bt * (k + cin) * kn + bt * cin * N + 2 * bt * cout * kn
                  + bt * cout * N + (4 + 2 * cout) * kn)
    return pl.pallas_call(
        molconv_kernel,
        out_shape=jax.ShapeDtypeStruct((cout, B, N), jnp.float32),
        grid=(nb,),
        in_specs=[cm(k, kn), cm(cin, kn), cm(cin, N),
                  _SMEM_SPEC, _SMEM_SPEC,
                  _full_spec((1, kn)), _full_spec((1, kn)),
                  _full_spec((1, kn)), _full_spec((1, kn)),
                  _SMEM_SPEC,
                  _full_spec((cout, 1, kn)), _full_spec((cout, 1, kn))],
        out_specs=cm(cout, N),
        compiler_params=_cparams(vbytes, parallel_axes=1),
    )(gm, feat_n, feat_c,
      lp['w_dist'], lp['w_gm'],
      lp['dist_ln_g'], lp['dist_ln_b'], lp['gm_ln_g'], lp['gm_ln_b'],
      lp['W_upd'],
      lp['upd_ln_g'].reshape(cout, 1, kn), lp['upd_ln_b'].reshape(cout, 1, kn))


def encoder_apply(enc, x_cm, mask_f, bt):
    k = enc['k']
    xs = []
    inp = x_cm
    for lp in enc['layers']:
        inp = molconv_apply(lp, inp, k, bt)
        xs.append(inp)

    _, B, N = x_cm.shape
    E = enc['emb_dim']
    L = len(xs)
    nb = B // bt

    # split the (E, sum_C) 1x1-conv weight by input-channel group (SMEM scalars)
    w_chunks, off = [], 0
    for lp in enc['layers']:
        w_chunks.append(enc['W_conv'][:, off:off + lp['out_dim']])
        off += lp['out_dim']

    def cm(c):
        return pl.BlockSpec((c, bt, N), lambda i: (0, i, 0))

    in_specs = ([cm(int(xi.shape[0])) for xi in xs]
                + [pl.BlockSpec((bt, N), lambda i: (i, 0))]
                + [_SMEM_SPEC] * L
                + [_full_spec((E, 1, N)), _full_spec((E, 1, N))])
    vbytes = 4 * (sum(bt * int(xi.shape[0]) * N for xi in xs) + bt * N
                  + 2 * bt * E * N + 2 * E * N + bt * E)
    return pl.pallas_call(
        _make_pool_kernel(L),
        out_shape=jax.ShapeDtypeStruct((B, E), jnp.float32),
        grid=(nb,),
        in_specs=in_specs,
        out_specs=pl.BlockSpec((bt, E), lambda i: (i, 0)),
        compiler_params=_cparams(vbytes, parallel_axes=1),
    )(*xs, mask_f, *w_chunks,
      enc['conv_ln_g'].reshape(E, 1, N), enc['conv_ln_b'].reshape(E, 1, N))


def decoder_apply(dec, emb):
    B, in0 = emb.shape
    blocks = dec['blocks']
    dout = dec['fc']['W'].shape[1]
    hid = blocks[-1]['out_dim']
    tn = _choose_dout_tile(dout)
    nd = dout // tn if dout % tn == 0 else int(pl.cdiv(dout, tn))

    args = [emb]
    in_specs = [pl.BlockSpec((B, in0), lambda j: (0, 0))]
    identity_res = []
    for bp in blocks:
        identity_res.append(bp['P'] is None)
        per = []
        if bp['P'] is not None:
            per.append(bp['P'])
        per += [bp['W1'], bp['g1'], bp['b1'],
                bp['W2'], bp['g2'], bp['b2'],
                bp['W3'], bp['g3'], bp['b3']]
        args += per
        in_specs += [_full_spec(a.shape) for a in per]
    args += [dec['fc']['W'], dec['fc']['b']]
    in_specs += [pl.BlockSpec((hid, tn), lambda j: (0, j)),
                 pl.BlockSpec((1, tn), lambda j: (0, j))]

    vbytes = 4 * (sum(int(a.size) for a in args) + B * dout + B * hid)
    return pl.pallas_call(
        _make_decoder_kernel(len(blocks), tuple(identity_res)),
        out_shape=jax.ShapeDtypeStruct((B, dout), jnp.float32),
        grid=(nd,),
        in_specs=in_specs,
        out_specs=pl.BlockSpec((B, tn), lambda j: (0, j)),
        scratch_shapes=[pltpu.VMEM((B, hid), jnp.float32)],
        compiler_params=_cparams(vbytes, arbitrary_axes=1),
    )(*args)


def molnet_ms_apply(params, x, mask, env=None, idx_base=None):
    # idx_base is recomputed internally for the padded batch (same b*N rule as
    # the PyTorch default path); a user-supplied idx_base is ignored.
    B, D, N = x.shape
    enc = params['encoder']
    k = enc['k']
    max_c = max(max(lp['cin'], lp['out_dim']) for lp in enc['layers'])
    per_sample = 4 * (k + 4 * max_c) * k * N + 4 * 4 * max_c * N
    Bp, bt = _choose_batch_tiling(B, per_sample)

    xp = jnp.pad(x, ((0, Bp - B), (0, 0), (0, 0)))
    maskp = jnp.pad(mask.astype(jnp.float32), ((0, Bp - B), (0, 0)))
    x_cm = jnp.transpose(xp, (1, 0, 2))                 # (D, Bp, N) channel-major

    emb = encoder_apply(enc, x_cm, maskp, bt)           # (Bp, E)

    add_num = params['add_num']
    if add_num:
        envp = env if env.ndim > 1 else env[:, None]
        envp = jnp.pad(envp.astype(jnp.float32), ((0, Bp - B), (0, 0)))
        emb = jnp.concatenate([emb, envp], axis=1)
    out = decoder_apply(params['decoder'], emb)
    return out[:B]


# ----------------------------- deterministic parameter init ----------------- #
def init_params(key, config):
    N, K = config['max_atom_num'], config['k']
    KN = K * N
    in_dim, layers, emb = config['in_dim'], config['encode_layers'], config['emb_dim']
    keys = iter(jax.random.split(key, 256))

    def nrm(shape, std=1.0):
        return std * jax.random.normal(next(keys), shape, jnp.float32)

    enc_layers = []
    prev = in_dim
    for i, out_c in enumerate(layers):
        remove_xyz = (i == 0)
        cin = prev - 3 if remove_xyz else prev
        enc_layers.append(dict(
            w_dist=nrm((1,), 0.5),
            w_gm=nrm((K,), 0.5),
            dist_ln_g=jnp.ones((1, KN), jnp.float32),
            dist_ln_b=jnp.zeros((1, KN), jnp.float32),
            gm_ln_g=jnp.ones((1, KN), jnp.float32),
            gm_ln_b=jnp.zeros((1, KN), jnp.float32),
            W_upd=nrm((out_c, cin), (2.0 / cin) ** 0.5),
            upd_ln_g=jnp.ones((out_c, KN), jnp.float32),
            upd_ln_b=jnp.zeros((out_c, KN), jnp.float32),
            out_dim=out_c, cin=cin, remove_xyz=remove_xyz))
        prev = out_c

    # Conv1d kaiming_normal_(a=0.2, fan_in, leaky_relu)
    conv_std = (2.0 / (1.0 + 0.2 ** 2) / emb) ** 0.5
    encoder = dict(layers=enc_layers, k=K, emb_dim=emb,
                   W_conv=nrm((emb, emb), conv_std),
                   conv_ln_g=jnp.ones((emb, N), jnp.float32),
                   conv_ln_b=jnp.zeros((emb, N), jnp.float32))

    dec_in = emb + config['add_num']
    blocks, prev = [], dec_in
    for out_d in config['decode_layers']:
        interp_idx = [(j * prev) // out_d for j in range(out_d)]  # F.interpolate 'nearest'
        if interp_idx == list(range(out_d)):
            P = None                              # residual == static prefix slice
        else:
            P = jax.nn.one_hot(jnp.array(interp_idx), prev, dtype=jnp.float32).T
        blocks.append(dict(
            P=P,
            W1=nrm((prev, out_d), 1.0).astype(jnp.bfloat16),
            g1=jnp.ones((1, out_d), jnp.float32), b1=jnp.zeros((1, out_d), jnp.float32),
            W2=nrm((out_d, out_d), 1.0).astype(jnp.bfloat16),
            g2=jnp.ones((1, out_d), jnp.float32), b2=jnp.zeros((1, out_d), jnp.float32),
            W3=nrm((out_d, out_d), 1.0).astype(jnp.bfloat16),
            g3=jnp.ones((1, out_d), jnp.float32), b3=jnp.zeros((1, out_d), jnp.float32),
            in_dim=prev, out_dim=out_d))
        prev = out_d
    out_dim = int(config['max_mz'] // config['resolution'])
    fc = dict(W=nrm((prev, out_dim), 1.0).astype(jnp.bfloat16),
              b=jnp.zeros((1, out_dim), jnp.float32))
    return dict(encoder=encoder, decoder=dict(blocks=blocks, fc=fc),
                add_num=config['add_num'])


# ----------------------------- demo ------------------------------------------ #
if __name__ == "__main__":
    # max_atom_num = 128 keeps the point axis lane-dense (same role as the padded
    # point_num in the PyTorch model).
    config = dict(in_dim=14, encode_layers=[8, 8, 16], emb_dim=32,
                  max_atom_num=128, k=4, add_num=1,
                  decode_layers=[32, 64], dropout=0.0,
                  max_mz=64.0, resolution=1.0)

    params = init_params(jax.random.PRNGKey(0), config)

    kx, kenv = jax.random.split(jax.random.PRNGKey(0))
    B, D, N = 2, config['in_dim'], config['max_atom_num']
    x = jax.random.normal(kx, (B, D, N), jnp.float32)               # (B, 14, atom_num)
    mask = jnp.arange(N)[None, :] < jnp.array([97, 64])[:, None]    # (B, atom_num) bool
    env = jax.random.normal(kenv, (B,), jnp.float32)                # add_num == 1

    out = molnet_ms_apply(params, x, mask, env)
    out = jax.block_until_ready(out)
    assert out.shape == (B, int(config['max_mz'] // config['resolution']))
    assert bool(jnp.all(jnp.isfinite(out)))
    print("KERNEL_OK")
</pallas_src>

<mosaic_0001>
module attributes {stable_mosaic.version = 11 : i64} {
  func.func @molconv_kernel(%arg0: i32, %arg1: memref<4x8x512xf32, #tpu.memory_space<vmem>>, %arg2: memref<11x8x512xf32, #tpu.memory_space<vmem>>, %arg3: memref<11x8x128xf32, #tpu.memory_space<vmem>>, %arg4: memref<1xf32, #tpu.memory_space<smem>>, %arg5: memref<4xf32, #tpu.memory_space<smem>>, %arg6: memref<1x512xf32, #tpu.memory_space<vmem>>, %arg7: memref<1x512xf32, #tpu.memory_space<vmem>>, %arg8: memref<1x512xf32, #tpu.memory_space<vmem>>, %arg9: memref<1x512xf32, #tpu.memory_space<vmem>>, %arg10: memref<8x11xf32, #tpu.memory_space<smem>>, %arg11: memref<8x1x512xf32, #tpu.memory_space<vmem>>, %arg12: memref<8x1x512xf32, #tpu.memory_space<vmem>>, %arg13: memref<8x8x128xf32, #tpu.memory_space<vmem>>) attributes {dimension_semantics = [#tpu.dimension_semantics<parallel>], iteration_bounds = array<i64: 2>, scalar_prefetch = 0 : i64, scratch_operands = 0 : i64, tpu.core_type = #tpu.core_type<tc>, window_params = [{transform_indices = @transform_0, window_bounds = array<i64: 4, 8, 512>}, {transform_indices = @transform_1, window_bounds = array<i64: 11, 8, 512>}, {transform_indices = @transform_2, window_bounds = array<i64: 11, 8, 128>}, {transform_indices = @transform_3, window_bounds = array<i64: 1>}, {transform_indices = @transform_4, window_bounds = array<i64: 4>}, {pipeline_mode = #tpu.pipeline_mode<synchronous>, transform_indices = @transform_5, window_bounds = array<i64: 1, 512>}, {pipeline_mode = #tpu.pipeline_mode<synchronous>, transform_indices = @transform_6, window_bounds = array<i64: 1, 512>}, {pipeline_mode = #tpu.pipeline_mode<synchronous>, transform_indices = @transform_7, window_bounds = array<i64: 1, 512>}, {pipeline_mode = #tpu.pipeline_mode<synchronous>, transform_indices = @transform_8, window_bounds = array<i64: 1, 512>}, {transform_indices = @transform_9, window_bounds = array<i64: 8, 11>}, {pipeline_mode = #tpu.pipeline_mode<synchronous>, transform_indices = @transform_10, window_bounds = array<i64: 8, 1, 512>}, {pipeline_mode = #tpu.pipeline_mode<synchronous>, transform_indices = @transform_11, window_bounds = array<i64: 8, 1, 512>}, {transform_indices = @transform_12, window_bounds = array<i64: 8, 8, 128>}]} {
    %c0 = arith.constant 0 : index
    %c0_0 = arith.constant 0 : index
    %c0_1 = arith.constant 0 : index
    %0 = vector.load %arg1[%c0, %c0_0, %c0_1] : memref<4x8x512xf32, #tpu.memory_space<vmem>>, vector<1x8x512xf32>
    %1 = vector.shape_cast %0 : vector<1x8x512xf32> to vector<8x512xf32>
    %c0_2 = arith.constant 0 : index
    %2 = memref.load %arg4[%c0_2] : memref<1xf32, #tpu.memory_space<smem>>
    %3 = vector.broadcast %2 : f32 to vector<8x512xf32>
    %4 = arith.mulf %1, %3 : vector<8x512xf32>
    %c0_3 = arith.constant 0 : index
    %c0_4 = arith.constant 0 : index
    %5 = vector.load %arg6[%c0_3, %c0_4] : memref<1x512xf32, #tpu.memory_space<vmem>>, vector<1x512xf32>
    %c0_5 = arith.constant 0 : index
    %c0_6 = arith.constant 0 : index
    %6 = vector.load %arg7[%c0_5, %c0_6] : memref<1x512xf32, #tpu.memory_space<vmem>>, vector<1x512xf32>
    %cst = arith.constant dense<0.000000e+00> : vector<8xf32>
    %7 = vector.multi_reduction <add>, %4, %cst [1] : vector<8x512xf32> to vector<8xf32>
    %8 = vector.shape_cast %7 : vector<8xf32> to vector<8x1xf32>
    %cst_7 = arith.constant 5.120000e+02 : f32
    %9 = vector.broadcast %cst_7 : f32 to vector<8x1xf32>
    %10 = arith.divf %8, %9 : vector<8x1xf32>
    %11 = vector.broadcast %10 : vector<8x1xf32> to vector<8x512xf32>
    %12 = arith.subf %4, %11 : vector<8x512xf32>
    %13 = arith.mulf %12, %12 : vector<8x512xf32>
    %cst_8 = arith.constant dense<0.000000e+00> : vector<8xf32>
    %14 = vector.multi_reduction <add>, %13, %cst_8 [1] : vector<8x512xf32> to vector<8xf32>
    %15 = vector.shape_cast %14 : vector<8xf32> to vector<8x1xf32>
    %cst_9 = arith.constant 5.120000e+02 : f32
    %16 = vector.broadcast %cst_9 : f32 to vector<8x1xf32>
    %17 = arith.divf %15, %16 : vector<8x1xf32>
    %18 = vector.broadcast %10 : vector<8x1xf32> to vector<8x512xf32>
    %19 = arith.subf %4, %18 : vector<8x512xf32>
    %cst_10 = arith.constant 9.99999974E-6 : f32
    %20 = vector.broadcast %cst_10 : f32 to vector<8x1xf32>
    %21 = arith.addf %17, %20 : vector<8x1xf32>
    %22 = math.rsqrt %21 : vector<8x1xf32>
    %23 = vector.broadcast %22 : vector<8x1xf32> to vector<8x512xf32>
    %24 = arith.mulf %19, %23 : vector<8x512xf32>
    %25 = vector.broadcast %5 : vector<1x512xf32> to vector<8x512xf32>
    %26 = arith.mulf %24, %25 : vector<8x512xf32>
    %27 = vector.broadcast %6 : vector<1x512xf32> to vector<8x512xf32>
    %28 = arith.addf %26, %27 : vector<8x512xf32>
    %29 = arith.negf %28 : vector<8x512xf32>
    %30 = math.exp %29 : vector<8x512xf32>
    %cst_11 = arith.constant 1.000000e+00 : f32
    %31 = vector.broadcast %cst_11 : f32 to vector<8x512xf32>
    %32 = arith.addf %31, %30 : vector<8x512xf32>
    %33 = arith.divf %31, %32 : vector<8x512xf32>
    %c0_12 = arith.constant 0 : index
    %34 = memref.load %arg5[%c0_12] : memref<4xf32, #tpu.memory_space<smem>>
    %35 = vector.broadcast %34 : f32 to vector<8x512xf32>
    %36 = arith.mulf %35, %1 : vector<8x512xf32>
    %c1 = arith.constant 1 : index
    %37 = memref.load %arg5[%c1] : memref<4xf32, #tpu.memory_space<smem>>
    %c1_13 = arith.constant 1 : index
    %c0_14 = arith.constant 0 : index
    %c0_15 = arith.constant 0 : index
    %38 = vector.load %arg1[%c1_13, %c0_14, %c0_15] : memref<4x8x512xf32, #tpu.memory_space<vmem>>, vector<1x8x512xf32>
    %39 = vector.shape_cast %38 : vector<1x8x512xf32> to vector<8x512xf32>
    %40 = vector.broadcast %37 : f32 to vector<8x512xf32>
    %41 = arith.mulf %40, %39 : vector<8x512xf32>
    %42 = arith.addf %36, %41 : vector<8x512xf32>
    %c2 = arith.constant 2 : index
    %43 = memref.load %arg5[%c2] : memref<4xf32, #tpu.memory_space<smem>>
    %c2_16 = arith.constant 2 : index
    %c0_17 = arith.constant 0 : index
    %c0_18 = arith.constant 0 : index
    %44 = vector.load %arg1[%c2_16, %c0_17, %c0_18] : memref<4x8x512xf32, #tpu.memory_space<vmem>>, vector<1x8x512xf32>
    %45 = vector.shape_cast %44 : vector<1x8x512xf32> to vector<8x512xf32>
    %46 = vector.broadcast %43 : f32 to vector<8x512xf32>
    %47 = arith.mulf %46, %45 : vector<8x512xf32>
    %48 = arith.addf %42, %47 : vector<8x512xf32>
    %c3 = arith.constant 3 : index
    %49 = memref.load %arg5[%c3] : memref<4xf32, #tpu.memory_space<smem>>
    %c3_19 = arith.constant 3 : index
    %c0_20 = arith.constant 0 : index
    %c0_21 = arith.constant 0 : index
    %50 = vector.load %arg1[%c3_19, %c0_20, %c0_21] : memref<4x8x512xf32, #tpu.memory_space<vmem>>, vector<1x8x512xf32>
    %51 = vector.shape_cast %50 : vector<1x8x512xf32> to vector<8x512xf32>
    %52 = vector.broadcast %49 : f32 to vector<8x512xf32>
    %53 = arith.mulf %52, %51 : vector<8x512xf32>
    %54 = arith.addf %48, %53 : vector<8x512xf32>
    %c0_22 = arith.constant 0 : index
    %c0_23 = arith.constant 0 : index
    %55 = vector.load %arg8[%c0_22, %c0_23] : memref<1x512xf32, #tpu.memory_space<vmem>>, vector<1x512xf32>
    %c0_24 = arith.constant 0 : index
    %c0_25 = arith.constant 0 : index
    %56 = vector.load %arg9[%c0_24, %c0_25] : memref<1x512xf32, #tpu.memory_space<vmem>>, vector<1x512xf32>
    %cst_26 = arith.constant dense<0.000000e+00> : vector<8xf32>
    %57 = vector.multi_reduction <add>, %54, %cst_26 [1] : vector<8x512xf32> to vector<8xf32>
    %58 = vector.shape_cast %57 : vector<8xf32> to vector<8x1xf32>
    %cst_27 = arith.constant 5.120000e+02 : f32
    %59 = vector.broadcast %cst_27 : f32 to vector<8x1xf32>
    %60 = arith.divf %58, %59 : vector<8x1xf32>
    %61 = vector.broadcast %60 : vector<8x1xf32> to vector<8x512xf32>
    %62 = arith.subf %54, %61 : vector<8x512xf32>
    %63 = arith.mulf %62, %62 : vector<8x512xf32>
    %cst_28 = arith.constant dense<0.000000e+00> : vector<8xf32>
    %64 = vector.multi_reduction <add>, %63, %cst_28 [1] : vector<8x512xf32> to vector<8xf32>
    %65 = vector.shape_cast %64 : vector<8xf32> to vector<8x1xf32>
    %cst_29 = arith.constant 5.120000e+02 : f32
    %66 = vector.broadcast %cst_29 : f32 to vector<8x1xf32>
    %67 = arith.divf %65, %66 : vector<8x1xf32>
    %68 = vector.broadcast %60 : vector<8x1xf32> to vector<8x512xf32>
    %69 = arith.subf %54, %68 : vector<8x512xf32>
    %cst_30 = arith.constant 9.99999974E-6 : f32
    %70 = vector.broadcast %cst_30 : f32 to vector<8x1xf32>
    %71 = arith.addf %67, %70 : vector<8x1xf32>
    %72 = math.rsqrt %71 : vector<8x1xf32>
    %73 = vector.broadcast %72 : vector<8x1xf32> to vector<8x512xf32>
    %74 = arith.mulf %69, %73 : vector<8x512xf32>
    %75 = vector.broadcast %55 : vector<1x512xf32> to vector<8x512xf32>
    %76 = arith.mulf %74, %75 : vector<8x512xf32>
    %77 = vector.broadcast %56 : vector<1x512xf32> to vector<8x512xf32>
    %78 = arith.addf %76, %77 : vector<8x512xf32>
    %79 = arith.negf %78 : vector<8x512xf32>
    %80 = math.exp %79 : vector<8x512xf32>
    %cst_31 = arith.constant 1.000000e+00 : f32
    %81 = vector.broadcast %cst_31 : f32 to vector<8x512xf32>
    %82 = arith.addf %81, %80 : vector<8x512xf32>
    %83 = arith.divf %81, %82 : vector<8x512xf32>
    %84 = arith.mulf %33, %83 : vector<8x512xf32>
    %cst_32 = arith.constant 1.000000e+00 : f32
    %85 = vector.broadcast %cst_32 : f32 to vector<8x512xf32>
    %86 = arith.subf %85, %84 : vector<8x512xf32>
    %c0_33 = arith.constant 0 : index
    %c0_34 = arith.constant 0 : index
    %c0_35 = arith.constant 0 : index
    %87 = vector.load %arg3[%c0_33, %c0_34, %c0_35] : memref<11x8x128xf32, #tpu.memory_space<vmem>>, vector<1x8x128xf32>
    %88 = vector.shape_cast %87 : vector<1x8x128xf32> to vector<8x128xf32>
    %89 = tpu.concatenate %88, %88, %88, %88 in 1 : vector<8x128xf32>, vector<8x128xf32>, vector<8x128xf32>, vector<8x128xf32> -> vector<8x512xf32>
    %c0_36 = arith.constant 0 : index
    %c0_37 = arith.constant 0 : index
    %c0_38 = arith.constant 0 : index
    %90 = vector.load %arg2[%c0_36, %c0_37, %c0_38] : memref<11x8x512xf32, #tpu.memory_space<vmem>>, vector<1x8x512xf32>
    %91 = vector.shape_cast %90 : vector<1x8x512xf32> to vector<8x512xf32>
    %92 = arith.mulf %84, %91 : vector<8x512xf32>
    %93 = arith.mulf %86, %89 : vector<8x512xf32>
    %94 = arith.addf %92, %93 : vector<8x512xf32>
    %c0_39 = arith.constant 0 : index
    %c0_40 = arith.constant 0 : index
    %95 = memref.load %arg10[%c0_39, %c0_40] : memref<8x11xf32, #tpu.memory_space<smem>>
    %96 = vector.broadcast %95 : f32 to vector<8x512xf32>
    %97 = arith.mulf %96, %94 : vector<8x512xf32>
    %c1_41 = arith.constant 1 : index
    %c0_42 = arith.constant 0 : index
    %98 = memref.load %arg10[%c1_41, %c0_42] : memref<8x11xf32, #tpu.memory_space<smem>>
    %99 = vector.broadcast %98 : f32 to vector<8x512xf32>
    %100 = arith.mulf %99, %94 : vector<8x512xf32>
    %c2_43 = arith.constant 2 : index
    %c0_44 = arith.constant 0 : index
    %101 = memref.load %arg10[%c2_43, %c0_44] : memref<8x11xf32, #tpu.memory_space<smem>>
    %102 = vector.broadcast %101 : f32 to vector<8x512xf32>
    %103 = arith.mulf %102, %94 : vector<8x512xf32>
    %c3_45 = arith.constant 3 : index
    %c0_46 = arith.constant 0 : index
    %104 = memref.load %arg10[%c3_45, %c0_46] : memref<8x11xf32, #tpu.memory_space<smem>>
    %105 = vector.broadcast %104 : f32 to vector<8x512xf32>
    %106 = arith.mulf %105, %94 : vector<8x512xf32>
    %c4 = arith.constant 4 : index
    %c0_47 = arith.constant 0 : index
    %107 = memref.load %arg10[%c4, %c0_47] : memref<8x11xf32, #tpu.memory_space<smem>>
    %108 = vector.broadcast %107 : f32 to vector<8x512xf32>
    %109 = arith.mulf %108, %94 : vector<8x512xf32>
    %c5 = arith.constant 5 : index
    %c0_48 = arith.constant 0 : index
    %110 = memref.load %arg10[%c5, %c0_48] : memref<8x11xf32, #tpu.memory_space<smem>>
    %111 = vector.broadcast %110 : f32 to vector<8x512xf32>
    %112 = arith.mulf %111, %94 : vector<8x512xf32>
    %c6 = arith.constant 6 : index
    %c0_49 = arith.constant 0 : index
    %113 = memref.load %arg10[%c6, %c0_49] : memref<8x11xf32, #tpu.memory_space<smem>>
    %114 = vector.broadcast %113 : f32 to vector<8x512xf32>
    %115 = arith.mulf %114, %94 : vector<8x512xf32>
    %c7 = arith.constant 7 : index
    %c0_50 = arith.constant 0 : index
    %116 = memref.load %arg10[%c7, %c0_50] : memref<8x11xf32, #tpu.memory_space<smem>>
    %117 = vector.broadcast %116 : f32 to vector<8x512xf32>
    %118 = arith.mulf %117, %94 : vector<8x512xf32>
    %c1_51 = arith.constant 1 : index
    %c0_52 = arith.constant 0 : index
    %c0_53 = arith.constant 0 : index
    %119 = vector.load %arg3[%c1_51, %c0_52, %c0_53] : memref<11x8x128xf32, #tpu.memory_space<vmem>>, vector<1x8x128xf32>
    %120 = vector.shape_cast %119 : vector<1x8x128xf32> to vector<8x128xf32>
    %121 = tpu.concatenate %120, %120, %120, %120 in 1 : vector<8x128xf32>, vector<8x128xf32>, vector<8x128xf32>, vector<8x128xf32> -> vector<8x512xf32>
    %c1_54 = arith.constant 1 : index
    %c0_55 = arith.constant 0 : index
    %c0_56 = arith.constant 0 : index
    %122 = vector.load %arg2[%c1_54, %c0_55, %c0_56] : memref<11x8x512xf32, #tpu.memory_space<vmem>>, vector<1x8x512xf32>
    %123 = vector.shape_cast %122 : vector<1x8x512xf32> to vector<8x512xf32>
    %124 = arith.mulf %84, %123 : vector<8x512xf32>
    %125 = arith.mulf %86, %121 : vector<8x512xf32>
    %126 = arith.addf %124, %125 : vector<8x512xf32>
    %c0_57 = arith.constant 0 : index
    %c1_58 = arith.constant 1 : index
    %127 = memref.load %arg10[%c0_57, %c1_58] : memref<8x11xf32, #tpu.memory_space<smem>>
    %128 = vector.broadcast %127 : f32 to vector<8x512xf32>
    %129 = arith.mulf %128, %126 : vector<8x512xf32>
    %130 = arith.addf %97, %129 : vector<8x512xf32>
    %c1_59 = arith.constant 1 : index
    %c1_60 = arith.constant 1 : index
    %131 = memref.load %arg10[%c1_59, %c1_60] : memref<8x11xf32, #tpu.memory_space<smem>>
    %132 = vector.broadcast %131 : f32 to vector<8x512xf32>
    %133 = arith.mulf %132, %126 : vector<8x512xf32>
    %134 = arith.addf %100, %133 : vector<8x512xf32>
    %c2_61 = arith.constant 2 : index
    %c1_62 = arith.constant 1 : index
    %135 = memref.load %arg10[%c2_61, %c1_62] : memref<8x11xf32, #tpu.memory_space<smem>>
    %136 = vector.broadcast %135 : f32 to vector<8x512xf32>
    %137 = arith.mulf %136, %126 : vector<8x512xf32>
    %138 = arith.addf %103, %137 : vector<8x512xf32>
    %c3_63 = arith.constant 3 : index
    %c1_64 = arith.constant 1 : index
    %139 = memref.load %arg10[%c3_63, %c1_64] : memref<8x11xf32, #tpu.memory_space<smem>>
    %140 = vector.broadcast %139 : f32 to vector<8x512xf32>
    %141 = arith.mulf %140, %126 : vector<8x512xf32>
    %142 = arith.addf %106, %141 : vector<8x512xf32>
    %c4_65 = arith.constant 4 : index
    %c1_66 = arith.constant 1 : index
    %143 = memref.load %arg10[%c4_65, %c1_66] : memref<8x11xf32, #tpu.memory_space<smem>>
    %144 = vector.broadcast %143 : f32 to vector<8x512xf32>
    %145 = arith.mulf %144, %126 : vector<8x512xf32>
    %146 = arith.addf %109, %145 : vector<8x512xf32>
    %c5_67 = arith.constant 5 : index
    %c1_68 = arith.constant 1 : index
    %147 = memref.load %arg10[%c5_67, %c1_68] : memref<8x11xf32, #tpu.memory_space<smem>>
    %148 = vector.broadcast %147 : f32 to vector<8x512xf32>
    %149 = arith.mulf %148, %126 : vector<8x512xf32>
    %150 = arith.addf %112, %149 : vector<8x512xf32>
    %c6_69 = arith.constant 6 : index
    %c1_70 = arith.constant 1 : index
    %151 = memref.load %arg10[%c6_69, %c1_70] : memref<8x11xf32, #tpu.memory_space<smem>>
    %152 = vector.broadcast %151 : f32 to vector<8x512xf32>
    %153 = arith.mulf %152, %126 : vector<8x512xf32>
    %154 = arith.addf %115, %153 : vector<8x512xf32>
    %c7_71 = arith.constant 7 : index
    %c1_72 = arith.constant 1 : index
    %155 = memref.load %arg10[%c7_71, %c1_72] : memref<8x11xf32, #tpu.memory_space<smem>>
    %156 = vector.broadcast %155 : f32 to vector<8x512xf32>
    %157 = arith.mulf %156, %126 : vector<8x512xf32>
    %158 = arith.addf %118, %157 : vector<8x512xf32>
    %c2_73 = arith.constant 2 : index
    %c0_74 = arith.constant 0 : index
    %c0_75 = arith.constant 0 : index
    %159 = vector.load %arg3[%c2_73, %c0_74, %c0_75] : memref<11x8x128xf32, #tpu.memory_space<vmem>>, vector<1x8x128xf32>
    %160 = vector.shape_cast %159 : vector<1x8x128xf32> to vector<8x128xf32>
    %161 = tpu.concatenate %160, %160, %160, %160 in 1 : vector<8x128xf32>, vector<8x128xf32>, vector<8x128xf32>, vector<8x128xf32> -> vector<8x512xf32>
    %c2_76 = arith.constant 2 : index
    %c0_77 = arith.constant 0 : index
    %c0_78 = arith.constant 0 : index
    %162 = vector.load %arg2[%c2_76, %c0_77, %c0_78] : memref<11x8x512xf32, #tpu.memory_space<vmem>>, vector<1x8x512xf32>
    %163 = vector.shape_cast %162 : vector<1x8x512xf32> to vector<8x512xf32>
    %164 = arith.mulf %84, %163 : vector<8x512xf32>
    %165 = arith.mulf %86, %161 : vector<8x512xf32>
    %166 = arith.addf %164, %165 : vector<8x512xf32>
    %c0_79 = arith.constant 0 : index
    %c2_80 = arith.constant 2 : index
    %167 = memref.load %arg10[%c0_79, %c2_80] : memref<8x11xf32, #tpu.memory_space<smem>>
    %168 = vector.broadcast %167 : f32 to vector<8x512xf32>
    %169 = arith.mulf %168, %166 : vector<8x512xf32>
    %170 = arith.addf %130, %169 : vector<8x512xf32>
    %c1_81 = arith.constant 1 : index
    %c2_82 = arith.constant 2 : index
    %171 = memref.load %arg10[%c1_81, %c2_82] : memref<8x11xf32, #tpu.memory_space<smem>>
    %172 = vector.broadcast %171 : f32 to vector<8x512xf32>
    %173 = arith.mulf %172, %166 : vector<8x512xf32>
    %174 = arith.addf %134, %173 : vector<8x512xf32>
    %c2_83 = arith.constant 2 : index
    %c2_84 = arith.constant 2 : index
    %175 = memref.load %arg10[%c2_83, %c2_84] : memref<8x11xf32, #tpu.memory_space<smem>>
    %176 = vector.broadcast %175 : f32 to vector<8x512xf32>
    %177 = arith.mulf %176, %166 : vector<8x512xf32>
    %178 = arith.addf %138, %177 : vector<8x512xf32>
    %c3_85 = arith.constant 3 : index
    %c2_86 = arith.constant 2 : index
    %179 = memref.load %arg10[%c3_85, %c2_86] : memref<8x11xf32, #tpu.memory_space<smem>>
    %180 = vector.broadcast %179 : f32 to vector<8x512xf32>
    %181 = arith.mulf %180, %166 : vector<8x512xf32>
    %182 = arith.addf %142, %181 : vector<8x512xf32>
    %c4_87 = arith.constant 4 : index
    %c2_88 = arith.constant 2 : index
    %183 = memref.load %arg10[%c4_87, %c2_88] : memref<8x11xf32, #tpu.memory_space<smem>>
    %184 = vector.broadcast %183 : f32 to vector<8x512xf32>
    %185 = arith.mulf %184, %166 : vector<8x512xf32>
    %186 = arith.addf %146, %185 : vector<8x512xf32>
    %c5_89 = arith.constant 5 : index
    %c2_90 = arith.constant 2 : index
    %187 = memref.load %arg10[%c5_89, %c2_90] : memref<8x11xf32, #tpu.memory_space<smem>>
    %188 = vector.broadcast %187 : f32 to vector<8x512xf32>
    %189 = arith.mulf %188, %166 : vector<8x512xf32>
    %190 = arith.addf %150, %189 : vector<8x512xf32>
    %c6_91 = arith.constant 6 : index
    %c2_92 = arith.constant 2 : index
    %191 = memref.load %arg10[%c6_91, %c2_92] : memref<8x11xf32, #tpu.memory_space<smem>>
    %192 = vector.broadcast %191 : f32 to vector<8x512xf32>
    %193 = arith.mulf %192, %166 : vector<8x512xf32>
    %194 = arith.addf %154, %193 : vector<8x512xf32>
    %c7_93 = arith.constant 7 : index
    %c2_94 = arith.constant 2 : index
    %195 = memref.load %arg10[%c7_93, %c2_94] : memref<8x11xf32, #tpu.memory_space<smem>>
    %196 = vector.broadcast %195 : f32 to vector<8x512xf32>
    %197 = arith.mulf %196, %166 : vector<8x512xf32>
    %198 = arith.addf %158, %197 : vector<8x512xf32>
    %c3_95 = arith.constant 3 : index
    %c0_96 = arith.constant 0 : index
    %c0_97 = arith.constant 0 : index
    %199 = vector.load %arg3[%c3_95, %c0_96, %c0_97] : memref<11x8x128xf32, #tpu.memory_space<vmem>>, vector<1x8x128xf32>
    %200 = vector.shape_cast %199 : vector<1x8x128xf32> to vector<8x128xf32>
    %201 = tpu.concatenate %200, %200, %200, %200 in 1 : vector<8x128xf32>, vector<8x128xf32>, vector<8x128xf32>, vector<8x128xf32> -> vector<8x512xf32>
    %c3_98 = arith.constant 3 : index
    %c0_99 = arith.constant 0 : index
    %c0_100 = arith.constant 0 : index
    %202 = vector.load %arg2[%c3_98, %c0_99, %c0_100] : memref<11x8x512xf32, #tpu.memory_space<vmem>>, vector<1x8x512xf32>
    %203 = vector.shape_cast %202 : vector<1x8x512xf32> to vector<8x512xf32>
    %204 = arith.mulf %84, %203 : vector<8x512xf32>
    %205 = arith.mulf %86, %201 : vector<8x512xf32>
    %206 = arith.addf %204, %205 : vector<8x512xf32>
    %c0_101 = arith.constant 0 : index
    %c3_102 = arith.constant 3 : index
    %207 = memref.load %arg10[%c0_101, %c3_102] : memref<8x11xf32, #tpu.memory_space<smem>>
    %208 = vector.broadcast %207 : f32 to vector<8x512xf32>
    %209 = arith.mulf %208, %206 : vector<8x512xf32>
    %210 = arith.addf %170, %209 : vector<8x512xf32>
    %c1_103 = arith.constant 1 : index
    %c3_104 = arith.constant 3 : index
    %211 = memref.load %arg10[%c1_103, %c3_104] : memref<8x11xf32, #tpu.memory_space<smem>>
    %212 = vector.broadcast %211 : f32 to vector<8x512xf32>
    %213 = arith.mulf %212, %206 : vector<8x512xf32>
    %214 = arith.addf %174, %213 : vector<8x512xf32>
    %c2_105 = arith.constant 2 : index
    %c3_106 = arith.constant 3 : index
    %215 = memref.load %arg10[%c2_105, %c3_106] : memref<8x11xf32, #tpu.memory_space<smem>>
    %216 = vector.broadcast %215 : f32 to vector<8x512xf32>
    %217 = arith.mulf %216, %206 : vector<8x512xf32>
    %218 = arith.addf %178, %217 : vector<8x512xf32>
    %c3_107 = arith.constant 3 : index
    %c3_108 = arith.constant 3 : index
    %219 = memref.load %arg10[%c3_107, %c3_108] : memref<8x11xf32, #tpu.memory_space<smem>>
    %220 = vector.broadcast %219 : f32 to vector<8x512xf32>
    %221 = arith.mulf %220, %206 : vector<8x512xf32>
    %222 = arith.addf %182, %221 : vector<8x512xf32>
    %c4_109 = arith.constant 4 : index
    %c3_110 = arith.constant 3 : index
    %223 = memref.load %arg10[%c4_109, %c3_110] : memref<8x11xf32, #tpu.memory_space<smem>>
    %224 = vector.broadcast %223 : f32 to vector<8x512xf32>
    %225 = arith.mulf %224, %206 : vector<8x512xf32>
    %226 = arith.addf %186, %225 : vector<8x512xf32>
    %c5_111 = arith.constant 5 : index
    %c3_112 = arith.constant 3 : index
    %227 = memref.load %arg10[%c5_111, %c3_112] : memref<8x11xf32, #tpu.memory_space<smem>>
    %228 = vector.broadcast %227 : f32 to vector<8x512xf32>
    %229 = arith.mulf %228, %206 : vector<8x512xf32>
    %230 = arith.addf %190, %229 : vector<8x512xf32>
    %c6_113 = arith.constant 6 : index
    %c3_114 = arith.constant 3 : index
    %231 = memref.load %arg10[%c6_113, %c3_114] : memref<8x11xf32, #tpu.memory_space<smem>>
    %232 = vector.broadcast %231 : f32 to vector<8x512xf32>
    %233 = arith.mulf %232, %206 : vector<8x512xf32>
    %234 = arith.addf %194, %233 : vector<8x512xf32>
    %c7_115 = arith.constant 7 : index
    %c3_116 = arith.constant 3 : index
    %235 = memref.load %arg10[%c7_115, %c3_116] : memref<8x11xf32, #tpu.memory_space<smem>>
    %236 = vector.broadcast %235 : f32 to vector<8x512xf32>
    %237 = arith.mulf %236, %206 : vector<8x512xf32>
    %238 = arith.addf %198, %237 : vector<8x512xf32>
    %c4_117 = arith.constant 4 : index
    %c0_118 = arith.constant 0 : index
    %c0_119 = arith.constant 0 : index
    %239 = vector.load %arg3[%c4_117, %c0_118, %c0_119] : memref<11x8x128xf32, #tpu.memory_space<vmem>>, vector<1x8x128xf32>
    %240 = vector.shape_cast %239 : vector<1x8x128xf32> to vector<8x128xf32>
    %241 = tpu.concatenate %240, %240, %240, %240 in 1 : vector<8x128xf32>, vector<8x128xf32>, vector<8x128xf32>, vector<8x128xf32> -> vector<8x512xf32>
    %c4_120 = arith.constant 4 : index
    %c0_121 = arith.constant 0 : index
    %c0_122 = arith.constant 0 : index
    %242 = vector.load %arg2[%c4_120, %c0_121, %c0_122] : memref<11x8x512xf32, #tpu.memory_space<vmem>>, vector<1x8x512xf32>
    %243 = vector.shape_cast %242 : vector<1x8x512xf32> to vector<8x512xf32>
    %244 = arith.mulf %84, %243 : vector<8x512xf32>
    %245 = arith.mulf %86, %241 : vector<8x512xf32>
    %246 = arith.addf %244, %245 : vector<8x512xf32>
    %c0_123 = arith.constant 0 : index
    %c4_124 = arith.constant 4 : index
    %247 = memref.load %arg10[%c0_123, %c4_124] : memref<8x11xf32, #tpu.memory_space<smem>>
    %248 = vector.broadcast %247 : f32 to vector<8x512xf32>
    %249 = arith.mulf %248, %246 : vector<8x512xf32>
    %250 = arith.addf %210, %249 : vector<8x512xf32>
    %c1_125 = arith.constant 1 : index
    %c4_126 = arith.constant 4 : index
    %251 = memref.load %arg10[%c1_125, %c4_126] : memref<8x11xf32, #tpu.memory_space<smem>>
    %252 = vector.broadcast %251 : f32 to vector<8x512xf32>
    %253 = arith.mulf %252, %246 : vector<8x512xf32>
    %254 = arith.addf %214, %253 : vector<8x512xf32>
    %c2_127 = arith.constant 2 : index
    %c4_128 = arith.constant 4 : index
    %255 = memref.load %arg10[%c2_127, %c4_128] : memref<8x11xf32, #tpu.memory_space<smem>>
    %256 = vector.broadcast %255 : f32 to vector<8x512xf32>
    %257 = arith.mulf %256, %246 : vector<8x512xf32>
    %258 = arith.addf %218, %257 : vector<8x512xf32>
    %c3_129 = arith.constant 3 : index
    %c4_130 = arith.constant 4 : index
    %259 = memref.load %arg10[%c3_129, %c4_130] : memref<8x11xf32, #tpu.memory_space<smem>>
    %260 = vector.broadcast %259 : f32 to vector<8x512xf32>
    %261 = arith.mulf %260, %246 : vector<8x512xf32>
    %262 = arith.addf %222, %261 : vector<8x512xf32>
    %c4_131 = arith.constant 4 : index
    %c4_132 = arith.constant 4 : index
    %263 = memref.load %arg10[%c4_131, %c4_132] : memref<8x11xf32, #tpu.memory_space<smem>>
    %264 = vector.broadcast %263 : f32 to vector<8x512xf32>
    %265 = arith.mulf %264, %246 : vector<8x512xf32>
    %266 = arith.addf %226, %265 : vector<8x512xf32>
    %c5_133 = arith.constant 5 : index
    %c4_134 = arith.constant 4 : index
    %267 = memref.load %arg10[%c5_133, %c4_134] : memref<8x11xf32, #tpu.memory_space<smem>>
    %268 = vector.broadcast %267 : f32 to vector<8x512xf32>
    %269 = arith.mulf %268, %246 : vector<8x512xf32>
    %270 = arith.addf %230, %269 : vector<8x512xf32>
    %c6_135 = arith.constant 6 : index
    %c4_136 = arith.constant 4 : index
    %271 = memref.load %arg10[%c6_135, %c4_136] : memref<8x11xf32, #tpu.memory_space<smem>>
    %272 = vector.broadcast %271 : f32 to vector<8x512xf32>
    %273 = arith.mulf %272, %246 : vector<8x512xf32>
    %274 = arith.addf %234, %273 : vector<8x512xf32>
    %c7_137 = arith.constant 7 : index
    %c4_138 = arith.constant 4 : index
    %275 = memref.load %arg10[%c7_137, %c4_138] : memref<8x11xf32, #tpu.memory_space<smem>>
    %276 = vector.broadcast %275 : f32 to vector<8x512xf32>
    %277 = arith.mulf %276, %246 : vector<8x512xf32>
    %278 = arith.addf %238, %277 : vector<8x512xf32>
    %c5_139 = arith.constant 5 : index
    %c0_140 = arith.constant 0 : index
    %c0_141 = arith.constant 0 : index
    %279 = vector.load %arg3[%c5_139, %c0_140, %c0_141] : memref<11x8x128xf32, #tpu.memory_space<vmem>>, vector<1x8x128xf32>
    %280 = vector.shape_cast %279 : vector<1x8x128xf32> to vector<8x128xf32>
    %281 = tpu.concatenate %280, %280, %280, %280 in 1 : vector<8x128xf32>, vector<8x128xf32>, vector<8x128xf32>, vector<8x128xf32> -> vector<8x512xf32>
    %c5_142 = arith.constant 5 : index
    %c0_143 = arith.constant 0 : index
    %c0_144 = arith.constant 0 : index
    %282 = vector.load %arg2[%c5_142, %c0_143, %c0_144] : memref<11x8x512xf32, #tpu.memory_space<vmem>>, vector<1x8x512xf32>
    %283 = vector.shape_cast %282 : vector<1x8x512xf32> to vector<8x512xf32>
    %284 = arith.mulf %84, %283 : vector<8x512xf32>
    %285 = arith.mulf %86, %281 : vector<8x512xf32>
    %286 = arith.addf %284, %285 : vector<8x512xf32>
    %c0_145 = arith.constant 0 : index
    %c5_146 = arith.constant 5 : index
    %287 = memref.load %arg10[%c0_145, %c5_146] : memref<8x11xf32, #tpu.memory_space<smem>>
    %288 = vector.broadcast %287 : f32 to vector<8x512xf32>
    %289 = arith.mulf %288, %286 : vector<8x512xf32>
    %290 = arith.addf %250, %289 : vector<8x512xf32>
    %c1_147 = arith.constant 1 : index
    %c5_148 = arith.constant 5 : index
    %291 = memref.load %arg10[%c1_147, %c5_148] : memref<8x11xf32, #tpu.memory_space<smem>>
    %292 = vector.broadcast %291 : f32 to vector<8x512xf32>
    %293 = arith.mulf %292, %286 : vector<8x512xf32>
    %294 = arith.addf %254, %293 : vector<8x512xf32>
    %c2_149 = arith.constant 2 : index
    %c5_150 = arith.constant 5 : index
    %295 = memref.load %arg10[%c2_149, %c5_150] : memref<8x11xf32, #tpu.memory_space<smem>>
    %296 = vector.broadcast %295 : f32 to vector<8x512xf32>
    %297 = arith.mulf %296, %286 : vector<8x512xf32>
    %298 = arith.addf %258, %297 : vector<8x512xf32>
    %c3_151 = arith.constant 3 : index
    %c5_152 = arith.constant 5 : index
    %299 = memref.load %arg10[%c3_151, %c5_152] : memref<8x11xf32, #tpu.memory_space<smem>>
    %300 = vector.broadcast %299 : f32 to vector<8x512xf32>
    %301 = arith.mulf %300, %286 : vector<8x512xf32>
    %302 = arith.addf %262, %301 : vector<8x512xf32>
    %c4_153 = arith.constant 4 : index
    %c5_154 = arith.constant 5 : index
    %303 = memref.load %arg10[%c4_153, %c5_154] : memref<8x11xf32, #tpu.memory_space<smem>>
    %304 = vector.broadcast %303 : f32 to vector<8x512xf32>
    %305 = arith.mulf %304, %286 : vector<8x512xf32>
    %306 = arith.addf %266, %305 : vector<8x512xf32>
    %c5_155 = arith.constant 5 : index
    %c5_156 = arith.constant 5 : index
    %307 = memref.load %arg10[%c5_155, %c5_156] : memref<8x11xf32, #tpu.memory_space<smem>>
    %308 = vector.broadcast %307 : f32 to vector<8x512xf32>
    %309 = arith.mulf %308, %286 : vector<8x512xf32>
    %310 = arith.addf %270, %309 : vector<8x512xf32>
    %c6_157 = arith.constant 6 : index
    %c5_158 = arith.constant 5 : index
    %311 = memref.load %arg10[%c6_157, %c5_158] : memref<8x11xf32, #tpu.memory_space<smem>>
    %312 = vector.broadcast %311 : f32 to vector<8x512xf32>
    %313 = arith.mulf %312, %286 : vector<8x512xf32>
    %314 = arith.addf %274, %313 : vector<8x512xf32>
    %c7_159 = arith.constant 7 : index
    %c5_160 = arith.constant 5 : index
    %315 = memref.load %arg10[%c7_159, %c5_160] : memref<8x11xf32, #tpu.memory_space<smem>>
    %316 = vector.broadcast %315 : f32 to vector<8x512xf32>
    %317 = arith.mulf %316, %286 : vector<8x512xf32>
    %318 = arith.addf %278, %317 : vector<8x512xf32>
    %c6_161 = arith.constant 6 : index
    %c0_162 = arith.constant 0 : index
    %c0_163 = arith.constant 0 : index
    %319 = vector.load %arg3[%c6_161, %c0_162, %c0_163] : memref<11x8x128xf32, #tpu.memory_space<vmem>>, vector<1x8x128xf32>
    %320 = vector.shape_cast %319 : vector<1x8x128xf32> to vector<8x128xf32>
    %321 = tpu.concatenate %320, %320, %320, %320 in 1 : vector<8x128xf32>, vector<8x128xf32>, vector<8x128xf32>, vector<8x128xf32> -> vector<8x512xf32>
    %c6_164 = arith.constant 6 : index
    %c0_165 = arith.constant 0 : index
    %c0_166 = arith.constant 0 : index
    %322 = vector.load %arg2[%c6_164, %c0_165, %c0_166] : memref<11x8x512xf32, #tpu.memory_space<vmem>>, vector<1x8x512xf32>
    %323 = vector.shape_cast %322 : vector<1x8x512xf32> to vector<8x512xf32>
    %324 = arith.mulf %84, %323 : vector<8x512xf32>
    %325 = arith.mulf %86, %321 : vector<8x512xf32>
    %326 = arith.addf %324, %325 : vector<8x512xf32>
    %c0_167 = arith.constant 0 : index
    %c6_168 = arith.constant 6 : index
    %327 = memref.load %arg10[%c0_167, %c6_168] : memref<8x11xf32, #tpu.memory_space<smem>>
    %328 = vector.broadcast %327 : f32 to vector<8x512xf32>
    %329 = arith.mulf %328, %326 : vector<8x512xf32>
    %330 = arith.addf %290, %329 : vector<8x512xf32>
    %c1_169 = arith.constant 1 : index
    %c6_170 = arith.constant 6 : index
    %331 = memref.load %arg10[%c1_169, %c6_170] : memref<8x11xf32, #tpu.memory_space<smem>>
    %332 = vector.broadcast %331 : f32 to vector<8x512xf32>
    %333 = arith.mulf %332, %326 : vector<8x512xf32>
    %334 = arith.addf %294, %333 : vector<8x512xf32>
    %c2_171 = arith.constant 2 : index
    %c6_172 = arith.constant 6 : index
    %335 = memref.load %arg10[%c2_171, %c6_172] : memref<8x11xf32, #tpu.memory_space<smem>>
    %336 = vector.broadcast %335 : f32 to vector<8x512xf32>
    %337 = arith.mulf %336, %326 : vector<8x512xf32>
    %338 = arith.addf %298, %337 : vector<8x512xf32>
    %c3_173 = arith.constant 3 : index
    %c6_174 = arith.constant 6 : index
    %339 = memref.load %arg10[%c3_173, %c6_174] : memref<8x11xf32, #tpu.memory_space<smem>>
    %340 = vector.broadcast %339 : f32 to vector<8x512xf32>
    %341 = arith.mulf %340, %326 : vector<8x512xf32>
    %342 = arith.addf %302, %341 : vector<8x512xf32>
    %c4_175 = arith.constant 4 : index
    %c6_176 = arith.constant 6 : index
    %343 = memref.load %arg10[%c4_175, %c6_176] : memref<8x11xf32, #tpu.memory_space<smem>>
    %344 = vector.broadcast %343 : f32 to vector<8x512xf32>
    %345 = arith.mulf %344, %326 : vector<8x512xf32>
    %346 = arith.addf %306, %345 : vector<8x512xf32>
    %c5_177 = arith.constant 5 : index
    %c6_178 = arith.constant 6 : index
    %347 = memref.load %arg10[%c5_177, %c6_178] : memref<8x11xf32, #tpu.memory_space<smem>>
    %348 = vector.broadcast %347 : f32 to vector<8x512xf32>
    %349 = arith.mulf %348, %326 : vector<8x512xf32>
    %350 = arith.addf %310, %349 : vector<8x512xf32>
    %c6_179 = arith.constant 6 : index
    %c6_180 = arith.constant 6 : index
    %351 = memref.load %arg10[%c6_179, %c6_180] : memref<8x11xf32, #tpu.memory_space<smem>>
    %352 = vector.broadcast %351 : f32 to vector<8x512xf32>
    %353 = arith.mulf %352, %326 : vector<8x512xf32>
    %354 = arith.addf %314, %353 : vector<8x512xf32>
    %c7_181 = arith.constant 7 : index
    %c6_182 = arith.constant 6 : index
    %355 = memref.load %arg10[%c7_181, %c6_182] : memref<8x11xf32, #tpu.memory_space<smem>>
    %356 = vector.broadcast %355 : f32 to vector<8x512xf32>
    %357 = arith.mulf %356, %326 : vector<8x512xf32>
    %358 = arith.addf %318, %357 : vector<8x512xf32>
    %c7_183 = arith.constant 7 : index
    %c0_184 = arith.constant 0 : index
    %c0_185 = arith.constant 0 : index
    %359 = vector.load %arg3[%c7_183, %c0_184, %c0_185] : memref<11x8x128xf32, #tpu.memory_space<vmem>>, vector<1x8x128xf32>
    %360 = vector.shape_cast %359 : vector<1x8x128xf32> to vector<8x128xf32>
    %361 = tpu.concatenate %360, %360, %360, %360 in 1 : vector<8x128xf32>, vector<8x128xf32>, vector<8x128xf32>, vector<8x128xf32> -> vector<8x512xf32>
    %c7_186 = arith.constant 7 : index
    %c0_187 = arith.constant 0 : index
    %c0_188 = arith.constant 0 : index
    %362 = vector.load %arg2[%c7_186, %c0_187, %c0_188] : memref<11x8x512xf32, #tpu.memory_space<vmem>>, vector<1x8x512xf32>
    %363 = vector.shape_cast %362 : vector<1x8x512xf32> to vector<8x512xf32>
    %364 = arith.mulf %84, %363 : vector<8x512xf32>
    %365 = arith.mulf %86, %361 : vector<8x512xf32>
    %366 = arith.addf %364, %365 : vector<8x512xf32>
    %c0_189 = arith.constant 0 : index
    %c7_190 = arith.constant 7 : index
    %367 = memref.load %arg10[%c0_189, %c7_190] : memref<8x11xf32, #tpu.memory_space<smem>>
    %368 = vector.broadcast %367 : f32 to vector<8x512xf32>
    %369 = arith.mulf %368, %366 : vector<8x512xf32>
    %370 = arith.addf %330, %369 : vector<8x512xf32>
    %c1_191 = arith.constant 1 : index
    %c7_192 = arith.constant 7 : index
    %371 = memref.load %arg10[%c1_191, %c7_192] : memref<8x11xf32, #tpu.memory_space<smem>>
    %372 = vector.broadcast %371 : f32 to vector<8x512xf32>
    %373 = arith.mulf %372, %366 : vector<8x512xf32>
    %374 = arith.addf %334, %373 : vector<8x512xf32>
    %c2_193 = arith.constant 2 : index
    %c7_194 = arith.constant 7 : index
    %375 = memref.load %arg10[%c2_193, %c7_194] : memref<8x11xf32, #tpu.memory_space<smem>>
    %376 = vector.broadcast %375 : f32 to vector<8x512xf32>
    %377 = arith.mulf %376, %366 : vector<8x512xf32>
    %378 = arith.addf %338, %377 : vector<8x512xf32>
    %c3_195 = arith.constant 3 : index
    %c7_196 = arith.constant 7 : index
    %379 = memref.load %arg10[%c3_195, %c7_196] : memref<8x11xf32, #tpu.memory_space<smem>>
    %380 = vector.broadcast %379 : f32 to vector<8x512xf32>
    %381 = arith.mulf %380, %366 : vector<8x512xf32>
    %382 = arith.addf %342, %381 : vector<8x512xf32>
    %c4_197 = arith.constant 4 : index
    %c7_198 = arith.constant 7 : index
    %383 = memref.load %arg10[%c4_197, %c7_198] : memref<8x11xf32, #tpu.memory_space<smem>>
    %384 = vector.broadcast %383 : f32 to vector<8x512xf32>
    %385 = arith.mulf %384, %366 : vector<8x512xf32>
    %386 = arith.addf %346, %385 : vector<8x512xf32>
    %c5_199 = arith.constant 5 : index
    %c7_200 = arith.constant 7 : index
    %387 = memref.load %arg10[%c5_199, %c7_200] : memref<8x11xf32, #tpu.memory_space<smem>>
    %388 = vector.broadcast %387 : f32 to vector<8x512xf32>
    %389 = arith.mulf %388, %366 : vector<8x512xf32>
    %390 = arith.addf %350, %389 : vector<8x512xf32>
    %c6_201 = arith.constant 6 : index
    %c7_202 = arith.constant 7 : index
    %391 = memref.load %arg10[%c6_201, %c7_202] : memref<8x11xf32, #tpu.memory_space<smem>>
    %392 = vector.broadcast %391 : f32 to vector<8x512xf32>
    %393 = arith.mulf %392, %366 : vector<8x512xf32>
    %394 = arith.addf %354, %393 : vector<8x512xf32>
    %c7_203 = arith.constant 7 : index
    %c7_204 = arith.constant 7 : index
    %395 = memref.load %arg10[%c7_203, %c7_204] : memref<8x11xf32, #tpu.memory_space<smem>>
    %396 = vector.broadcast %395 : f32 to vector<8x512xf32>
    %397 = arith.mulf %396, %366 : vector<8x512xf32>
    %398 = arith.addf %358, %397 : vector<8x512xf32>
    %c8 = arith.constant 8 : index
    %c0_205 = arith.constant 0 : index
    %c0_206 = arith.constant 0 : index
    %399 = vector.load %arg3[%c8, %c0_205, %c0_206] : memref<11x8x128xf32, #tpu.memory_space<vmem>>, vector<1x8x128xf32>
    %400 = vector.shape_cast %399 : vector<1x8x128xf32> to vector<8x128xf32>
    %401 = tpu.concatenate %400, %400, %400, %400 in 1 : vector<8x128xf32>, vector<8x128xf32>, vector<8x128xf32>, vector<8x128xf32> -> vector<8x512xf32>
    %c8_207 = arith.constant 8 : index
    %c0_208 = arith.constant 0 : index
    %c0_209 = arith.constant 0 : index
    %402 = vector.load %arg2[%c8_207, %c0_208, %c0_209] : memref<11x8x512xf32, #tpu.memory_space<vmem>>, vector<1x8x512xf32>
    %403 = vector.shape_cast %402 : vector<1x8x512xf32> to vector<8x512xf32>
    %404 = arith.mulf %84, %403 : vector<8x512xf32>
    %405 = arith.mulf %86, %401 : vector<8x512xf32>
    %406 = arith.addf %404, %405 : vector<8x512xf32>
    %c0_210 = arith.constant 0 : index
    %c8_211 = arith.constant 8 : index
    %407 = memref.load %arg10[%c0_210, %c8_211] : memref<8x11xf32, #tpu.memory_space<smem>>
    %408 = vector.broadcast %407 : f32 to vector<8x512xf32>
    %409 = arith.mulf %408, %406 : vector<8x512xf32>
    %410 = arith.addf %370, %409 : vector<8x512xf32>
    %c1_212 = arith.constant 1 : index
    %c8_213 = arith.constant 8 : index
    %411 = memref.load %arg10[%c1_212, %c8_213] : memref<8x11xf32, #tpu.memory_space<smem>>
    %412 = vector.broadcast %411 : f32 to vector<8x512xf32>
    %413 = arith.mulf %412, %406 : vector<8x512xf32>
    %414 = arith.addf %374, %413 : vector<8x512xf32>
    %c2_214 = arith.constant 2 : index
    %c8_215 = arith.constant 8 : index
    %415 = memref.load %arg10[%c2_214, %c8_215] : memref<8x11xf32, #tpu.memory_space<smem>>
    %416 = vector.broadcast %415 : f32 to vector<8x512xf32>
    %417 = arith.mulf %416, %406 : vector<8x512xf32>
    %418 = arith.addf %378, %417 : vector<8x512xf32>
    %c3_216 = arith.constant 3 : index
    %c8_217 = arith.constant 8 : index
    %419 = memref.load %arg10[%c3_216, %c8_217] : memref<8x11xf32, #tpu.memory_space<smem>>
    %420 = vector.broadcast %419 : f32 to vector<8x512xf32>
    %421 = arith.mulf %420, %406 : vector<8x512xf32>
    %422 = arith.addf %382, %421 : vector<8x512xf32>
    %c4_218 = arith.constant 4 : index
    %c8_219 = arith.constant 8 : index
    %423 = memref.load %arg10[%c4_218, %c8_219] : memref<8x11xf32, #tpu.memory_space<smem>>
    %424 = vector.broadcast %423 : f32 to vector<8x512xf32>
    %425 = arith.mulf %424, %406 : vector<8x512xf32>
    %426 = arith.addf %386, %425 : vector<8x512xf32>
    %c5_220 = arith.constant 5 : index
    %c8_221 = arith.constant 8 : index
    %427 = memref.load %arg10[%c5_220, %c8_221] : memref<8x11xf32, #tpu.memory_space<smem>>
    %428 = vector.broadcast %427 : f32 to vector<8x512xf32>
    %429 = arith.mulf %428, %406 : vector<8x512xf32>
    %430 = arith.addf %390, %429 : vector<8x512xf32>
    %c6_222 = arith.constant 6 : index
    %c8_223 = arith.constant 8 : index
    %431 = memref.load %arg10[%c6_222, %c8_223] : memref<8x11xf32, #tpu.memory_space<smem>>
    %432 = vector.broadcast %431 : f32 to vector<8x512xf32>
    %433 = arith.mulf %432, %406 : vector<8x512xf32>
    %434 = arith.addf %394, %433 : vector<8x512xf32>
    %c7_224 = arith.constant 7 : index
    %c8_225 = arith.constant 8 : index
    %435 = memref.load %arg10[%c7_224, %c8_225] : memref<8x11xf32, #tpu.memory_space<smem>>
    %436 = vector.broadcast %435 : f32 to vector<8x512xf32>
    %437 = arith.mulf %436, %406 : vector<8x512xf32>
    %438 = arith.addf %398, %437 : vector<8x512xf32>
    %c9 = arith.constant 9 : index
    %c0_226 = arith.constant 0 : index
    %c0_227 = arith.constant 0 : index
    %439 = vector.load %arg3[%c9, %c0_226, %c0_227] : memref<11x8x128xf32, #tpu.memory_space<vmem>>, vector<1x8x128xf32>
    %440 = vector.shape_cast %439 : vector<1x8x128xf32> to vector<8x128xf32>
    %441 = tpu.concatenate %440, %440, %440, %440 in 1 : vector<8x128xf32>, vector<8x128xf32>, vector<8x128xf32>, vector<8x128xf32> -> vector<8x512xf32>
    %c9_228 = arith.constant 9 : index
    %c0_229 = arith.constant 0 : index
    %c0_230 = arith.constant 0 : index
    %442 = vector.load %arg2[%c9_228, %c0_229, %c0_230] : memref<11x8x512xf32, #tpu.memory_space<vmem>>, vector<1x8x512xf32>
    %443 = vector.shape_cast %442 : vector<1x8x512xf32> to vector<8x512xf32>
    %444 = arith.mulf %84, %443 : vector<8x512xf32>
    %445 = arith.mulf %86, %441 : vector<8x512xf32>
    %446 = arith.addf %444, %445 : vector<8x512xf32>
    %c0_231 = arith.constant 0 : index
    %c9_232 = arith.constant 9 : index
    %447 = memref.load %arg10[%c0_231, %c9_232] : memref<8x11xf32, #tpu.memory_space<smem>>
    %448 = vector.broadcast %447 : f32 to vector<8x512xf32>
    %449 = arith.mulf %448, %446 : vector<8x512xf32>
    %450 = arith.addf %410, %449 : vector<8x512xf32>
    %c1_233 = arith.constant 1 : index
    %c9_234 = arith.constant 9 : index
    %451 = memref.load %arg10[%c1_233, %c9_234] : memref<8x11xf32, #tpu.memory_space<smem>>
    %452 = vector.broadcast %451 : f32 to vector<8x512xf32>
    %453 = arith.mulf %452, %446 : vector<8x512xf32>
    %454 = arith.addf %414, %453 : vector<8x512xf32>
    %c2_235 = arith.constant 2 : index
    %c9_236 = arith.constant 9 : index
    %455 = memref.load %arg10[%c2_235, %c9_236] : memref<8x11xf32, #tpu.memory_space<smem>>
    %456 = vector.broadcast %455 : f32 to vector<8x512xf32>
    %457 = arith.mulf %456, %446 : vector<8x512xf32>
    %458 = arith.addf %418, %457 : vector<8x512xf32>
    %c3_237 = arith.constant 3 : index
    %c9_238 = arith.constant 9 : index
    %459 = memref.load %arg10[%c3_237, %c9_238] : memref<8x11xf32, #tpu.memory_space<smem>>
    %460 = vector.broadcast %459 : f32 to vector<8x512xf32>
    %461 = arith.mulf %460, %446 : vector<8x512xf32>
    %462 = arith.addf %422, %461 : vector<8x512xf32>
    %c4_239 = arith.constant 4 : index
    %c9_240 = arith.constant 9 : index
    %463 = memref.load %arg10[%c4_239, %c9_240] : memref<8x11xf32, #tpu.memory_space<smem>>
    %464 = vector.broadcast %463 : f32 to vector<8x512xf32>
    %465 = arith.mulf %464, %446 : vector<8x512xf32>
    %466 = arith.addf %426, %465 : vector<8x512xf32>
    %c5_241 = arith.constant 5 : index
    %c9_242 = arith.constant 9 : index
    %467 = memref.load %arg10[%c5_241, %c9_242] : memref<8x11xf32, #tpu.memory_space<smem>>
    %468 = vector.broadcast %467 : f32 to vector<8x512xf32>
    %469 = arith.mulf %468, %446 : vector<8x512xf32>
    %470 = arith.addf %430, %469 : vector<8x512xf32>
    %c6_243 = arith.constant 6 : index
    %c9_244 = arith.constant 9 : index
    %471 = memref.load %arg10[%c6_243, %c9_244] : memref<8x11xf32, #tpu.memory_space<smem>>
    %472 = vector.broadcast %471 : f32 to vector<8x512xf32>
    %473 = arith.mulf %472, %446 : vector<8x512xf32>
    %474 = arith.addf %434, %473 : vector<8x512xf32>
    %c7_245 = arith.constant 7 : index
    %c9_246 = arith.constant 9 : index
    %475 = memref.load %arg10[%c7_245, %c9_246] : memref<8x11xf32, #tpu.memory_space<smem>>
    %476 = vector.broadcast %475 : f32 to vector<8x512xf32>
    %477 = arith.mulf %476, %446 : vector<8x512xf32>
    %478 = arith.addf %438, %477 : vector<8x512xf32>
    %c10 = arith.constant 10 : index
    %c0_247 = arith.constant 0 : index
    %c0_248 = arith.constant 0 : index
    %479 = vector.load %arg3[%c10, %c0_247, %c0_248] : memref<11x8x128xf32, #tpu.memory_space<vmem>>, vector<1x8x128xf32>
    %480 = vector.shape_cast %479 : vector<1x8x128xf32> to vector<8x128xf32>
    %481 = tpu.concatenate %480, %480, %480, %480 in 1 : vector<8x128xf32>, vector<8x128xf32>, vector<8x128xf32>, vector<8x128xf32> -> vector<8x512xf32>
    %c10_249 = arith.constant 10 : index
    %c0_250 = arith.constant 0 : index
    %c0_251 = arith.constant 0 : index
    %482 = vector.load %arg2[%c10_249, %c0_250, %c0_251] : memref<11x8x512xf32, #tpu.memory_space<vmem>>, vector<1x8x512xf32>
    %483 = vector.shape_cast %482 : vector<1x8x512xf32> to vector<8x512xf32>
    %484 = arith.mulf %84, %483 : vector<8x512xf32>
    %485 = arith.mulf %86, %481 : vector<8x512xf32>
    %486 = arith.addf %484, %485 : vector<8x512xf32>
    %c0_252 = arith.constant 0 : index
    %c10_253 = arith.constant 10 : index
    %487 = memref.load %arg10[%c0_252, %c10_253] : memref<8x11xf32, #tpu.memory_space<smem>>
    %488 = vector.broadcast %487 : f32 to vector<8x512xf32>
    %489 = arith.mulf %488, %486 : vector<8x512xf32>
    %490 = arith.addf %450, %489 : vector<8x512xf32>
    %c1_254 = arith.constant 1 : index
    %c10_255 = arith.constant 10 : index
    %491 = memref.load %arg10[%c1_254, %c10_255] : memref<8x11xf32, #tpu.memory_space<smem>>
    %492 = vector.broadcast %491 : f32 to vector<8x512xf32>
    %493 = arith.mulf %492, %486 : vector<8x512xf32>
    %494 = arith.addf %454, %493 : vector<8x512xf32>
    %c2_256 = arith.constant 2 : index
    %c10_257 = arith.constant 10 : index
    %495 = memref.load %arg10[%c2_256, %c10_257] : memref<8x11xf32, #tpu.memory_space<smem>>
    %496 = vector.broadcast %495 : f32 to vector<8x512xf32>
    %497 = arith.mulf %496, %486 : vector<8x512xf32>
    %498 = arith.addf %458, %497 : vector<8x512xf32>
    %c3_258 = arith.constant 3 : index
    %c10_259 = arith.constant 10 : index
    %499 = memref.load %arg10[%c3_258, %c10_259] : memref<8x11xf32, #tpu.memory_space<smem>>
    %500 = vector.broadcast %499 : f32 to vector<8x512xf32>
    %501 = arith.mulf %500, %486 : vector<8x512xf32>
    %502 = arith.addf %462, %501 : vector<8x512xf32>
    %c4_260 = arith.constant 4 : index
    %c10_261 = arith.constant 10 : index
    %503 = memref.load %arg10[%c4_260, %c10_261] : memref<8x11xf32, #tpu.memory_space<smem>>
    %504 = vector.broadcast %503 : f32 to vector<8x512xf32>
    %505 = arith.mulf %504, %486 : vector<8x512xf32>
    %506 = arith.addf %466, %505 : vector<8x512xf32>
    %c5_262 = arith.constant 5 : index
    %c10_263 = arith.constant 10 : index
    %507 = memref.load %arg10[%c5_262, %c10_263] : memref<8x11xf32, #tpu.memory_space<smem>>
    %508 = vector.broadcast %507 : f32 to vector<8x512xf32>
    %509 = arith.mulf %508, %486 : vector<8x512xf32>
    %510 = arith.addf %470, %509 : vector<8x512xf32>
    %c6_264 = arith.constant 6 : index
    %c10_265 = arith.constant 10 : index
    %511 = memref.load %arg10[%c6_264, %c10_265] : memref<8x11xf32, #tpu.memory_space<smem>>
    %512 = vector.broadcast %511 : f32 to vector<8x512xf32>
    %513 = arith.mulf %512, %486 : vector<8x512xf32>
    %514 = arith.addf %474, %513 : vector<8x512xf32>
    %c7_266 = arith.constant 7 : index
    %c10_267 = arith.constant 10 : index
    %515 = memref.load %arg10[%c7_266, %c10_267] : memref<8x11xf32, #tpu.memory_space<smem>>
    %516 = vector.broadcast %515 : f32 to vector<8x512xf32>
    %517 = arith.mulf %516, %486 : vector<8x512xf32>
    %518 = arith.addf %478, %517 : vector<8x512xf32>
    %519 = vector.shape_cast %490 : vector<8x512xf32> to vector<1x8x512xf32>
    %520 = vector.shape_cast %494 : vector<8x512xf32> to vector<1x8x512xf32>
    %521 = vector.shape_cast %498 : vector<8x512xf32> to vector<1x8x512xf32>
    %522 = vector.shape_cast %502 : vector<8x512xf32> to vector<1x8x512xf32>
    %523 = vector.shape_cast %506 : vector<8x512xf32> to vector<1x8x512xf32>
    %524 = vector.shape_cast %510 : vector<8x512xf32> to vector<1x8x512xf32>
    %525 = vector.shape_cast %514 : vector<8x512xf32> to vector<1x8x512xf32>
    %526 = vector.shape_cast %518 : vector<8x512xf32> to vector<1x8x512xf32>
    %527 = tpu.concatenate %519, %520, %521, %522, %523, %524, %525, %526 in 0 : vector<1x8x512xf32>, vector<1x8x512xf32>, vector<1x8x512xf32>, vector<1x8x512xf32>, vector<1x8x512xf32>, vector<1x8x512xf32>, vector<1x8x512xf32>, vector<1x8x512xf32> -> vector<8x8x512xf32>
    %c0_268 = arith.constant 0 : index
    %c0_269 = arith.constant 0 : index
    %c0_270 = arith.constant 0 : index
    %528 = vector.load %arg11[%c0_268, %c0_269, %c0_270] : memref<8x1x512xf32, #tpu.memory_space<vmem>>, vector<8x1x512xf32>
    %c0_271 = arith.constant 0 : index
    %c0_272 = arith.constant 0 : index
    %c0_273 = arith.constant 0 : index
    %529 = vector.load %arg12[%c0_271, %c0_272, %c0_273] : memref<8x1x512xf32, #tpu.memory_space<vmem>>, vector<8x1x512xf32>
    %cst_274 = arith.constant dense<0.000000e+00> : vector<8x8xf32>
    %530 = vector.multi_reduction <add>, %527, %cst_274 [2] : vector<8x8x512xf32> to vector<8x8xf32>
    %531 = vector.shape_cast %530 : vector<8x8xf32> to vector<8x8x1xf32>
    %cst_275 = arith.constant 5.120000e+02 : f32
    %532 = vector.broadcast %cst_275 : f32 to vector<8x8x1xf32>
    %533 = arith.divf %531, %532 : vector<8x8x1xf32>
    %cst_276 = arith.constant dense<0.000000e+00> : vector<8x1xf32>
    %534 = vector.multi_reduction <add>, %533, %cst_276 [0] : vector<8x8x1xf32> to vector<8x1xf32>
    %535 = vector.shape_cast %534 : vector<8x1xf32> to vector<1x8x1xf32>
    %cst_277 = arith.constant 8.000000e+00 : f32
    %536 = vector.broadcast %cst_277 : f32 to vector<1x8x1xf32>
    %537 = arith.divf %535, %536 : vector<1x8x1xf32>
    %538 = vector.broadcast %537 : vector<1x8x1xf32> to vector<8x8x512xf32>
    %539 = arith.subf %527, %538 : vector<8x8x512xf32>
    %540 = arith.mulf %539, %539 : vector<8x8x512xf32>
    %cst_278 = arith.constant dense<0.000000e+00> : vector<8x8xf32>
    %541 = vector.multi_reduction <add>, %540, %cst_278 [2] : vector<8x8x512xf32> to vector<8x8xf32>
    %542 = vector.shape_cast %541 : vector<8x8xf32> to vector<8x8x1xf32>
    %cst_279 = arith.constant 5.120000e+02 : f32
    %543 = vector.broadcast %cst_279 : f32 to vector<8x8x1xf32>
    %544 = arith.divf %542, %543 : vector<8x8x1xf32>
    %cst_280 = arith.constant dense<0.000000e+00> : vector<8x1xf32>
    %545 = vector.multi_reduction <add>, %544, %cst_280 [0] : vector<8x8x1xf32> to vector<8x1xf32>
    %546 = vector.shape_cast %545 : vector<8x1xf32> to vector<1x8x1xf32>
    %cst_281 = arith.constant 8.000000e+00 : f32
    %547 = vector.broadcast %cst_281 : f32 to vector<1x8x1xf32>
    %548 = arith.divf %546, %547 : vector<1x8x1xf32>
    %cst_282 = arith.constant 9.99999974E-6 : f32
    %549 = vector.broadcast %cst_282 : f32 to vector<1x8x1xf32>
    %550 = arith.addf %548, %549 : vector<1x8x1xf32>
    %551 = math.rsqrt %550 : vector<1x8x1xf32>
    %552 = vector.broadcast %551 : vector<1x8x1xf32> to vector<8x8x512xf32>
    %553 = arith.mulf %539, %552 : vector<8x8x512xf32>
    %554 = vector.broadcast %528 : vector<8x1x512xf32> to vector<8x8x512xf32>
    %555 = arith.mulf %553, %554 : vector<8x8x512xf32>
    %556 = vector.broadcast %529 : vector<8x1x512xf32> to vector<8x8x512xf32>
    %557 = arith.addf %555, %556 : vector<8x8x512xf32>
    %cst_283 = arith.constant 0.000000e+00 : f32
    %558 = vector.broadcast %cst_283 : f32 to vector<8x8x512xf32>
    %559 = arith.cmpf oge, %557, %558 : vector<8x8x512xf32>
    %cst_284 = arith.constant 2.000000e-02 : f32
    %560 = vector.broadcast %cst_284 : f32 to vector<8x8x512xf32>
    %561 = arith.mulf %560, %557 : vector<8x8x512xf32>
    %562 = arith.select %559, %557, %561 : vector<8x8x512xi1>, vector<8x8x512xf32>
    %563 = vector.extract_strided_slice %562 {offsets = [0, 0, 0], sizes = [8, 8, 128], strides = [1, 1, 1]} : vector<8x8x512xf32> to vector<8x8x128xf32>
    %564 = vector.extract_strided_slice %562 {offsets = [0, 0, 128], sizes = [8, 8, 128], strides = [1, 1, 1]} : vector<8x8x512xf32> to vector<8x8x128xf32>
    %565 = arith.addf %563, %564 : vector<8x8x128xf32>
    %566 = vector.extract_strided_slice %562 {offsets = [0, 0, 256], sizes = [8, 8, 128], strides = [1, 1, 1]} : vector<8x8x512xf32> to vector<8x8x128xf32>
    %567 = arith.addf %565, %566 : vector<8x8x128xf32>
    %568 = vector.extract_strided_slice %562 {offsets = [0, 0, 384], sizes = [8, 8, 128], strides = [1, 1, 1]} : vector<8x8x512xf32> to vector<8x8x128xf32>
    %569 = arith.addf %567, %568 : vector<8x8x128xf32>
    %cst_285 = arith.constant 2.500000e-01 : f32
    %570 = vector.broadcast %cst_285 : f32 to vector<8x8x128xf32>
    %571 = arith.mulf %569, %570 : vector<8x8x128xf32>
    %c0_286 = arith.constant 0 : index
    %c0_287 = arith.constant 0 : index
    %c0_288 = arith.constant 0 : index
    %572 = vector.load %arg13[%c0_286, %c0_287, %c0_288] : memref<8x8x128xf32, #tpu.memory_space<vmem>>, vector<8x8x128xf32>
    tpu.vector_store %arg13[%c0_286, %c0_287, %c0_288], %571 {strides = array<i32>} : memref<8x8x128xf32, #tpu.memory_space<vmem>>, vector<8x8x128xf32>,
    return
  }
  func.func @transform_0(%arg0: i32) -> (i32, i32, i32) {
    %c0_i32 = arith.constant 0 : i32
    %c0_i32_0 = arith.constant 0 : i32
    %c0_i32_1 = arith.constant 0 : i32
    return %c0_i32, %arg0, %c0_i32_0 : i32, i32, i32
  }
  func.func @transform_1(%arg0: i32) -> (i32, i32, i32) {
    %c0_i32 = arith.constant 0 : i32
    %c0_i32_0 = arith.constant 0 : i32
    %c0_i32_1 = arith.constant 0 : i32
    return %c0_i32, %arg0, %c0_i32_0 : i32, i32, i32
  }
  func.func @transform_2(%arg0: i32) -> (i32, i32, i32) {
    %c0_i32 = arith.constant 0 : i32
    %c0_i32_0 = arith.constant 0 : i32
    %c0_i32_1 = arith.constant 0 : i32
    return %c0_i32, %arg0, %c0_i32_0 : i32, i32, i32
  }
  func.func @transform_3(%arg0: i32) -> i32 {
    %c0_i32 = arith.constant 0 : i32
    %c0_i32_0 = arith.constant 0 : i32
    return %c0_i32 : i32
  }
  func.func @transform_4(%arg0: i32) -> i32 {
    %c0_i32 = arith.constant 0 : i32
    %c0_i32_0 = arith.constant 0 : i32
    return %c0_i32 : i32
  }
  func.func @transform_5(%arg0: i32) -> (i32, i32) {
    %c0_i32 = arith.constant 0 : i32
    %c0_i32_0 = arith.constant 0 : i32
    %c0_i32_1 = arith.constant 0 : i32
    return %c0_i32, %c0_i32_0 : i32, i32
  }
  func.func @transform_6(%arg0: i32) -> (i32, i32) {
    %c0_i32 = arith.constant 0 : i32
    %c0_i32_0 = arith.constant 0 : i32
    %c0_i32_1 = arith.constant 0 : i32
    return %c0_i32, %c0_i32_0 : i32, i32
  }
  func.func @transform_7(%arg0: i32) -> (i32, i32) {
    %c0_i32 = arith.constant 0 : i32
    %c0_i32_0 = arith.constant 0 : i32
    %c0_i32_1 = arith.constant 0 : i32
    return %c0_i32, %c0_i32_0 : i32, i32
  }
  func.func @transform_8(%arg0: i32) -> (i32, i32) {
    %c0_i32 = arith.constant 0 : i32
    %c0_i32_0 = arith.constant 0 : i32
    %c0_i32_1 = arith.constant 0 : i32
    return %c0_i32, %c0_i32_0 : i32, i32
  }
  func.func @transform_9(%arg0: i32) -> (i32, i32) {
    %c0_i32 = arith.constant 0 : i32
    %c0_i32_0 = arith.constant 0 : i32
    %c0_i32_1 = arith.constant 0 : i32
    return %c0_i32, %c0_i32_0 : i32, i32
  }
  func.func @transform_10(%arg0: i32) -> (i32, i32, i32) {
    %c0_i32 = arith.constant 0 : i32
    %c0_i32_0 = arith.constant 0 : i32
    %c0_i32_1 = arith.constant 0 : i32
    %c0_i32_2 = arith.constant 0 : i32
    return %c0_i32, %c0_i32_0, %c0_i32_1 : i32, i32, i32
  }
  func.func @transform_11(%arg0: i32) -> (i32, i32, i32) {
    %c0_i32 = arith.constant 0 : i32
    %c0_i32_0 = arith.constant 0 : i32
    %c0_i32_1 = arith.constant 0 : i32
    %c0_i32_2 = arith.constant 0 : i32
    return %c0_i32, %c0_i32_0, %c0_i32_1 : i32, i32, i32
  }
  func.func @transform_12(%arg0: i32) -> (i32, i32, i32) {
    %c0_i32 = arith.constant 0 : i32
    %c0_i32_0 = arith.constant 0 : i32
    %c0_i32_1 = arith.constant 0 : i32
    return %c0_i32, %arg0, %c0_i32_0 : i32, i32, i32
  }
}

</mosaic_0001>

<llo_original>
// kernel: tpu_custom_call.1
$region0: #{tpu_custom_call.1}
  #allocation0 [shape = 'u32[]', space=smem, size = 0x4, offset = 0x4, fixed_abs, tag = 'smem constant byte address 0x4 - core index']
  #allocation1 [shape = 'u32[72,128]{1,0:T(1,128)}', space=vmem, size = 0x9000, scoped, tag = 'internal scratch']
  #allocation2 [shape = 'f32[1]{0:T(128)S(6)}', space=smem, size = 0x200, scoped, tag = 'scoped memory for tpu_custom_call.1']
  %s0 = inlined_call_operand.hbm [shape: f32[4,16,512], index: 0, kind: input, shape index: {}]
  %s1 = inlined_call_operand.hbm [shape: f32[11,16,512], index: 1, kind: input, shape index: {}]
  %s2 = inlined_call_operand.hbm [shape: f32[11,16,128], index: 2, kind: input, shape index: {}]
  %s3 = inlined_call_operand.<no memory space> [shape: f32[1], index: 3, kind: input, shape index: {}]
  %s4 = inlined_call_operand.vmem [shape: f32[4], index: 4, kind: input, shape index: {}]
  %s5 = inlined_call_operand.hbm [shape: f32[1,512], index: 5, kind: input, shape index: {}]
  %s6 = inlined_call_operand.hbm [shape: f32[1,512], index: 6, kind: input, shape index: {}]
  %s7 = inlined_call_operand.hbm [shape: f32[1,512], index: 7, kind: input, shape index: {}]
  %s8 = inlined_call_operand.hbm [shape: f32[1,512], index: 8, kind: input, shape index: {}]
  %s9 = inlined_call_operand.vmem [shape: f32[8,11], index: 9, kind: input, shape index: {}]
  %s10 = inlined_call_operand.hbm [shape: f32[8,1,512], index: 10, kind: input, shape index: {}]
  %s11 = inlined_call_operand.hbm [shape: f32[8,1,512], index: 11, kind: input, shape index: {}]
  %s12 = inlined_call_operand.hbm [shape: f32[8,16,128], index: 12, kind: output, shape index: {}]
  %s13 = sld [smem:[#allocation0]]
  $region125: #{tpu_custom_call.1} parent=0
    _
  %s15 = ssub.s32 1, %s13
  %s16 = scalar_select 0, %s15, %s13
  %17 = sst [smem:[#allocation2]] %s3
  $region1: #{tpu_custom_call.1} parent=0
    #allocation3 [shape = 'u8[131072]{0}', space=vmem, size = 0x20000, scoped, tag = 'input window, operand 0']
    #allocation4 [shape = 's32[2]{0}', space=sflag, size = 0x8, scoped, tag = 'scoped memory for tpu_custom_call.1']
    #allocation5 [shape = 's32[2]{0}', space=sflag, size = 0x8, scoped, tag = 'scoped memory for tpu_custom_call.1']
    #allocation6 [shape = 's32[2]{0}', space=sflag, size = 0x8, scoped, tag = 'scoped memory for tpu_custom_call.1']
    #allocation7 [shape = 'u8[360448]{0}', space=vmem, size = 0x58000, scoped, tag = 'input window, operand 1']
    #allocation8 [shape = 's32[2]{0}', space=sflag, size = 0x8, scoped, tag = 'scoped memory for tpu_custom_call.1']
    #allocation9 [shape = 'u8[90112]{0}', space=vmem, size = 0x16000, scoped, tag = 'input window, operand 2']
    #allocation10 [shape = 'u8[512]{0}', space=smem, size = 0x200, scoped, tag = 'input window, operand 4, single buffered']
    #allocation11 [shape = 'u8[2048]{0}', space=vmem, size = 0x800, scoped, tag = 'input window, operand 5, single buffered']
    #allocation12 [shape = 's32[1]{0}', space=sflag, size = 0x4, scoped, tag = 'scoped memory for tpu_custom_call.1']
    #allocation13 [shape = 'u8[2048]{0}', space=vmem, size = 0x800, scoped, tag = 'input window, operand 6, single buffered']
    #allocation14 [shape = 'u8[2048]{0}', space=vmem, size = 0x800, scoped, tag = 'input window, operand 7, single buffered']
    #allocation15 [shape = 's32[1]{0}', space=sflag, size = 0x4, scoped, tag = 'scoped memory for tpu_custom_call.1']
    #allocation16 [shape = 'u8[2048]{0}', space=vmem, size = 0x800, scoped, tag = 'input window, operand 8, single buffered']
    #allocation17 [shape = 'u8[4096]{0}', space=smem, size = 0x1000, scoped, tag = 'input window, operand 9, single buffered']
    #allocation18 [shape = 's32[1]{0}', space=sflag, size = 0x4, scoped, tag = 'scoped memory for tpu_custom_call.1']
    #allocation19 [shape = 'u8[16384]{0}', space=vmem, size = 0x4000, scoped, tag = 'input window, operand 10, single buffered']
    #allocation20 [shape = 's32[1]{0}', space=sflag, size = 0x4, scoped, tag = 'scoped memory for tpu_custom_call.1']
    #allocation21 [shape = 'u8[16384]{0}', space=vmem, size = 0x4000, scoped, tag = 'input window, operand 11, single buffered']
    #allocation22 [shape = 'u8[65536]{0}', space=vmem, size = 0x10000, scoped, tag = 'output window, operand 0']
    %18 = vsyncpa [#allocation4], 0
    %s19 = scalar_lea.sflag [#allocation4], 1
    %20 = vsyncpa %s19, 0
    %21 = vsyncpa [#allocation8], 0
    %s22 = scalar_lea.sflag [#allocation8], 1
    %23 = vsyncpa %s22, 0
    %24 = vsyncpa [#allocation6], 0
    %25 = vsyncpa [#allocation12], 0
    %26 = vsyncpa [#allocation15], 0
    %27 = vsyncpa [#allocation18], 0
    %28 = vsyncpa [#allocation20], 0
    %29 = vsyncpa [#allocation5], 0
    %s30 = scalar_lea.sflag [#allocation5], 1
    %31 = vsyncpa %s30, 0
    loop: start=0, step=1, limit=4
    $region2: #{tpu_custom_call.1} parent=1 // loop_pre_header
      _
    $region3: #{tpu_custom_call.1} parent=1 // loop_header
      %s33 = sphi 0, %s37
      %p34 = scmp.ge.s32.totalorder %s33, 4
      %s43 = sphi 0, %s45
      %s46 = sphi 0, %s43
      %s47 = sphi 0, %s46
      %s63 = sphi 0, %s47
      %s69 = sphi 0, %s71
      %s72 = sphi 0, %s69
      %s73 = sphi 0, %s72
      %s89 = sphi 0, %s73
      %s95 = sphi 0, %s97
      %s98 = sphi 0, %s95
      %s99 = sphi 0, %s98
      %s115 = sphi 0, %s99
      %s119 = sphi 0, %s119
      %s121 = sphi 0, %s119
      %s122 = sphi 0, %s121
      %s136 = sphi 0, %s122
      %s140 = sphi 0, %s140
      %s142 = sphi 0, %s140
      %s143 = sphi 0, %s142
      %s157 = sphi 0, %s143
      %s161 = sphi 0, %s161
      %s163 = sphi 0, %s161
      %s164 = sphi 0, %s163
      %s178 = sphi 0, %s164
      %s182 = sphi 0, %s182
      %s184 = sphi 0, %s182
      %s185 = sphi 0, %s184
      %s199 = sphi 0, %s185
      %s203 = sphi 0, %s203
      %s205 = sphi 0, %s203
      %s206 = sphi 0, %s205
      %s220 = sphi 0, %s206
      %s224 = sphi 0, %s224
      %s226 = sphi 0, %s224
      %s227 = sphi 0, %s226
      %s241 = sphi 0, %s227
      %s245 = sphi 0, %s245
      %s247 = sphi 0, %s245
      %s248 = sphi 0, %s247
      %s262 = sphi 0, %s248
      %s266 = sphi 0, %s266
      %s268 = sphi 0, %s266
      %s269 = sphi 0, %s268
      %s283 = sphi 0, %s269
      %s287 = sphi 0, %s287
      %s289 = sphi 0, %s287
      %s290 = sphi 0, %s289
      %s304 = sphi 0, %s290
      %s310 = sphi 0, %s312
      %s313 = sphi 0, %s310
      %s314 = sphi 0, %s313
      %s330 = sphi 0, %s314
    $region4: #{tpu_custom_call.1} parent=1 // loop_header_branch
      %36 = sbr.rel (%p34) target = $region8
    $region5: #{tpu_custom_call.1} parent=1 // loop_body
      %s38 = ssub.s32 %s33, 1
      %s39 = ssub.s32 %s33, 2
      %s40 = sadd.s32 %s33, 1
      %s41 = ssub.s32 %s33, %s40
      %p42 = scmp.eq.s32.totalorder %s41, 0
      %s44 = sadd.s32 %s43, 1
      %s45 = scalar_select %p42, %s43, %s44
      %p48 = pneg %p42
      %p49 = scmp.eq.s32.totalorder %s33, 1
      %p50 = por %p48, %p49
      %p51 = scmp.ne.s32.totalorder %s43, %s46
      %p52 = scmp.eq.s32.totalorder %s33, 0
      %p53 = por %p51, %p52
      %p54 = scmp.ne.s32.totalorder %s43, %s46
      %p55 = scmp.eq.s32.totalorder %s38, 1
      %p56 = por %p54, %p55
      %p57 = scmp.ne.s32.totalorder %s46, %s47
      %p58 = scmp.eq.s32.totalorder %s38, 0
      %p59 = por %p57, %p58
      %p60 = scmp.ne.s32.totalorder %s46, %s47
      %p61 = scmp.eq.s32.totalorder %s39, 1
      %p62 = por %p60, %p61
      %p64 = scmp.ne.s32.totalorder %s47, %s63
      %p65 = scmp.eq.s32.totalorder %s39, 0
      %p66 = por %p64, %p65
      %s67 = ssub.s32 %s33, %s40
      %p68 = scmp.eq.s32.totalorder %s67, 0
      %s70 = sadd.s32 %s69, 1
      %s71 = scalar_select %p68, %s69, %s70
      %p74 = pneg %p68
      %p75 = scmp.eq.s32.totalorder %s33, 1
      %p76 = por %p74, %p75
      %p77 = scmp.ne.s32.totalorder %s69, %s72
      %p78 = scmp.eq.s32.totalorder %s33, 0
      %p79 = por %p77, %p78
      %p80 = scmp.ne.s32.totalorder %s69, %s72
      %p81 = scmp.eq.s32.totalorder %s38, 1
      %p82 = por %p80, %p81
      %p83 = scmp.ne.s32.totalorder %s72, %s73
      %p84 = scmp.eq.s32.totalorder %s38, 0
      %p85 = por %p83, %p84
      %p86 = scmp.ne.s32.totalorder %s72, %s73
      %p87 = scmp.eq.s32.totalorder %s39, 1
      %p88 = por %p86, %p87
      %p90 = scmp.ne.s32.totalorder %s73, %s89
      %p91 = scmp.eq.s32.totalorder %s39, 0
      %p92 = por %p90, %p91
      %s93 = ssub.s32 %s33, %s40
      %p94 = scmp.eq.s32.totalorder %s93, 0
      %s96 = sadd.s32 %s95, 1
      %s97 = scalar_select %p94, %s95, %s96
      %p100 = pneg %p94
      %p101 = scmp.eq.s32.totalorder %s33, 1
      %p102 = por %p100, %p101
      %p103 = scmp.ne.s32.totalorder %s95, %s98
      %p104 = scmp.eq.s32.totalorder %s33, 0
      %p105 = por %p103, %p104
      %p106 = scmp.ne.s32.totalorder %s95, %s98
      %p107 = scmp.eq.s32.totalorder %s38, 1
      %p108 = por %p106, %p107
      %p109 = scmp.ne.s32.totalorder %s98, %s99
      %p110 = scmp.eq.s32.totalorder %s38, 0
      %p111 = por %p109, %p110
      %p112 = scmp.ne.s32.totalorder %s98, %s99
      %p113 = scmp.eq.s32.totalorder %s39, 1
      %p114 = por %p112, %p113
      %p116 = scmp.ne.s32.totalorder %s99, %s115
      %p117 = scmp.eq.s32.totalorder %s39, 0
      %p118 = por %p116, %p117
      %s120 = sadd.s32 %s119, 1
      %p123 = scmp.eq.s32.totalorder %s33, 1
      %p124 = scmp.ne.s32.totalorder %s119, %s121
      %p125 = scmp.eq.s32.totalorder %s33, 0
      %p126 = por %p124, %p125
      %p127 = scmp.ne.s32.totalorder %s119, %s121
      %p128 = scmp.eq.s32.totalorder %s38, 1
      %p129 = por %p127, %p128
      %p130 = scmp.ne.s32.totalorder %s121, %s122
      %p131 = scmp.eq.s32.totalorder %s38, 0
      %p132 = por %p130, %p131
      %p133 = scmp.ne.s32.totalorder %s121, %s122
      %p134 = scmp.eq.s32.totalorder %s39, 1
      %p135 = por %p133, %p134
      %p137 = scmp.ne.s32.totalorder %s122, %s136
      %p138 = scmp.eq.s32.totalorder %s39, 0
      %p139 = por %p137, %p138
      %s141 = sadd.s32 %s140, 1
      %p144 = scmp.eq.s32.totalorder %s33, 1
      %p145 = scmp.ne.s32.totalorder %s140, %s142
      %p146 = scmp.eq.s32.totalorder %s33, 0
      %p147 = por %p145, %p146
      %p148 = scmp.ne.s32.totalorder %s140, %s142
      %p149 = scmp.eq.s32.totalorder %s38, 1
      %p150 = por %p148, %p149
      %p151 = scmp.ne.s32.totalorder %s142, %s143
      %p152 = scmp.eq.s32.totalorder %s38, 0
      %p153 = por %p151, %p152
      %p154 = scmp.ne.s32.totalorder %s142, %s143
      %p155 = scmp.eq.s32.totalorder %s39, 1
      %p156 = por %p154, %p155
      %p158 = scmp.ne.s32.totalorder %s143, %s157
      %p159 = scmp.eq.s32.totalorder %s39, 0
      %p160 = por %p158, %p159
      %s162 = sadd.s32 %s161, 1
      %p165 = scmp.eq.s32.totalorder %s33, 1
      %p166 = scmp.ne.s32.totalorder %s161, %s163
      %p167 = scmp.eq.s32.totalorder %s33, 0
      %p168 = por %p166, %p167
      %p169 = scmp.ne.s32.totalorder %s161, %s163
      %p170 = scmp.eq.s32.totalorder %s38, 1
      %p171 = por %p169, %p170
      %p172 = scmp.ne.s32.totalorder %s163, %s164
      %p173 = scmp.eq.s32.totalorder %s38, 0
      %p174 = por %p172, %p173
      %p175 = scmp.ne.s32.totalorder %s163, %s164
      %p176 = scmp.eq.s32.totalorder %s39, 1
      %p177 = por %p175, %p176
      %p179 = scmp.ne.s32.totalorder %s164, %s178
      %p180 = scmp.eq.s32.totalorder %s39, 0
      %p181 = por %p179, %p180
      %s183 = sadd.s32 %s182, 1
      %p186 = scmp.eq.s32.totalorder %s33, 1
      %p187 = scmp.ne.s32.totalorder %s182, %s184
      %p188 = scmp.eq.s32.totalorder %s33, 0
      %p189 = por %p187, %p188
      %p190 = scmp.ne.s32.totalorder %s182, %s184
      %p191 = scmp.eq.s32.totalorder %s38, 1
      %p192 = por %p190, %p191
      %p193 = scmp.ne.s32.totalorder %s184, %s185
      %p194 = scmp.eq.s32.totalorder %s38, 0
      %p195 = por %p193, %p194
      %p196 = scmp.ne.s32.totalorder %s184, %s185
      %p197 = scmp.eq.s32.totalorder %s39, 1
      %p198 = por %p196, %p197
      %p200 = scmp.ne.s32.totalorder %s185, %s199
      %p201 = scmp.eq.s32.totalorder %s39, 0
      %p202 = por %p200, %p201
      %s204 = sadd.s32 %s203, 1
      %p207 = scmp.eq.s32.totalorder %s33, 1
      %p208 = scmp.ne.s32.totalorder %s203, %s205
      %p209 = scmp.eq.s32.totalorder %s33, 0
      %p210 = por %p208, %p209
      %p211 = scmp.ne.s32.totalorder %s203, %s205
      %p212 = scmp.eq.s32.totalorder %s38, 1
      %p213 = por %p211, %p212
      %p214 = scmp.ne.s32.totalorder %s205, %s206
      %p215 = scmp.eq.s32.totalorder %s38, 0
      %p216 = por %p214, %p215
      %p217 = scmp.ne.s32.totalorder %s205, %s206
      %p218 = scmp.eq.s32.totalorder %s39, 1
      %p219 = por %p217, %p218
      %p221 = scmp.ne.s32.totalorder %s206, %s220
      %p222 = scmp.eq.s32.totalorder %s39, 0
      %p223 = por %p221, %p222
      %s225 = sadd.s32 %s224, 1
      %p228 = scmp.eq.s32.totalorder %s33, 1
      %p229 = scmp.ne.s32.totalorder %s224, %s226
      %p230 = scmp.eq.s32.totalorder %s33, 0
      %p231 = por %p229, %p230
      %p232 = scmp.ne.s32.totalorder %s224, %s226
      %p233 = scmp.eq.s32.totalorder %s38, 1
      %p234 = por %p232, %p233
      %p235 = scmp.ne.s32.totalorder %s226, %s227
      %p236 = scmp.eq.s32.totalorder %s38, 0
      %p237 = por %p235, %p236
      %p238 = scmp.ne.s32.totalorder %s226, %s227
      %p239 = scmp.eq.s32.totalorder %s39, 1
      %p240 = por %p238, %p239
      %p242 = scmp.ne.s32.totalorder %s227, %s241
      %p243 = scmp.eq.s32.totalorder %s39, 0
      %p244 = por %p242, %p243
      %s246 = sadd.s32 %s245, 1
      %p249 = scmp.eq.s32.totalorder %s33, 1
      %p250 = scmp.ne.s32.totalorder %s245, %s247
      %p251 = scmp.eq.s32.totalorder %s33, 0
      %p252 = por %p250, %p251
      %p253 = scmp.ne.s32.totalorder %s245, %s247
      %p254 = scmp.eq.s32.totalorder %s38, 1
      %p255 = por %p253, %p254
      %p256 = scmp.ne.s32.totalorder %s247, %s248
      %p257 = scmp.eq.s32.totalorder %s38, 0
      %p258 = por %p256, %p257
      %p259 = scmp.ne.s32.totalorder %s247, %s248
      %p260 = scmp.eq.s32.totalorder %s39, 1
      %p261 = por %p259, %p260
      %p263 = scmp.ne.s32.totalorder %s248, %s262
      %p264 = scmp.eq.s32.totalorder %s39, 0
      %p265 = por %p263, %p264
      %s267 = sadd.s32 %s266, 1
      %p270 = scmp.eq.s32.totalorder %s33, 1
      %p271 = scmp.ne.s32.totalorder %s266, %s268
      %p272 = scmp.eq.s32.totalorder %s33, 0
      %p273 = por %p271, %p272
      %p274 = scmp.ne.s32.totalorder %s266, %s268
      %p275 = scmp.eq.s32.totalorder %s38, 1
      %p276 = por %p274, %p275
      %p277 = scmp.ne.s32.totalorder %s268, %s269
      %p278 = scmp.eq.s32.totalorder %s38, 0
      %p279 = por %p277, %p278
      %p280 = scmp.ne.s32.totalorder %s268, %s269
      %p281 = scmp.eq.s32.totalorder %s39, 1
      %p282 = por %p280, %p281
      %p284 = scmp.ne.s32.totalorder %s269, %s283
      %p285 = scmp.eq.s32.totalorder %s39, 0
      %p286 = por %p284, %p285
      %s288 = sadd.s32 %s287, 1
      %p291 = scmp.eq.s32.totalorder %s33, 1
      %p292 = scmp.ne.s32.totalorder %s287, %s289
      %p293 = scmp.eq.s32.totalorder %s33, 0
      %p294 = por %p292, %p293
      %p295 = scmp.ne.s32.totalorder %s287, %s289
      %p296 = scmp.eq.s32.totalorder %s38, 1
      %p297 = por %p295, %p296
      %p298 = scmp.ne.s32.totalorder %s289, %s290
      %p299 = scmp.eq.s32.totalorder %s38, 0
      %p300 = por %p298, %p299
      %p301 = scmp.ne.s32.totalorder %s289, %s290
      %p302 = scmp.eq.s32.totalorder %s39, 1
      %p303 = por %p301, %p302
      %p305 = scmp.ne.s32.totalorder %s290, %s304
      %p306 = scmp.eq.s32.totalorder %s39, 0
      %p307 = por %p305, %p306
      %s308 = ssub.s32 %s33, %s40
      %p309 = scmp.eq.s32.totalorder %s308, 0
      %s311 = sadd.s32 %s310, 1
      %s312 = scalar_select %p309, %s310, %s311
      %p315 = pneg %p309
      %p316 = scmp.eq.s32.totalorder %s33, 1
      %p317 = por %p315, %p316
      %p318 = scmp.ne.s32.totalorder %s310, %s313
      %p319 = scmp.eq.s32.totalorder %s33, 0
      %p320 = por %p318, %p319
      %p321 = scmp.ne.s32.totalorder %s310, %s313
      %p322 = scmp.eq.s32.totalorder %s38, 1
      %p323 = por %p321, %p322
      %p324 = scmp.ne.s32.totalorder %s313, %s314
      %p325 = scmp.eq.s32.totalorder %s38, 0
      %p326 = por %p324, %p325
      %p327 = scmp.ne.s32.totalorder %s313, %s314
      %p328 = scmp.eq.s32.totalorder %s39, 1
      %p329 = por %p327, %p328
      %p331 = scmp.ne.s32.totalorder %s314, %s330
      %p332 = scmp.eq.s32.totalorder %s39, 0
      %p333 = por %p331, %p332
      %p334 = scmp.le.s32.totalorder 1, %s33
      %p335 = scmp.lt.s32.totalorder %s33, 3
      %p336 = pnand %p334, %p335
      %p337 = pneg %p336
      // Predicated region
      $region9: #{tpu_custom_call.1} parent=5 // pred_check
        _
      $region10: #{tpu_custom_call.1} parent=5 // pred_check_branch
        %339 = sbr.rel (%p336) target = $region12
      $region11: #{tpu_custom_call.1} parent=5 // pred_region
        %s340 = ssub.s32 %s33, 1
        // Predicated region
        $region13: #{tpu_custom_call.1} parent=11 // pred_check
          %p341 = pneg %p132
        $region14: #{tpu_custom_call.1} parent=11 // pred_check_branch
          %343 = sbr.rel (%p341) target = $region16
        $region15: #{tpu_custom_call.1} parent=11 // pred_region
          _
        $region16: #{tpu_custom_call.1} parent=11 // pred_fallthru
          _
        // Predicated region
        $region17: #{tpu_custom_call.1} parent=11 // pred_check
          %p344 = pneg %p153
        $region18: #{tpu_custom_call.1} parent=11 // pred_check_branch
          %346 = sbr.rel (%p344) target = $region20
        $region19: #{tpu_custom_call.1} parent=11 // pred_region
          %348 = vsyncadd [#allocation6], 0
          %s350 = sshll.u32 %s4, 4
          %s351 = int_to_ptr.vmem [resolvable:$true] %s350
          %353 = dma.vmem_to_smem %s351, 16, [#allocation10], [#allocation6]
        $region20: #{tpu_custom_call.1} parent=11 // pred_fallthru
          _
        // Predicated region
        $region21: #{tpu_custom_call.1} parent=11 // pred_check
          %p354 = pneg %p174
        $region22: #{tpu_custom_call.1} parent=11 // pred_check_branch
          %356 = sbr.rel (%p354) target = $region24
        $region23: #{tpu_custom_call.1} parent=11 // pred_region
          %358 = vsyncadd [#allocation12], 0
          %s360 = sshll.u32 %s5, 4
          %s361 = int_to_ptr.hbm [resolvable:$true] %s360
          %s362 = sshll.u32 [#allocation11], 4
          %s363 = int_to_ptr.vmem [resolvable:$true] %s362
          %365 = dma.hbm_to_vmem [thread:$0]  %s361, 64, %s363, [#allocation12]
        $region24: #{tpu_custom_call.1} parent=11 // pred_fallthru
          _
        // Predicated region
        $region25: #{tpu_custom_call.1} parent=11 // pred_check
          %p366 = pneg %p195
        $region26: #{tpu_custom_call.1} parent=11 // pred_check_branch
          %368 = sbr.rel (%p366) target = $region28
        $region27: #{tpu_custom_call.1} parent=11 // pred_region
          %370 = vsyncadd [#allocation12], 0
          %s372 = sshll.u32 %s6, 4
          %s373 = int_to_ptr.hbm [resolvable:$true] %s372
          %s374 = sshll.u32 [#allocation13], 4
          %s375 = int_to_ptr.vmem [resolvable:$true] %s374
          %377 = dma.hbm_to_vmem [thread:$0]  %s373, 64, %s375, [#allocation12]
        $region28: #{tpu_custom_call.1} parent=11 // pred_fallthru
          _
        // Predicated region
        $region29: #{tpu_custom_call.1} parent=11 // pred_check
          %p378 = pneg %p216
        $region30: #{tpu_custom_call.1} parent=11 // pred_check_branch
          %380 = sbr.rel (%p378) target = $region32
        $region31: #{tpu_custom_call.1} parent=11 // pred_region
          %382 = vsyncadd [#allocation15], 0
          %s384 = sshll.u32 %s7, 4
          %s385 = int_to_ptr.hbm [resolvable:$true] %s384
          %s386 = sshll.u32 [#allocation14], 4
          %s387 = int_to_ptr.vmem [resolvable:$true] %s386
          %389 = dma.hbm_to_vmem [thread:$0]  %s385, 64, %s387, [#allocation15]
        $region32: #{tpu_custom_call.1} parent=11 // pred_fallthru
          _
        // Predicated region
        $region33: #{tpu_custom_call.1} parent=11 // pred_check
          %p390 = pneg %p237
        $region34: #{tpu_custom_call.1} parent=11 // pred_check_branch
          %392 = sbr.rel (%p390) target = $region36
        $region35: #{tpu_custom_call.1} parent=11 // pred_region
          %394 = vsyncadd [#allocation15], 0
          %s396 = sshll.u32 %s8, 4
          %s397 = int_to_ptr.hbm [resolvable:$true] %s396
          %s398 = sshll.u32 [#allocation16], 4
          %s399 = int_to_ptr.vmem [resolvable:$true] %s398
          %401 = dma.hbm_to_vmem [thread:$0]  %s397, 64, %s399, [#allocation15]
        $region36: #{tpu_custom_call.1} parent=11 // pred_fallthru
          _
        // Predicated region
        $region37: #{tpu_custom_call.1} parent=11 // pred_check
          %p402 = pneg %p258
        $region38: #{tpu_custom_call.1} parent=11 // pred_check_branch
          %404 = sbr.rel (%p402) target = $region40
        $region39: #{tpu_custom_call.1} parent=11 // pred_region
          %406 = vsyncadd [#allocation18], 0
          %s408 = sshll.u32 %s9, 4
          %s409 = int_to_ptr.vmem [resolvable:$true] %s408
          %411 = dma.vmem_to_smem %s409, 128, [#allocation17], [#allocation18]
        $region40: #{tpu_custom_call.1} parent=11 // pred_fallthru
          _
        // Predicated region
        $region41: #{tpu_custom_call.1} parent=11 // pred_check
          %p412 = pneg %p279
        $region42: #{tpu_custom_call.1} parent=11 // pred_check_branch
          %414 = sbr.rel (%p412) target = $region44
        $region43: #{tpu_custom_call.1} parent=11 // pred_region
          %416 = vsyncadd [#allocation20], 0
          %s417 = sshll.u32 %s10, 4
          %s418 = int_to_ptr.hbm [resolvable:$true] %s417
          %s419 = sshll.u32 [#allocation19], 4
          %s420 = int_to_ptr.vmem [resolvable:$true] %s419
          %425 = dma.hbm_to_vmem [thread:$0]  %s418, 512, %s420, [#allocation20], 64, 64, 4
        $region44: #{tpu_custom_call.1} parent=11 // pred_fallthru
          _
        // Predicated region
        $region45: #{tpu_custom_call.1} parent=11 // pred_check
          %p426 = pneg %p300
        $region46: #{tpu_custom_call.1} parent=11 // pred_check_branch
          %428 = sbr.rel (%p426) target = $region48
        $region47: #{tpu_custom_call.1} parent=11 // pred_region
          %430 = vsyncadd [#allocation20], 0
          %s431 = sshll.u32 %s11, 4
          %s432 = int_to_ptr.hbm [resolvable:$true] %s431
          %s433 = sshll.u32 [#allocation21], 4
          %s434 = int_to_ptr.vmem [resolvable:$true] %s433
          %439 = dma.hbm_to_vmem [thread:$0]  %s432, 512, %s434, [#allocation20], 64, 64, 4
        $region48: #{tpu_custom_call.1} parent=11 // pred_fallthru
          _
      $region12: #{tpu_custom_call.1} parent=5 // pred_fallthru
        _
      %p440 = scmp.lt.s32.totalorder %s33, 2
      // Predicated region
      $region49: #{tpu_custom_call.1} parent=5 // pred_check
        %p441 = pneg %p440
      $region50: #{tpu_custom_call.1} parent=5 // pred_check_branch
        %443 = sbr.rel (%p441) target = $region52
      $region51: #{tpu_custom_call.1} parent=5 // pred_region
        // Predicated region
        $region53: #{tpu_custom_call.1} parent=51 // pred_check
          %p444 = pneg %p53
        $region54: #{tpu_custom_call.1} parent=51 // pred_check_branch
          %446 = sbr.rel (%p444) target = $region56
        $region55: #{tpu_custom_call.1} parent=51 // pred_region
          %s447 = sand.u32 %s43, 1
          %s448 = scalar_lea.sflag [#allocation4], %s447
          %s449 = sand.u32 %s43, 1
          %s450 = smul.addr %s449, 128
          %s451 = scalar_lea.vmem [#allocation3], %s450
          %453 = vsyncadd %s448, 0
          %s454 = smul.addr %s33, 4
          %s455 = smul.addr %s454, 8
          %s456 = scalar_lea.hbm %s0, %s455
          %s457 = sshll.u32 %s456, 4
          %s458 = int_to_ptr.hbm [resolvable:$true] %s457
          %s459 = sshll.u32 %s451, 4
          %s460 = int_to_ptr.vmem [resolvable:$true] %s459
          %465 = dma.hbm_to_vmem [thread:$0]  %s458, 2048, %s460, %s448, 1024, 512, 32
        $region56: #{tpu_custom_call.1} parent=51 // pred_fallthru
          _
        // Predicated region
        $region57: #{tpu_custom_call.1} parent=51 // pred_check
          %p466 = pneg %p79
        $region58: #{tpu_custom_call.1} parent=51 // pred_check_branch
          %468 = sbr.rel (%p466) target = $region60
        $region59: #{tpu_custom_call.1} parent=51 // pred_region
          %s469 = sand.u32 %s33, 1
          %s470 = scalar_lea.sflag [#allocation8], %s469
          %s471 = sand.u32 %s69, 1
          %s472 = smul.addr %s471, 352
          %s473 = scalar_lea.vmem [#allocation7], %s472
          %475 = vsyncadd %s470, 0
          %s476 = smul.addr %s33, 4
          %s477 = smul.addr %s476, 8
          %s478 = scalar_lea.hbm %s1, %s477
          %s479 = sshll.u32 %s478, 4
          %s480 = int_to_ptr.hbm [resolvable:$true] %s479
          %s481 = sshll.u32 %s473, 4
          %s482 = int_to_ptr.vmem [resolvable:$true] %s481
          %487 = dma.hbm_to_vmem [thread:$0]  %s480, 5632, %s482, %s470, 1024, 512, 32
        $region60: #{tpu_custom_call.1} parent=51 // pred_fallthru
          _
        // Predicated region
        $region61: #{tpu_custom_call.1} parent=51 // pred_check
          %p488 = pneg %p105
        $region62: #{tpu_custom_call.1} parent=51 // pred_check_branch
          %490 = sbr.rel (%p488) target = $region64
        $region63: #{tpu_custom_call.1} parent=51 // pred_region
          %s491 = sand.u32 %s33, 1
          %s492 = scalar_lea.sflag [#allocation8], %s491
          %s493 = sand.u32 %s95, 1
          %s494 = smul.addr %s493, 88
          %s495 = scalar_lea.vmem [#allocation9], %s494
          %497 = vsyncadd %s492, 0
          %s498 = smul.addr %s33, 8
          %s499 = scalar_lea.hbm %s2, %s498
          %s500 = sshll.u32 %s499, 4
          %s501 = int_to_ptr.hbm [resolvable:$true] %s500
          %s502 = sshll.u32 %s495, 4
          %s503 = int_to_ptr.vmem [resolvable:$true] %s502
          %508 = dma.hbm_to_vmem [thread:$0]  %s501, 1408, %s503, %s492, 256, 128, 8
        $region64: #{tpu_custom_call.1} parent=51 // pred_fallthru
          _
      $region52: #{tpu_custom_call.1} parent=5 // pred_fallthru
        _
      %p509 = scmp.le.s32.totalorder 1, %s33
      %p510 = scmp.lt.s32.totalorder %s33, 3
      %p511 = pnand %p509, %p510
      %p512 = pneg %p511
      // Predicated region
      $region65: #{tpu_custom_call.1} parent=5 // pred_check
        _
      $region66: #{tpu_custom_call.1} parent=5 // pred_check_branch
        %514 = sbr.rel (%p511) target = $region68
      $region67: #{tpu_custom_call.1} parent=5 // pred_region
        %s515 = ssub.s32 %s33, 1
        %s516 = sand.u32 %s46, 1
        %s517 = scalar_lea.sflag [#allocation4], %s516
        %s518 = sand.u32 %s46, 1
        %s519 = smul.addr %s518, 128
        %s520 = scalar_lea.vmem [#allocation3], %s519
        // Predicated region
        $region69: #{tpu_custom_call.1} parent=67 // pred_check
          %p521 = pneg %p59
        $region70: #{tpu_custom_call.1} parent=67 // pred_check_branch
          %523 = sbr.rel (%p521) target = $region72
        $region71: #{tpu_custom_call.1} parent=67 // pred_region
          %525 = dma.done %s517, 2048
        $region72: #{tpu_custom_call.1} parent=67 // pred_fallthru
          _
        %s526 = sand.u32 %s38, 1
        %s527 = scalar_lea.sflag [#allocation8], %s526
        %s528 = sand.u32 %s72, 1
        %s529 = smul.addr %s528, 352
        %s530 = scalar_lea.vmem [#allocation7], %s529
        // Predicated region
        $region73: #{tpu_custom_call.1} parent=67 // pred_check
          %p531 = pneg %p85
        $region74: #{tpu_custom_call.1} parent=67 // pred_check_branch
          %533 = sbr.rel (%p531) target = $region76
        $region75: #{tpu_custom_call.1} parent=67 // pred_region
          %535 = dma.done %s527, 5632
        $region76: #{tpu_custom_call.1} parent=67 // pred_fallthru
          _
        %s536 = sand.u32 %s38, 1
        %s537 = scalar_lea.sflag [#allocation8], %s536
        %s538 = sand.u32 %s98, 1
        %s539 = smul.addr %s538, 88
        %s540 = scalar_lea.vmem [#allocation9], %s539
        // Predicated region
        $region77: #{tpu_custom_call.1} parent=67 // pred_check
          %p541 = pneg %p111
        $region78: #{tpu_custom_call.1} parent=67 // pred_check_branch
          %543 = sbr.rel (%p541) target = $region80
        $region79: #{tpu_custom_call.1} parent=67 // pred_region
          %545 = dma.done %s537, 1408
        $region80: #{tpu_custom_call.1} parent=67 // pred_fallthru
          _
        // Predicated region
        $region81: #{tpu_custom_call.1} parent=67 // pred_check
          %p546 = pneg %p153
        $region82: #{tpu_custom_call.1} parent=67 // pred_check_branch
          %548 = sbr.rel (%p546) target = $region84
        $region83: #{tpu_custom_call.1} parent=67 // pred_region
          %550 = dma.done [#allocation6], 16
        $region84: #{tpu_custom_call.1} parent=67 // pred_fallthru
          _
        // Predicated region
        $region85: #{tpu_custom_call.1} parent=67 // pred_check
          %p551 = pneg %p174
        $region86: #{tpu_custom_call.1} parent=67 // pred_check_branch
          %553 = sbr.rel (%p551) target = $region88
        $region87: #{tpu_custom_call.1} parent=67 // pred_region
          %555 = dma.done [#allocation12], 64
        $region88: #{tpu_custom_call.1} parent=67 // pred_fallthru
          _
        // Predicated region
        $region89: #{tpu_custom_call.1} parent=67 // pred_check
          %p556 = pneg %p195
        $region90: #{tpu_custom_call.1} parent=67 // pred_check_branch
          %558 = sbr.rel (%p556) target = $region92
        $region91: #{tpu_custom_call.1} parent=67 // pred_region
          %560 = dma.done [#allocation12], 64
        $region92: #{tpu_custom_call.1} parent=67 // pred_fallthru
          _
        // Predicated region
        $region93: #{tpu_custom_call.1} parent=67 // pred_check
          %p561 = pneg %p216
        $region94: #{tpu_custom_call.1} parent=67 // pred_check_branch
          %563 = sbr.rel (%p561) target = $region96
        $region95: #{tpu_custom_call.1} parent=67 // pred_region
          %565 = dma.done [#allocation15], 64
        $region96: #{tpu_custom_call.1} parent=67 // pred_fallthru
          _
        // Predicated region
        $region97: #{tpu_custom_call.1} parent=67 // pred_check
          %p566 = pneg %p237
        $region98: #{tpu_custom_call.1} parent=67 // pred_check_branch
          %568 = sbr.rel (%p566) target = $region100
        $region99: #{tpu_custom_call.1} parent=67 // pred_region
          %570 = dma.done [#allocation15], 64
        $region100: #{tpu_custom_call.1} parent=67 // pred_fallthru
          _
        // Predicated region
        $region101: #{tpu_custom_call.1} parent=67 // pred_check
          %p571 = pneg %p258
        $region102: #{tpu_custom_call.1} parent=67 // pred_check_branch
          %573 = sbr.rel (%p571) target = $region104
        $region103: #{tpu_custom_call.1} parent=67 // pred_region
          %575 = dma.done [#allocation18], 128
        $region104: #{tpu_custom_call.1} parent=67 // pred_fallthru
          _
        // Predicated region
        $region105: #{tpu_custom_call.1} parent=67 // pred_check
          %p576 = pneg %p279
        $region106: #{tpu_custom_call.1} parent=67 // pred_check_branch
          %578 = sbr.rel (%p576) target = $region108
        $region107: #{tpu_custom_call.1} parent=67 // pred_region
          %580 = dma.done [#allocation20], 512
        $region108: #{tpu_custom_call.1} parent=67 // pred_fallthru
          _
        // Predicated region
        $region109: #{tpu_custom_call.1} parent=67 // pred_check
          %p581 = pneg %p300
        $region110: #{tpu_custom_call.1} parent=67 // pred_check_branch
          %583 = sbr.rel (%p581) target = $region112
        $region111: #{tpu_custom_call.1} parent=67 // pred_region
          %585 = dma.done [#allocation20], 512
        $region112: #{tpu_custom_call.1} parent=67 // pred_fallthru
          _
        %586 = sfence
        %s587 = sand.u32 %s46, 1
        %s588 = scalar_lea.sflag [#allocation4], %s587
        %s589 = sand.u32 %s46, 1
        %s590 = smul.addr %s589, 128
        %s591 = scalar_lea.vmem [#allocation3], %s590
        %p592 = pneg %p59
        %p593 = pneg %p56
        %s594 = sand.u32 %s38, 1
        %s595 = scalar_lea.sflag [#allocation8], %s594
        %s596 = sand.u32 %s72, 1
        %s597 = smul.addr %s596, 352
        %s598 = scalar_lea.vmem [#allocation7], %s597
        %p599 = pneg %p85
        %p600 = pneg %p82
        %s601 = sand.u32 %s38, 1
        %s602 = scalar_lea.sflag [#allocation8], %s601
        %s603 = sand.u32 %s98, 1
        %s604 = smul.addr %s603, 88
        %s605 = scalar_lea.vmem [#allocation9], %s604
        %p606 = pneg %p111
        %p607 = pneg %p108
        %p608 = pneg %p132
        %p609 = pneg %p129
        %p610 = pneg %p153
        %p611 = pneg %p150
        %p612 = pneg %p174
        %p613 = pneg %p171
        %p614 = pneg %p195
        %p615 = pneg %p192
        %p616 = pneg %p216
        %p617 = pneg %p213
        %p618 = pneg %p237
        %p619 = pneg %p234
        %p620 = pneg %p258
        %p621 = pneg %p255
        %p622 = pneg %p279
        %p623 = pneg %p276
        %p624 = pneg %p300
        %p625 = pneg %p297
        %p626 = pneg %p326
        %p627 = pneg %p323
        %s628 = sand.u32 %s313, 1
        %s629 = scalar_lea.sflag [#allocation5], %s628
        %s630 = sand.u32 %s313, 1
        %s631 = smul.addr %s630, 64
        %s632 = scalar_lea.vmem [#allocation22], %s631
        %v633 = vld [vmem:[%s520] sm:$0xff]
        %v634 = vld [vmem:[%s520 + $0x8] sm:$0xff]
        %v635 = vld [vmem:[%s520 + $0x10] sm:$0xff]
        %v636 = vld [vmem:[%s520 + $0x18] sm:$0xff]
        %s637 = sld [smem:[#allocation2]]
        %v638 = vstv %s637
        %v639 = vmul.f32 %v633, %v638
        %v640 = vmul.f32 %v634, %v638
        %v641 = vmul.f32 %v635, %v638
        %v642 = vmul.f32 %v636, %v638
        %v643 = vld [vmem:[#allocation11] sm:$0xf]
        %v644 = vld [vmem:[#allocation13] sm:$0xf]
        %v645 = vadd.f32 %v639, %v640
        %v646 = vadd.f32 %v645, %v641
        %v647 = vadd.f32 %v646, %v642
        %648 = vadd.xlane.f32.xlu0 %v647
        %v649 = vpop.xlane.xlu0 %648
        %v650 = vrcp.pop 512.0
        %v651 = vmul.f32 512.0, %v650
        %v652 = vsub.f32 1.0, %v651
        %v653 = vmul.f32 %v650, %v652
        %v654 = vadd.f32 %v650, %v653
        %vm655 = vweird.f32 %v650
        %v656 = vsel %vm655, %v650, %v654
        %v657 = vmul.f32 %v649, %v656
        %v658 = vsub.f32 %v639, %v657
        %v659 = vsub.f32 %v640, %v657
        %v660 = vsub.f32 %v641, %v657
        %v661 = vsub.f32 %v642, %v657
        %v662 = vmul.f32 %v658, %v658
        %v663 = vmul.f32 %v659, %v659
        %v664 = vmul.f32 %v660, %v660
        %v665 = vmul.f32 %v661, %v661
        %v666 = vadd.f32 %v662, %v663
        %v667 = vadd.f32 %v666, %v664
        %v668 = vadd.f32 %v667, %v665
        %669 = vadd.xlane.f32.xlu0 %v668
        %v670 = vpop.xlane.xlu0 %669
        %v671 = vmul.f32 %v670, %v656
        %v672 = vadd.f32 %v671, 1e-05
        %v673 = vrsqrt.pop %v672
        %v674 = vmul.f32 %v673, %v672
        %v675 = vmul.f32 %v674, %v673
        %v676 = vmul.f32 0.5, %v675
        %v677 = vsub.f32 1.5, %v676
        %v678 = vmul.f32 %v673, %v677
        %vm679 = vweird.f32 %v672
        %vm680 = vweird.f32 %v673
        %vm681 = vmor %vm679, %vm680
        %v682 = vsel %vm681, %v673, %v678
        %v683 = vmul.f32 %v658, %v682
        %v684 = vmul.f32 %v659, %v682
        %v685 = vmul.f32 %v660, %v682
        %v686 = vmul.f32 %v661, %v682
        %v688 = vperm.slane %v643, 0
        %v689 = vperm.slane %v643, 1
        %v690 = vperm.slane %v643, 2
        %v691 = vperm.slane %v643, 3
        %v696 = vmul.f32 %v683, %v688
        %v697 = vmul.f32 %v684, %v689
        %v698 = vmul.f32 %v685, %v690
        %v699 = vmul.f32 %v686, %v691
        %v701 = vperm.slane %v644, 0
        %v702 = vperm.slane %v644, 1
        %v703 = vperm.slane %v644, 2
        %v704 = vperm.slane %v644, 3
        %v709 = vadd.f32 %v696, %v701
        %v710 = vadd.f32 %v697, %v702
        %v711 = vadd.f32 %v698, %v703
        %v712 = vadd.f32 %v699, %v704
        %v713 = vxor.u32 %v709, 2147483648
        %v714 = vxor.u32 %v710, 2147483648
        %v715 = vxor.u32 %v711, 2147483648
        %v716 = vxor.u32 %v712, 2147483648
        %v717 = vmul.f32 %v713, 1.442695
        %v718 = vpow.pop %v717
        %v719 = vmul.f32 %v714, 1.442695
        %v720 = vpow.pop %v719
        %v721 = vmul.f32 %v715, 1.442695
        %v722 = vpow.pop %v721
        %v723 = vmul.f32 %v716, 1.442695
        %v724 = vpow.pop %v723
        %v725 = vadd.f32 %v718, 1.0
        %v726 = vadd.f32 %v720, 1.0
        %v727 = vadd.f32 %v722, 1.0
        %v728 = vadd.f32 %v724, 1.0
        %v729 = vrcp.pop %v725
        %v730 = vmul.f32 %v725, %v729
        %v731 = vsub.f32 1.0, %v730
        %v732 = vmul.f32 %v729, %v731
        %v733 = vadd.f32 %v729, %v732
        %vm734 = vweird.f32 %v725
        %vm735 = vweird.f32 %v729
        %vm736 = vmor %vm734, %vm735
        %v737 = vsel %vm736, %v729, %v733
        %v738 = vand.u32 2147483647, %v725
        %vm739 = vcmp.eq.f32.partialorder %v738, 8.507059e+37
        %v740 = vand.u32 %v725, 2147483648
        %v741 = vor.u32 1.1754944e-38, %v740
        %v742 = vsel %vm739, %v741, %v737
        %v743 = vmul.f32 1.0, %v742
        %v744 = vrcp.pop %v726
        %v745 = vmul.f32 %v726, %v744
        %v746 = vsub.f32 1.0, %v745
        %v747 = vmul.f32 %v744, %v746
        %v748 = vadd.f32 %v744, %v747
        %vm749 = vweird.f32 %v726
        %vm750 = vweird.f32 %v744
        %vm751 = vmor %vm749, %vm750
        %v752 = vsel %vm751, %v744, %v748
        %v753 = vand.u32 2147483647, %v726
        %vm754 = vcmp.eq.f32.partialorder %v753, 8.507059e+37
        %v755 = vand.u32 %v726, 2147483648
        %v756 = vor.u32 1.1754944e-38, %v755
        %v757 = vsel %vm754, %v756, %v752
        %v758 = vmul.f32 1.0, %v757
        %v759 = vrcp.pop %v727
        %v760 = vmul.f32 %v727, %v759
        %v761 = vsub.f32 1.0, %v760
        %v762 = vmul.f32 %v759, %v761
        %v763 = vadd.f32 %v759, %v762
        %vm764 = vweird.f32 %v727
        %vm765 = vweird.f32 %v759
        %vm766 = vmor %vm764, %vm765
        %v767 = vsel %vm766, %v759, %v763
        %v768 = vand.u32 2147483647, %v727
        %vm769 = vcmp.eq.f32.partialorder %v768, 8.507059e+37
        %v770 = vand.u32 %v727, 2147483648
        %v771 = vor.u32 1.1754944e-38, %v770
        %v772 = vsel %vm769, %v771, %v767
        %v773 = vmul.f32 1.0, %v772
        %v774 = vrcp.pop %v728
        %v775 = vmul.f32 %v728, %v774
        %v776 = vsub.f32 1.0, %v775
        %v777 = vmul.f32 %v774, %v776
        %v778 = vadd.f32 %v774, %v777
        %vm779 = vweird.f32 %v728
        %vm780 = vweird.f32 %v774
        %vm781 = vmor %vm779, %vm780
        %v782 = vsel %vm781, %v774, %v778
        %v783 = vand.u32 2147483647, %v728
        %vm784 = vcmp.eq.f32.partialorder %v783, 8.507059e+37
        %v785 = vand.u32 %v728, 2147483648
        %v786 = vor.u32 1.1754944e-38, %v785
        %v787 = vsel %vm784, %v786, %v782
        %v788 = vmul.f32 1.0, %v787
        %s789 = sld [smem:[#allocation10]]
        %v790 = vstv %s789
        %v791 = vmul.f32 %v790, %v633
        %v792 = vmul.f32 %v790, %v634
        %v793 = vmul.f32 %v790, %v635
        %v794 = vmul.f32 %v790, %v636
        %s795 = sld [smem:[#allocation10 + $0x1]]
        %s796 = scalar_lea.vmem %s520, 32 [#allocation3]
        %v797 = vld [vmem:[%s796] sm:$0xff]
        %v798 = vld [vmem:[%s796 + $0x8] sm:$0xff]
        %v799 = vld [vmem:[%s796 + $0x10] sm:$0xff]
        %v800 = vld [vmem:[%s796 + $0x18] sm:$0xff]
        %v801 = vstv %s795
        %v802 = vmul.f32 %v801, %v797
        %v803 = vmul.f32 %v801, %v798
        %v804 = vmul.f32 %v801, %v799
        %v805 = vmul.f32 %v801, %v800
        %v806 = vadd.f32 %v791, %v802
        %v807 = vadd.f32 %v792, %v803
        %v808 = vadd.f32 %v793, %v804
        %v809 = vadd.f32 %v794, %v805
        %s810 = sld [smem:[#allocation10 + $0x2]]
        %s811 = scalar_lea.vmem %s520, 64 [#allocation3]
        %v812 = vld [vmem:[%s811] sm:$0xff]
        %v813 = vld [vmem:[%s811 + $0x8] sm:$0xff]
        %v814 = vld [vmem:[%s811 + $0x10] sm:$0xff]
        %v815 = vld [vmem:[%s811 + $0x18] sm:$0xff]
        %v816 = vstv %s810
        %v817 = vmul.f32 %v816, %v812
        %v818 = vmul.f32 %v816, %v813
        %v819 = vmul.f32 %v816, %v814
        %v820 = vmul.f32 %v816, %v815
        %v821 = vadd.f32 %v806, %v817
        %v822 = vadd.f32 %v807, %v818
        %v823 = vadd.f32 %v808, %v819
        %v824 = vadd.f32 %v809, %v820
        %s825 = sld [smem:[#allocation10 + $0x3]]
        %s826 = scalar_lea.vmem %s520, 96 [#allocation3]
        %v827 = vld [vmem:[%s826] sm:$0xff]
        %v828 = vld [vmem:[%s826 + $0x8] sm:$0xff]
        %v829 = vld [vmem:[%s826 + $0x10] sm:$0xff]
        %v830 = vld [vmem:[%s826 + $0x18] sm:$0xff]
        %v831 = vstv %s825
        %v832 = vmul.f32 %v831, %v827
        %v833 = vmul.f32 %v831, %v828
        %v834 = vmul.f32 %v831, %v829
        %v835 = vmul.f32 %v831, %v830
        %v836 = vadd.f32 %v821, %v832
        %v837 = vadd.f32 %v822, %v833
        %v838 = vadd.f32 %v823, %v834
        %v839 = vadd.f32 %v824, %v835
        %v840 = vld [vmem:[#allocation14] sm:$0xf]
        %v841 = vld [vmem:[#allocation16] sm:$0xf]
        %v842 = vadd.f32 %v836, %v837
        %v843 = vadd.f32 %v842, %v838
        %v844 = vadd.f32 %v843, %v839
        %845 = vadd.xlane.f32.xlu0 %v844
        %v846 = vpop.xlane.xlu0 %845
        %v847 = vmul.f32 %v846, %v656
        %v848 = vsub.f32 %v836, %v847
        %v849 = vsub.f32 %v837, %v847
        %v850 = vsub.f32 %v838, %v847
        %v851 = vsub.f32 %v839, %v847
        %v852 = vmul.f32 %v848, %v848
        %v853 = vmul.f32 %v849, %v849
        %v854 = vmul.f32 %v850, %v850
        %v855 = vmul.f32 %v851, %v851
        %v856 = vadd.f32 %v852, %v853
        %v857 = vadd.f32 %v856, %v854
        %v858 = vadd.f32 %v857, %v855
        %859 = vadd.xlane.f32.xlu0 %v858
        %v860 = vpop.xlane.xlu0 %859
        %v861 = vmul.f32 %v860, %v656
        %v862 = vadd.f32 %v861, 1e-05
        %v863 = vrsqrt.pop %v862
        %v864 = vmul.f32 %v863, %v862
        %v865 = vmul.f32 %v864, %v863
        %v866 = vmul.f32 0.5, %v865
        %v867 = vsub.f32 1.5, %v866
        %v868 = vmul.f32 %v863, %v867
        %vm869 = vweird.f32 %v862
        %vm870 = vweird.f32 %v863
        %vm871 = vmor %vm869, %vm870
        %v872 = vsel %vm871, %v863, %v868
        %v873 = vmul.f32 %v848, %v872
        %v874 = vmul.f32 %v849, %v872
        %v875 = vmul.f32 %v850, %v872
        %v876 = vmul.f32 %v851, %v872
        %v878 = vperm.slane %v840, 0
        %v879 = vperm.slane %v840, 1
        %v880 = vperm.slane %v840, 2
        %v881 = vperm.slane %v840, 3
        %v886 = vmul.f32 %v873, %v878
        %v887 = vmul.f32 %v874, %v879
        %v888 = vmul.f32 %v875, %v880
        %v889 = vmul.f32 %v876, %v881
        %v891 = vperm.slane %v841, 0
        %v892 = vperm.slane %v841, 1
        %v893 = vperm.slane %v841, 2
        %v894 = vperm.slane %v841, 3
        %v899 = vadd.f32 %v886, %v891
        %v900 = vadd.f32 %v887, %v892
        %v901 = vadd.f32 %v888, %v893
        %v902 = vadd.f32 %v889, %v894
        %v903 = vxor.u32 %v899, 2147483648
        %v904 = vxor.u32 %v900, 2147483648
        %v905 = vxor.u32 %v901, 2147483648
        %v906 = vxor.u32 %v902, 2147483648
        %v907 = vmul.f32 %v903, 1.442695
        %v908 = vpow.pop %v907
        %v909 = vmul.f32 %v904, 1.442695
        %v910 = vpow.pop %v909
        %v911 = vmul.f32 %v905, 1.442695
        %v912 = vpow.pop %v911
        %v913 = vmul.f32 %v906, 1.442695
        %v914 = vpow.pop %v913
        %v915 = vadd.f32 %v908, 1.0
        %v916 = vadd.f32 %v910, 1.0
        %v917 = vadd.f32 %v912, 1.0
        %v918 = vadd.f32 %v914, 1.0
        %v919 = vrcp.pop %v915
        %v920 = vmul.f32 %v915, %v919
        %v921 = vsub.f32 1.0, %v920
        %v922 = vmul.f32 %v919, %v921
        %v923 = vadd.f32 %v919, %v922
        %vm924 = vweird.f32 %v915
        %vm925 = vweird.f32 %v919
        %vm926 = vmor %vm924, %vm925
        %v927 = vsel %vm926, %v919, %v923
        %v928 = vand.u32 2147483647, %v915
        %vm929 = vcmp.eq.f32.partialorder %v928, 8.507059e+37
        %v930 = vand.u32 %v915, 2147483648
        %v931 = vor.u32 1.1754944e-38, %v930
        %v932 = vsel %vm929, %v931, %v927
        %v933 = vmul.f32 1.0, %v932
        %v934 = vrcp.pop %v916
        %v935 = vmul.f32 %v916, %v934
        %v936 = vsub.f32 1.0, %v935
        %v937 = vmul.f32 %v934, %v936
        %v938 = vadd.f32 %v934, %v937
        %vm939 = vweird.f32 %v916
        %vm940 = vweird.f32 %v934
        %vm941 = vmor %vm939, %vm940
        %v942 = vsel %vm941, %v934, %v938
        %v943 = vand.u32 2147483647, %v916
        %vm944 = vcmp.eq.f32.partialorder %v943, 8.507059e+37
        %v945 = vand.u32 %v916, 2147483648
        %v946 = vor.u32 1.1754944e-38, %v945
        %v947 = vsel %vm944, %v946, %v942
        %v948 = vmul.f32 1.0, %v947
        %v949 = vrcp.pop %v917
        %v950 = vmul.f32 %v917, %v949
        %v951 = vsub.f32 1.0, %v950
        %v952 = vmul.f32 %v949, %v951
        %v953 = vadd.f32 %v949, %v952
        %vm954 = vweird.f32 %v917
        %vm955 = vweird.f32 %v949
        %vm956 = vmor %vm954, %vm955
        %v957 = vsel %vm956, %v949, %v953
        %v958 = vand.u32 2147483647, %v917
        %vm959 = vcmp.eq.f32.partialorder %v958, 8.507059e+37
        %v960 = vand.u32 %v917, 2147483648
        %v961 = vor.u32 1.1754944e-38, %v960
        %v962 = vsel %vm959, %v961, %v957
        %v963 = vmul.f32 1.0, %v962
        %v964 = vrcp.pop %v918
        %v965 = vmul.f32 %v918, %v964
        %v966 = vsub.f32 1.0, %v965
        %v967 = vmul.f32 %v964, %v966
        %v968 = vadd.f32 %v964, %v967
        %vm969 = vweird.f32 %v918
        %vm970 = vweird.f32 %v964
        %vm971 = vmor %vm969, %vm970
        %v972 = vsel %vm971, %v964, %v968
        %v973 = vand.u32 2147483647, %v918
        %vm974 = vcmp.eq.f32.partialorder %v973, 8.507059e+37
        %v975 = vand.u32 %v918, 2147483648
        %v976 = vor.u32 1.1754944e-38, %v975
        %v977 = vsel %vm974, %v976, %v972
        %v978 = vmul.f32 1.0, %v977
        %v979 = vmul.f32 %v743, %v933
        %v980 = vmul.f32 %v758, %v948
        %v981 = vmul.f32 %v773, %v963
        %v982 = vmul.f32 %v788, %v978
        %v983 = vsub.f32 1.0, %v979
        %v984 = vsub.f32 1.0, %v980
        %v985 = vsub.f32 1.0, %v981
        %v986 = vsub.f32 1.0, %v982
        %v987 = vld [vmem:[%s540] sm:$0xff]
        %v988 = vld [vmem:[%s530] sm:$0xff]
        %v989 = vld [vmem:[%s530 + $0x8] sm:$0xff]
        %v990 = vld [vmem:[%s530 + $0x10] sm:$0xff]
        %v991 = vld [vmem:[%s530 + $0x18] sm:$0xff]
        %v992 = vmul.f32 %v979, %v988
        %v993 = vmul.f32 %v980, %v989
        %v994 = vmul.f32 %v981, %v990
        %v995 = vmul.f32 %v982, %v991
        %v996 = vmul.f32 %v983, %v987
        %v997 = vmul.f32 %v984, %v987
        %v998 = vmul.f32 %v985, %v987
        %v999 = vmul.f32 %v986, %v987
        %v1000 = vadd.f32 %v992, %v996
        %v1001 = vadd.f32 %v993, %v997
        %v1002 = vadd.f32 %v994, %v998
        %v1003 = vadd.f32 %v995, %v999
        %s1004 = sld [smem:[#allocation17]]
        %v1005 = vstv %s1004
        %v1006 = vmul.f32 %v1005, %v1000
        %v1007 = vmul.f32 %v1005, %v1001
        %v1008 = vmul.f32 %v1005, %v1002
        %v1009 = vmul.f32 %v1005, %v1003
        %s1010 = sld [smem:[#allocation17 + $0x80]]
        %v1011 = vstv %s1010
        %v1012 = vmul.f32 %v1011, %v1000
        %v1013 = vmul.f32 %v1011, %v1001
        %v1014 = vmul.f32 %v1011, %v1002
        %v1015 = vmul.f32 %v1011, %v1003
        %s1016 = sld [smem:[#allocation17 + $0x100]]
        %v1017 = vstv %s1016
        %v1018 = vmul.f32 %v1017, %v1000
        %v1019 = vmul.f32 %v1017, %v1001
        %v1020 = vmul.f32 %v1017, %v1002
        %v1021 = vmul.f32 %v1017, %v1003
        %s1022 = sld [smem:[#allocation17 + $0x180]]
        %v1023 = vstv %s1022
        %v1024 = vmul.f32 %v1023, %v1000
        %v1025 = vmul.f32 %v1023, %v1001
        %v1026 = vmul.f32 %v1023, %v1002
        %v1027 = vmul.f32 %v1023, %v1003
        %s1028 = sld [smem:[#allocation17 + $0x200]]
        %v1029 = vstv %s1028
        %v1030 = vmul.f32 %v1029, %v1000
        %v1031 = vmul.f32 %v1029, %v1001
        %v1032 = vmul.f32 %v1029, %v1002
        %v1033 = vmul.f32 %v1029, %v1003
        %s1034 = sld [smem:[#allocation17 + $0x280]]
        %v1035 = vstv %s1034
        %v1036 = vmul.f32 %v1035, %v1000
        %v1037 = vmul.f32 %v1035, %v1001
        %v1038 = vmul.f32 %v1035, %v1002
        %v1039 = vmul.f32 %v1035, %v1003
        %s1040 = sld [smem:[#allocation17 + $0x300]]
        %v1041 = vstv %s1040
        %v1042 = vmul.f32 %v1041, %v1000
        %v1043 = vmul.f32 %v1041, %v1001
        %v1044 = vmul.f32 %v1041, %v1002
        %v1045 = vmul.f32 %v1041, %v1003
        %s1046 = sld [smem:[#allocation17 + $0x380]]
        %v1047 = vstv %s1046
        %v1048 = vmul.f32 %v1047, %v1000
        %v1049 = vmul.f32 %v1047, %v1001
        %v1050 = vmul.f32 %v1047, %v1002
        %v1051 = vmul.f32 %v1047, %v1003
        %s1052 = scalar_lea.vmem %s540, 8 [#allocation9]
        %v1053 = vld [vmem:[%s1052] sm:$0xff]
        %s1054 = scalar_lea.vmem %s530, 32 [#allocation7]
        %v1055 = vld [vmem:[%s1054] sm:$0xff]
        %v1056 = vld [vmem:[%s1054 + $0x8] sm:$0xff]
        %v1057 = vld [vmem:[%s1054 + $0x10] sm:$0xff]
        %v1058 = vld [vmem:[%s1054 + $0x18] sm:$0xff]
        %v1059 = vmul.f32 %v979, %v1055
        %v1060 = vmul.f32 %v980, %v1056
        %v1061 = vmul.f32 %v981, %v1057
        %v1062 = vmul.f32 %v982, %v1058
        %v1063 = vmul.f32 %v983, %v1053
        %v1064 = vmul.f32 %v984, %v1053
        %v1065 = vmul.f32 %v985, %v1053
        %v1066 = vmul.f32 %v986, %v1053
        %v1067 = vadd.f32 %v1059, %v1063
        %v1068 = vadd.f32 %v1060, %v1064
        %v1069 = vadd.f32 %v1061, %v1065
        %v1070 = vadd.f32 %v1062, %v1066
        %s1071 = sld [smem:[#allocation17 + $0x1]]
        %v1072 = vstv %s1071
        %v1073 = vmul.f32 %v1072, %v1067
        %v1074 = vmul.f32 %v1072, %v1068
        %v1075 = vmul.f32 %v1072, %v1069
        %v1076 = vmul.f32 %v1072, %v1070
        %v1077 = vadd.f32 %v1006, %v1073
        %v1078 = vadd.f32 %v1007, %v1074
        %v1079 = vadd.f32 %v1008, %v1075
        %v1080 = vadd.f32 %v1009, %v1076
        %s1081 = sld [smem:[#allocation17 + $0x81]]
        %v1082 = vstv %s1081
        %v1083 = vmul.f32 %v1082, %v1067
        %v1084 = vmul.f32 %v1082, %v1068
        %v1085 = vmul.f32 %v1082, %v1069
        %v1086 = vmul.f32 %v1082, %v1070
        %v1087 = vadd.f32 %v1012, %v1083
        %v1088 = vadd.f32 %v1013, %v1084
        %v1089 = vadd.f32 %v1014, %v1085
        %v1090 = vadd.f32 %v1015, %v1086
        %s1091 = sld [smem:[#allocation17 + $0x101]]
        %v1092 = vstv %s1091
        %v1093 = vmul.f32 %v1092, %v1067
        %v1094 = vmul.f32 %v1092, %v1068
        %v1095 = vmul.f32 %v1092, %v1069
        %v1096 = vmul.f32 %v1092, %v1070
        %v1097 = vadd.f32 %v1018, %v1093
        %v1098 = vadd.f32 %v1019, %v1094
        %v1099 = vadd.f32 %v1020, %v1095
        %v1100 = vadd.f32 %v1021, %v1096
        %s1101 = sld [smem:[#allocation17 + $0x181]]
        %v1102 = vstv %s1101
        %v1103 = vmul.f32 %v1102, %v1067
        %v1104 = vmul.f32 %v1102, %v1068
        %v1105 = vmul.f32 %v1102, %v1069
        %v1106 = vmul.f32 %v1102, %v1070
        %v1107 = vadd.f32 %v1024, %v1103
        %v1108 = vadd.f32 %v1025, %v1104
        %v1109 = vadd.f32 %v1026, %v1105
        %v1110 = vadd.f32 %v1027, %v1106
        %s1111 = sld [smem:[#allocation17 + $0x201]]
        %v1112 = vstv %s1111
        %v1113 = vmul.f32 %v1112, %v1067
        %v1114 = vmul.f32 %v1112, %v1068
        %v1115 = vmul.f32 %v1112, %v1069
        %v1116 = vmul.f32 %v1112, %v1070
        %v1117 = vadd.f32 %v1030, %v1113
        %v1118 = vadd.f32 %v1031, %v1114
        %v1119 = vadd.f32 %v1032, %v1115
        %v1120 = vadd.f32 %v1033, %v1116
        %s1121 = sld [smem:[#allocation17 + $0x281]]
        %v1122 = vstv %s1121
        %v1123 = vmul.f32 %v1122, %v1067
        %v1124 = vmul.f32 %v1122, %v1068
        %v1125 = vmul.f32 %v1122, %v1069
        %v1126 = vmul.f32 %v1122, %v1070
        %v1127 = vadd.f32 %v1036, %v1123
        %v1128 = vadd.f32 %v1037, %v1124
        %v1129 = vadd.f32 %v1038, %v1125
        %v1130 = vadd.f32 %v1039, %v1126
        %s1131 = sld [smem:[#allocation17 + $0x301]]
        %v1132 = vstv %s1131
        %v1133 = vmul.f32 %v1132, %v1067
        %v1134 = vmul.f32 %v1132, %v1068
        %v1135 = vmul.f32 %v1132, %v1069
        %v1136 = vmul.f32 %v1132, %v1070
        %v1137 = vadd.f32 %v1042, %v1133
        %v1138 = vadd.f32 %v1043, %v1134
        %v1139 = vadd.f32 %v1044, %v1135
        %v1140 = vadd.f32 %v1045, %v1136
        %s1141 = sld [smem:[#allocation17 + $0x381]]
        %v1142 = vstv %s1141
        %v1143 = vmul.f32 %v1142, %v1067
        %v1144 = vmul.f32 %v1142, %v1068
        %v1145 = vmul.f32 %v1142, %v1069
        %v1146 = vmul.f32 %v1142, %v1070
        %v1147 = vadd.f32 %v1048, %v1143
        %v1148 = vadd.f32 %v1049, %v1144
        %v1149 = vadd.f32 %v1050, %v1145
        %v1150 = vadd.f32 %v1051, %v1146
        %s1151 = scalar_lea.vmem %s540, 16 [#allocation9]
        %v1152 = vld [vmem:[%s1151] sm:$0xff]
        %s1153 = scalar_lea.vmem %s530, 64 [#allocation7]
        %v1154 = vld [vmem:[%s1153] sm:$0xff]
        %v1155 = vld [vmem:[%s1153 + $0x8] sm:$0xff]
        %v1156 = vld [vmem:[%s1153 + $0x10] sm:$0xff]
        %v1157 = vld [vmem:[%s1153 + $0x18] sm:$0xff]
        %v1158 = vmul.f32 %v979, %v1154
        %v1159 = vmul.f32 %v980, %v1155
        %v1160 = vmul.f32 %v981, %v1156
        %v1161 = vmul.f32 %v982, %v1157
        %v1162 = vmul.f32 %v983, %v1152
        %v1163 = vmul.f32 %v984, %v1152
        %v1164 = vmul.f32 %v985, %v1152
        %v1165 = vmul.f32 %v986, %v1152
        %v1166 = vadd.f32 %v1158, %v1162
        %v1167 = vadd.f32 %v1159, %v1163
        %v1168 = vadd.f32 %v1160, %v1164
        %v1169 = vadd.f32 %v1161, %v1165
        %s1170 = sld [smem:[#allocation17 + $0x2]]
        %v1171 = vstv %s1170
        %v1172 = vmul.f32 %v1171, %v1166
        %v1173 = vmul.f32 %v1171, %v1167
        %v1174 = vmul.f32 %v1171, %v1168
        %v1175 = vmul.f32 %v1171, %v1169
        %v1176 = vadd.f32 %v1077, %v1172
        %v1177 = vadd.f32 %v1078, %v1173
        %v1178 = vadd.f32 %v1079, %v1174
        %v1179 = vadd.f32 %v1080, %v1175
        %s1180 = sld [smem:[#allocation17 + $0x82]]
        %v1181 = vstv %s1180
        %v1182 = vmul.f32 %v1181, %v1166
        %v1183 = vmul.f32 %v1181, %v1167
        %v1184 = vmul.f32 %v1181, %v1168
        %v1185 = vmul.f32 %v1181, %v1169
        %v1186 = vadd.f32 %v1087, %v1182
        %v1187 = vadd.f32 %v1088, %v1183
        %v1188 = vadd.f32 %v1089, %v1184
        %v1189 = vadd.f32 %v1090, %v1185
        %s1190 = sld [smem:[#allocation17 + $0x102]]
        %v1191 = vstv %s1190
        %v1192 = vmul.f32 %v1191, %v1166
        %v1193 = vmul.f32 %v1191, %v1167
        %v1194 = vmul.f32 %v1191, %v1168
        %v1195 = vmul.f32 %v1191, %v1169
        %v1196 = vadd.f32 %v1097, %v1192
        %v1197 = vadd.f32 %v1098, %v1193
        %v1198 = vadd.f32 %v1099, %v1194
        %v1199 = vadd.f32 %v1100, %v1195
        %s1200 = sld [smem:[#allocation17 + $0x182]]
        %v1201 = vstv %s1200
        %v1202 = vmul.f32 %v1201, %v1166
        %v1203 = vmul.f32 %v1201, %v1167
        %v1204 = vmul.f32 %v1201, %v1168
        %v1205 = vmul.f32 %v1201, %v1169
        %v1206 = vadd.f32 %v1107, %v1202
        %v1207 = vadd.f32 %v1108, %v1203
        %v1208 = vadd.f32 %v1109, %v1204
        %v1209 = vadd.f32 %v1110, %v1205
        %s1210 = sld [smem:[#allocation17 + $0x202]]
        %v1211 = vstv %s1210
        %v1212 = vmul.f32 %v1211, %v1166
        %v1213 = vmul.f32 %v1211, %v1167
        %v1214 = vmul.f32 %v1211, %v1168
        %v1215 = vmul.f32 %v1211, %v1169
        %v1216 = vadd.f32 %v1117, %v1212
        %v1217 = vadd.f32 %v1118, %v1213
        %v1218 = vadd.f32 %v1119, %v1214
        %v1219 = vadd.f32 %v1120, %v1215
        %s1220 = sld [smem:[#allocation17 + $0x282]]
        %v1221 = vstv %s1220
        %v1222 = vmul.f32 %v1221, %v1166
        %v1223 = vmul.f32 %v1221, %v1167
        %v1224 = vmul.f32 %v1221, %v1168
        %v1225 = vmul.f32 %v1221, %v1169
        %v1226 = vadd.f32 %v1127, %v1222
        %v1227 = vadd.f32 %v1128, %v1223
        %v1228 = vadd.f32 %v1129, %v1224
        %v1229 = vadd.f32 %v1130, %v1225
        %s1230 = sld [smem:[#allocation17 + $0x302]]
        %v1231 = vstv %s1230
        %v1232 = vmul.f32 %v1231, %v1166
        %v1233 = vmul.f32 %v1231, %v1167
        %v1234 = vmul.f32 %v1231, %v1168
        %v1235 = vmul.f32 %v1231, %v1169
        %v1236 = vadd.f32 %v1137, %v1232
        %v1237 = vadd.f32 %v1138, %v1233
        %v1238 = vadd.f32 %v1139, %v1234
        %v1239 = vadd.f32 %v1140, %v1235
        %s1240 = sld [smem:[#allocation17 + $0x382]]
        %v1241 = vstv %s1240
        %v1242 = vmul.f32 %v1241, %v1166
        %v1243 = vmul.f32 %v1241, %v1167
        %v1244 = vmul.f32 %v1241, %v1168
        %v1245 = vmul.f32 %v1241, %v1169
        %v1246 = vadd.f32 %v1147, %v1242
        %v1247 = vadd.f32 %v1148, %v1243
        %v1248 = vadd.f32 %v1149, %v1244
        %v1249 = vadd.f32 %v1150, %v1245
        %s1250 = scalar_lea.vmem %s540, 24 [#allocation9]
        %v1251 = vld [vmem:[%s1250] sm:$0xff]
        %s1252 = scalar_lea.vmem %s530, 96 [#allocation7]
        %v1253 = vld [vmem:[%s1252] sm:$0xff]
        %v1254 = vld [vmem:[%s1252 + $0x8] sm:$0xff]
        %v1255 = vld [vmem:[%s1252 + $0x10] sm:$0xff]
        %v1256 = vld [vmem:[%s1252 + $0x18] sm:$0xff]
        %v1257 = vmul.f32 %v979, %v1253
        %v1258 = vmul.f32 %v980, %v1254
        %v1259 = vmul.f32 %v981, %v1255
        %v1260 = vmul.f32 %v982, %v1256
        %v1261 = vmul.f32 %v983, %v1251
        %v1262 = vmul.f32 %v984, %v1251
        %v1263 = vmul.f32 %v985, %v1251
        %v1264 = vmul.f32 %v986, %v1251
        %v1265 = vadd.f32 %v1257, %v1261
        %v1266 = vadd.f32 %v1258, %v1262
        %v1267 = vadd.f32 %v1259, %v1263
        %v1268 = vadd.f32 %v1260, %v1264
        %s1269 = sld [smem:[#allocation17 + $0x3]]
        %v1270 = vstv %s1269
        %v1271 = vmul.f32 %v1270, %v1265
        %v1272 = vmul.f32 %v1270, %v1266
        %v1273 = vmul.f32 %v1270, %v1267
        %v1274 = vmul.f32 %v1270, %v1268
        %v1275 = vadd.f32 %v1176, %v1271
        %v1276 = vadd.f32 %v1177, %v1272
        %v1277 = vadd.f32 %v1178, %v1273
        %v1278 = vadd.f32 %v1179, %v1274
        %s1279 = sld [smem:[#allocation17 + $0x83]]
        %v1280 = vstv %s1279
        %v1281 = vmul.f32 %v1280, %v1265
        %v1282 = vmul.f32 %v1280, %v1266
        %v1283 = vmul.f32 %v1280, %v1267
        %v1284 = vmul.f32 %v1280, %v1268
        %v1285 = vadd.f32 %v1186, %v1281
        %v1286 = vadd.f32 %v1187, %v1282
        %v1287 = vadd.f32 %v1188, %v1283
        %v1288 = vadd.f32 %v1189, %v1284
        %s1289 = sld [smem:[#allocation17 + $0x103]]
        %v1290 = vstv %s1289
        %v1291 = vmul.f32 %v1290, %v1265
        %v1292 = vmul.f32 %v1290, %v1266
        %v1293 = vmul.f32 %v1290, %v1267
        %v1294 = vmul.f32 %v1290, %v1268
        %v1295 = vadd.f32 %v1196, %v1291
        %v1296 = vadd.f32 %v1197, %v1292
        %v1297 = vadd.f32 %v1198, %v1293
        %v1298 = vadd.f32 %v1199, %v1294
        %s1299 = sld [smem:[#allocation17 + $0x183]]
        %v1300 = vstv %s1299
        %v1301 = vmul.f32 %v1300, %v1265
        %v1302 = vmul.f32 %v1300, %v1266
        %v1303 = vmul.f32 %v1300, %v1267
        %v1304 = vmul.f32 %v1300, %v1268
        %v1305 = vadd.f32 %v1206, %v1301
        %v1306 = vadd.f32 %v1207, %v1302
        %v1307 = vadd.f32 %v1208, %v1303
        %v1308 = vadd.f32 %v1209, %v1304
        %s1309 = sld [smem:[#allocation17 + $0x203]]
        %v1310 = vstv %s1309
        %v1311 = vmul.f32 %v1310, %v1265
        %v1312 = vmul.f32 %v1310, %v1266
        %v1313 = vmul.f32 %v1310, %v1267
        %v1314 = vmul.f32 %v1310, %v1268
        %v1315 = vadd.f32 %v1216, %v1311
        %v1316 = vadd.f32 %v1217, %v1312
        %v1317 = vadd.f32 %v1218, %v1313
        %v1318 = vadd.f32 %v1219, %v1314
        %s1319 = sld [smem:[#allocation17 + $0x283]]
        %v1320 = vstv %s1319
        %v1321 = vmul.f32 %v1320, %v1265
        %v1322 = vmul.f32 %v1320, %v1266
        %v1323 = vmul.f32 %v1320, %v1267
        %v1324 = vmul.f32 %v1320, %v1268
        %v1325 = vadd.f32 %v1226, %v1321
        %v1326 = vadd.f32 %v1227, %v1322
        %v1327 = vadd.f32 %v1228, %v1323
        %v1328 = vadd.f32 %v1229, %v1324
        %s1329 = sld [smem:[#allocation17 + $0x303]]
        %v1330 = vstv %s1329
        %v1331 = vmul.f32 %v1330, %v1265
        %v1332 = vmul.f32 %v1330, %v1266
        %v1333 = vmul.f32 %v1330, %v1267
        %v1334 = vmul.f32 %v1330, %v1268
        %v1335 = vadd.f32 %v1236, %v1331
        %v1336 = vadd.f32 %v1237, %v1332
        %v1337 = vadd.f32 %v1238, %v1333
        %v1338 = vadd.f32 %v1239, %v1334
        %s1339 = sld [smem:[#allocation17 + $0x383]]
        %v1340 = vstv %s1339
        %v1341 = vmul.f32 %v1340, %v1265
        %v1342 = vmul.f32 %v1340, %v1266
        %v1343 = vmul.f32 %v1340, %v1267
        %v1344 = vmul.f32 %v1340, %v1268
        %v1345 = vadd.f32 %v1246, %v1341
        %v1346 = vadd.f32 %v1247, %v1342
        %v1347 = vadd.f32 %v1248, %v1343
        %v1348 = vadd.f32 %v1249, %v1344
        %s1349 = scalar_lea.vmem %s540, 32 [#allocation9]
        %v1350 = vld [vmem:[%s1349] sm:$0xff]
        %s1351 = scalar_lea.vmem %s530, 128 [#allocation7]
        %v1352 = vld [vmem:[%s1351] sm:$0xff]
        %v1353 = vld [vmem:[%s1351 + $0x8] sm:$0xff]
        %v1354 = vld [vmem:[%s1351 + $0x10] sm:$0xff]
        %v1355 = vld [vmem:[%s1351 + $0x18] sm:$0xff]
        %v1356 = vmul.f32 %v979, %v1352
        %v1357 = vmul.f32 %v980, %v1353
        %v1358 = vmul.f32 %v981, %v1354
        %v1359 = vmul.f32 %v982, %v1355
        %v1360 = vmul.f32 %v983, %v1350
        %v1361 = vmul.f32 %v984, %v1350
        %v1362 = vmul.f32 %v985, %v1350
        %v1363 = vmul.f32 %v986, %v1350
        %v1364 = vadd.f32 %v1356, %v1360
        %v1365 = vadd.f32 %v1357, %v1361
        %v1366 = vadd.f32 %v1358, %v1362
        %v1367 = vadd.f32 %v1359, %v1363
        %s1368 = sld [smem:[#allocation17 + $0x4]]
        %v1369 = vstv %s1368
        %v1370 = vmul.f32 %v1369, %v1364
        %v1371 = vmul.f32 %v1369, %v1365
        %v1372 = vmul.f32 %v1369, %v1366
        %v1373 = vmul.f32 %v1369, %v1367
        %v1374 = vadd.f32 %v1275, %v1370
        %v1375 = vadd.f32 %v1276, %v1371
        %v1376 = vadd.f32 %v1277, %v1372
        %v1377 = vadd.f32 %v1278, %v1373
        %s1378 = sld [smem:[#allocation17 + $0x84]]
        %v1379 = vstv %s1378
        %v1380 = vmul.f32 %v1379, %v1364
        %v1381 = vmul.f32 %v1379, %v1365
        %v1382 = vmul.f32 %v1379, %v1366
        %v1383 = vmul.f32 %v1379, %v1367
        %v1384 = vadd.f32 %v1285, %v1380
        %v1385 = vadd.f32 %v1286, %v1381
        %v1386 = vadd.f32 %v1287, %v1382
        %v1387 = vadd.f32 %v1288, %v1383
        %s1388 = sld [smem:[#allocation17 + $0x104]]
        %v1389 = vstv %s1388
        %v1390 = vmul.f32 %v1389, %v1364
        %v1391 = vmul.f32 %v1389, %v1365
        %v1392 = vmul.f32 %v1389, %v1366
        %v1393 = vmul.f32 %v1389, %v1367
        %v1394 = vadd.f32 %v1295, %v1390
        %v1395 = vadd.f32 %v1296, %v1391
        %v1396 = vadd.f32 %v1297, %v1392
        %v1397 = vadd.f32 %v1298, %v1393
        %s1398 = sld [smem:[#allocation17 + $0x184]]
        %v1399 = vstv %s1398
        %v1400 = vmul.f32 %v1399, %v1364
        %v1401 = vmul.f32 %v1399, %v1365
        %v1402 = vmul.f32 %v1399, %v1366
        %v1403 = vmul.f32 %v1399, %v1367
        %v1404 = vadd.f32 %v1305, %v1400
        %v1405 = vadd.f32 %v1306, %v1401
        %v1406 = vadd.f32 %v1307, %v1402
        %v1407 = vadd.f32 %v1308, %v1403
        %s1408 = sld [smem:[#allocation17 + $0x204]]
        %v1409 = vstv %s1408
        %v1410 = vmul.f32 %v1409, %v1364
        %v1411 = vmul.f32 %v1409, %v1365
        %v1412 = vmul.f32 %v1409, %v1366
        %v1413 = vmul.f32 %v1409, %v1367
        %v1414 = vadd.f32 %v1315, %v1410
        %v1415 = vadd.f32 %v1316, %v1411
        %v1416 = vadd.f32 %v1317, %v1412
        %v1417 = vadd.f32 %v1318, %v1413
        %s1418 = sld [smem:[#allocation17 + $0x284]]
        %v1419 = vstv %s1418
        %v1420 = vmul.f32 %v1419, %v1364
        %v1421 = vmul.f32 %v1419, %v1365
        %v1422 = vmul.f32 %v1419, %v1366
        %v1423 = vmul.f32 %v1419, %v1367
        %v1424 = vadd.f32 %v1325, %v1420
        %v1425 = vadd.f32 %v1326, %v1421
        %v1426 = vadd.f32 %v1327, %v1422
        %v1427 = vadd.f32 %v1328, %v1423
        %s1428 = sld [smem:[#allocation17 + $0x304]]
        %v1429 = vstv %s1428
        %v1430 = vmul.f32 %v1429, %v1364
        %v1431 = vmul.f32 %v1429, %v1365
        %v1432 = vmul.f32 %v1429, %v1366
        %v1433 = vmul.f32 %v1429, %v1367
        %v1434 = vadd.f32 %v1335, %v1430
        %v1435 = vadd.f32 %v1336, %v1431
        %v1436 = vadd.f32 %v1337, %v1432
        %v1437 = vadd.f32 %v1338, %v1433
        %s1438 = sld [smem:[#allocation17 + $0x384]]
        %v1439 = vstv %s1438
        %v1440 = vmul.f32 %v1439, %v1364
        %v1441 = vmul.f32 %v1439, %v1365
        %v1442 = vmul.f32 %v1439, %v1366
        %v1443 = vmul.f32 %v1439, %v1367
        %v1444 = vadd.f32 %v1345, %v1440
        %v1445 = vadd.f32 %v1346, %v1441
        %v1446 = vadd.f32 %v1347, %v1442
        %v1447 = vadd.f32 %v1348, %v1443
        %s1448 = scalar_lea.vmem %s540, 40 [#allocation9]
        %v1449 = vld [vmem:[%s1448] sm:$0xff]
        %s1450 = scalar_lea.vmem %s530, 160 [#allocation7]
        %v1451 = vld [vmem:[%s1450] sm:$0xff]
        %v1452 = vld [vmem:[%s1450 + $0x8] sm:$0xff]
        %v1453 = vld [vmem:[%s1450 + $0x10] sm:$0xff]
        %v1454 = vld [vmem:[%s1450 + $0x18] sm:$0xff]
        %v1455 = vmul.f32 %v979, %v1451
        %v1456 = vmul.f32 %v980, %v1452
        %v1457 = vmul.f32 %v981, %v1453
        %v1458 = vmul.f32 %v982, %v1454
        %v1459 = vmul.f32 %v983, %v1449
        %v1460 = vmul.f32 %v984, %v1449
        %v1461 = vmul.f32 %v985, %v1449
        %v1462 = vmul.f32 %v986, %v1449
        %v1463 = vadd.f32 %v1455, %v1459
        %v1464 = vadd.f32 %v1456, %v1460
        %v1465 = vadd.f32 %v1457, %v1461
        %v1466 = vadd.f32 %v1458, %v1462
        %s1467 = sld [smem:[#allocation17 + $0x5]]
        %v1468 = vstv %s1467
        %v1469 = vmul.f32 %v1468, %v1463
        %v1470 = vmul.f32 %v1468, %v1464
        %v1471 = vmul.f32 %v1468, %v1465
        %v1472 = vmul.f32 %v1468, %v1466
        %v1473 = vadd.f32 %v1374, %v1469
        %v1474 = vadd.f32 %v1375, %v1470
        %v1475 = vadd.f32 %v1376, %v1471
        %v1476 = vadd.f32 %v1377, %v1472
        %s1477 = sld [smem:[#allocation17 + $0x85]]
        %v1478 = vstv %s1477
        %v1479 = vmul.f32 %v1478, %v1463
        %v1480 = vmul.f32 %v1478, %v1464
        %v1481 = vmul.f32 %v1478, %v1465
        %v1482 = vmul.f32 %v1478, %v1466
        %v1483 = vadd.f32 %v1384, %v1479
        %v1484 = vadd.f32 %v1385, %v1480
        %v1485 = vadd.f32 %v1386, %v1481
        %v1486 = vadd.f32 %v1387, %v1482
        %s1487 = sld [smem:[#allocation17 + $0x105]]
        %v1488 = vstv %s1487
        %v1489 = vmul.f32 %v1488, %v1463
        %v1490 = vmul.f32 %v1488, %v1464
        %v1491 = vmul.f32 %v1488, %v1465
        %v1492 = vmul.f32 %v1488, %v1466
        %v1493 = vadd.f32 %v1394, %v1489
        %v1494 = vadd.f32 %v1395, %v1490
        %v1495 = vadd.f32 %v1396, %v1491
        %v1496 = vadd.f32 %v1397, %v1492
        %s1497 = sld [smem:[#allocation17 + $0x185]]
        %v1498 = vstv %s1497
        %v1499 = vmul.f32 %v1498, %v1463
        %v1500 = vmul.f32 %v1498, %v1464
        %v1501 = vmul.f32 %v1498, %v1465
        %v1502 = vmul.f32 %v1498, %v1466
        %v1503 = vadd.f32 %v1404, %v1499
        %v1504 = vadd.f32 %v1405, %v1500
        %v1505 = vadd.f32 %v1406, %v1501
        %v1506 = vadd.f32 %v1407, %v1502
        %s1507 = sld [smem:[#allocation17 + $0x205]]
        %v1508 = vstv %s1507
        %v1509 = vmul.f32 %v1508, %v1463
        %v1510 = vmul.f32 %v1508, %v1464
        %v1511 = vmul.f32 %v1508, %v1465
        %v1512 = vmul.f32 %v1508, %v1466
        %v1513 = vadd.f32 %v1414, %v1509
        %v1514 = vadd.f32 %v1415, %v1510
        %v1515 = vadd.f32 %v1416, %v1511
        %v1516 = vadd.f32 %v1417, %v1512
        %s1517 = sld [smem:[#allocation17 + $0x285]]
        %v1518 = vstv %s1517
        %v1519 = vmul.f32 %v1518, %v1463
        %v1520 = vmul.f32 %v1518, %v1464
        %v1521 = vmul.f32 %v1518, %v1465
        %v1522 = vmul.f32 %v1518, %v1466
        %v1523 = vadd.f32 %v1424, %v1519
        %v1524 = vadd.f32 %v1425, %v1520
        %v1525 = vadd.f32 %v1426, %v1521
        %v1526 = vadd.f32 %v1427, %v1522
        %s1527 = sld [smem:[#allocation17 + $0x305]]
        %v1528 = vstv %s1527
        %v1529 = vmul.f32 %v1528, %v1463
        %v1530 = vmul.f32 %v1528, %v1464
        %v1531 = vmul.f32 %v1528, %v1465
        %v1532 = vmul.f32 %v1528, %v1466
        %v1533 = vadd.f32 %v1434, %v1529
        %v1534 = vadd.f32 %v1435, %v1530
        %v1535 = vadd.f32 %v1436, %v1531
        %v1536 = vadd.f32 %v1437, %v1532
        %s1537 = sld [smem:[#allocation17 + $0x385]]
        %v1538 = vstv %s1537
        %v1539 = vmul.f32 %v1538, %v1463
        %v1540 = vmul.f32 %v1538, %v1464
        %v1541 = vmul.f32 %v1538, %v1465
        %v1542 = vmul.f32 %v1538, %v1466
        %v1543 = vadd.f32 %v1444, %v1539
        %v1544 = vadd.f32 %v1445, %v1540
        %v1545 = vadd.f32 %v1446, %v1541
        %v1546 = vadd.f32 %v1447, %v1542
        %s1547 = scalar_lea.vmem %s540, 48 [#allocation9]
        %v1548 = vld [vmem:[%s1547] sm:$0xff]
        %s1549 = scalar_lea.vmem %s530, 192 [#allocation7]
        %v1550 = vld [vmem:[%s1549] sm:$0xff]
        %v1551 = vld [vmem:[%s1549 + $0x8] sm:$0xff]
        %v1552 = vld [vmem:[%s1549 + $0x10] sm:$0xff]
        %v1553 = vld [vmem:[%s1549 + $0x18] sm:$0xff]
        %v1554 = vmul.f32 %v979, %v1550
        %v1555 = vmul.f32 %v980, %v1551
        %v1556 = vmul.f32 %v981, %v1552
        %v1557 = vmul.f32 %v982, %v1553
        %v1558 = vmul.f32 %v983, %v1548
        %v1559 = vmul.f32 %v984, %v1548
        %v1560 = vmul.f32 %v985, %v1548
        %v1561 = vmul.f32 %v986, %v1548
        %v1562 = vadd.f32 %v1554, %v1558
        %v1563 = vadd.f32 %v1555, %v1559
        %v1564 = vadd.f32 %v1556, %v1560
        %v1565 = vadd.f32 %v1557, %v1561
        %s1566 = sld [smem:[#allocation17 + $0x6]]
        %v1567 = vstv %s1566
        %v1568 = vmul.f32 %v1567, %v1562
        %v1569 = vmul.f32 %v1567, %v1563
        %v1570 = vmul.f32 %v1567, %v1564
        %v1571 = vmul.f32 %v1567, %v1565
        %v1572 = vadd.f32 %v1473, %v1568
        %v1573 = vadd.f32 %v1474, %v1569
        %v1574 = vadd.f32 %v1475, %v1570
        %v1575 = vadd.f32 %v1476, %v1571
        %s1576 = sld [smem:[#allocation17 + $0x86]]
        %v1577 = vstv %s1576
        %v1578 = vmul.f32 %v1577, %v1562
        %v1579 = vmul.f32 %v1577, %v1563
        %v1580 = vmul.f32 %v1577, %v1564
        %v1581 = vmul.f32 %v1577, %v1565
        %v1582 = vadd.f32 %v1483, %v1578
        %v1583 = vadd.f32 %v1484, %v1579
        %v1584 = vadd.f32 %v1485, %v1580
        %v1585 = vadd.f32 %v1486, %v1581
        %s1586 = sld [smem:[#allocation17 + $0x106]]
        %v1587 = vstv %s1586
        %v1588 = vmul.f32 %v1587, %v1562
        %v1589 = vmul.f32 %v1587, %v1563
        %v1590 = vmul.f32 %v1587, %v1564
        %v1591 = vmul.f32 %v1587, %v1565
        %v1592 = vadd.f32 %v1493, %v1588
        %v1593 = vadd.f32 %v1494, %v1589
        %v1594 = vadd.f32 %v1495, %v1590
        %v1595 = vadd.f32 %v1496, %v1591
        %s1596 = sld [smem:[#allocation17 + $0x186]]
        %v1597 = vstv %s1596
        %v1598 = vmul.f32 %v1597, %v1562
        %v1599 = vmul.f32 %v1597, %v1563
        %v1600 = vmul.f32 %v1597, %v1564
        %v1601 = vmul.f32 %v1597, %v1565
        %v1602 = vadd.f32 %v1503, %v1598
        %v1603 = vadd.f32 %v1504, %v1599
        %v1604 = vadd.f32 %v1505, %v1600
        %v1605 = vadd.f32 %v1506, %v1601
        %s1606 = sld [smem:[#allocation17 + $0x206]]
        %v1607 = vstv %s1606
        %v1608 = vmul.f32 %v1607, %v1562
        %v1609 = vmul.f32 %v1607, %v1563
        %v1610 = vmul.f32 %v1607, %v1564
        %v1611 = vmul.f32 %v1607, %v1565
        %v1612 = vadd.f32 %v1513, %v1608
        %v1613 = vadd.f32 %v1514, %v1609
        %v1614 = vadd.f32 %v1515, %v1610
        %v1615 = vadd.f32 %v1516, %v1611
        %s1616 = sld [smem:[#allocation17 + $0x286]]
        %v1617 = vstv %s1616
        %v1618 = vmul.f32 %v1617, %v1562
        %v1619 = vmul.f32 %v1617, %v1563
        %v1620 = vmul.f32 %v1617, %v1564
        %v1621 = vmul.f32 %v1617, %v1565
        %v1622 = vadd.f32 %v1523, %v1618
        %v1623 = vadd.f32 %v1524, %v1619
        %v1624 = vadd.f32 %v1525, %v1620
        %v1625 = vadd.f32 %v1526, %v1621
        %s1626 = sld [smem:[#allocation17 + $0x306]]
        %v1627 = vstv %s1626
        %v1628 = vmul.f32 %v1627, %v1562
        %v1629 = vmul.f32 %v1627, %v1563
        %v1630 = vmul.f32 %v1627, %v1564
        %v1631 = vmul.f32 %v1627, %v1565
        %v1632 = vadd.f32 %v1533, %v1628
        %v1633 = vadd.f32 %v1534, %v1629
        %v1634 = vadd.f32 %v1535, %v1630
        %v1635 = vadd.f32 %v1536, %v1631
        %s1636 = sld [smem:[#allocation17 + $0x386]]
        %v1637 = vstv %s1636
        %v1638 = vmul.f32 %v1637, %v1562
        %v1639 = vmul.f32 %v1637, %v1563
        %v1640 = vmul.f32 %v1637, %v1564
        %v1641 = vmul.f32 %v1637, %v1565
        %v1642 = vadd.f32 %v1543, %v1638
        %v1643 = vadd.f32 %v1544, %v1639
        %v1644 = vadd.f32 %v1545, %v1640
        %v1645 = vadd.f32 %v1546, %v1641
        %s1646 = scalar_lea.vmem %s540, 56 [#allocation9]
        %v1647 = vld [vmem:[%s1646] sm:$0xff]
        %s1648 = scalar_lea.vmem %s530, 224 [#allocation7]
        %v1649 = vld [vmem:[%s1648] sm:$0xff]
        %v1650 = vld [vmem:[%s1648 + $0x8] sm:$0xff]
        %v1651 = vld [vmem:[%s1648 + $0x10] sm:$0xff]
        %v1652 = vld [vmem:[%s1648 + $0x18] sm:$0xff]
        %v1653 = vmul.f32 %v979, %v1649
        %v1654 = vmul.f32 %v980, %v1650
        %v1655 = vmul.f32 %v981, %v1651
        %v1656 = vmul.f32 %v982, %v1652
        %v1657 = vmul.f32 %v983, %v1647
        %v1658 = vmul.f32 %v984, %v1647
        %v1659 = vmul.f32 %v985, %v1647
        %v1660 = vmul.f32 %v986, %v1647
        %v1661 = vadd.f32 %v1653, %v1657
        %v1662 = vadd.f32 %v1654, %v1658
        %v1663 = vadd.f32 %v1655, %v1659
        %v1664 = vadd.f32 %v1656, %v1660
        %s1665 = sld [smem:[#allocation17 + $0x7]]
        %v1666 = vstv %s1665
        %v1667 = vmul.f32 %v1666, %v1661
        %v1668 = vmul.f32 %v1666, %v1662
        %v1669 = vmul.f32 %v1666, %v1663
        %v1670 = vmul.f32 %v1666, %v1664
        %v1671 = vadd.f32 %v1572, %v1667
        %v1672 = vadd.f32 %v1573, %v1668
        %v1673 = vadd.f32 %v1574, %v1669
        %v1674 = vadd.f32 %v1575, %v1670
        %s1675 = sld [smem:[#allocation17 + $0x87]]
        %v1676 = vstv %s1675
        %v1677 = vmul.f32 %v1676, %v1661
        %v1678 = vmul.f32 %v1676, %v1662
        %v1679 = vmul.f32 %v1676, %v1663
        %v1680 = vmul.f32 %v1676, %v1664
        %v1681 = vadd.f32 %v1582, %v1677
        %v1682 = vadd.f32 %v1583, %v1678
        %v1683 = vadd.f32 %v1584, %v1679
        %v1684 = vadd.f32 %v1585, %v1680
        %s1685 = sld [smem:[#allocation17 + $0x107]]
        %v1686 = vstv %s1685
        %v1687 = vmul.f32 %v1686, %v1661
        %v1688 = vmul.f32 %v1686, %v1662
        %v1689 = vmul.f32 %v1686, %v1663
        %v1690 = vmul.f32 %v1686, %v1664
        %v1691 = vadd.f32 %v1592, %v1687
        %v1692 = vadd.f32 %v1593, %v1688
        %v1693 = vadd.f32 %v1594, %v1689
        %v1694 = vadd.f32 %v1595, %v1690
        %s1695 = sld [smem:[#allocation17 + $0x187]]
        %v1696 = vstv %s1695
        %v1697 = vmul.f32 %v1696, %v1661
        %v1698 = vmul.f32 %v1696, %v1662
        %v1699 = vmul.f32 %v1696, %v1663
        %v1700 = vmul.f32 %v1696, %v1664
        %v1701 = vadd.f32 %v1602, %v1697
        %v1702 = vadd.f32 %v1603, %v1698
        %v1703 = vadd.f32 %v1604, %v1699
        %v1704 = vadd.f32 %v1605, %v1700
        %s1705 = sld [smem:[#allocation17 + $0x207]]
        %v1706 = vstv %s1705
        %v1707 = vmul.f32 %v1706, %v1661
        %v1708 = vmul.f32 %v1706, %v1662
        %v1709 = vmul.f32 %v1706, %v1663
        %v1710 = vmul.f32 %v1706, %v1664
        %v1711 = vadd.f32 %v1612, %v1707
        %v1712 = vadd.f32 %v1613, %v1708
        %v1713 = vadd.f32 %v1614, %v1709
        %v1714 = vadd.f32 %v1615, %v1710
        %s1715 = sld [smem:[#allocation17 + $0x287]]
        %v1716 = vstv %s1715
        %v1717 = vmul.f32 %v1716, %v1661
        %v1718 = vmul.f32 %v1716, %v1662
        %v1719 = vmul.f32 %v1716, %v1663
        %v1720 = vmul.f32 %v1716, %v1664
        %v1721 = vadd.f32 %v1622, %v1717
        %v1722 = vadd.f32 %v1623, %v1718
        %v1723 = vadd.f32 %v1624, %v1719
        %v1724 = vadd.f32 %v1625, %v1720
        %s1725 = sld [smem:[#allocation17 + $0x307]]
        %v1726 = vstv %s1725
        %v1727 = vmul.f32 %v1726, %v1661
        %v1728 = vmul.f32 %v1726, %v1662
        %v1729 = vmul.f32 %v1726, %v1663
        %v1730 = vmul.f32 %v1726, %v1664
        %v1731 = vadd.f32 %v1632, %v1727
        %v1732 = vadd.f32 %v1633, %v1728
        %v1733 = vadd.f32 %v1634, %v1729
        %v1734 = vadd.f32 %v1635, %v1730
        %s1735 = sld [smem:[#allocation17 + $0x387]]
        %v1736 = vstv %s1735
        %v1737 = vmul.f32 %v1736, %v1661
        %v1738 = vmul.f32 %v1736, %v1662
        %v1739 = vmul.f32 %v1736, %v1663
        %v1740 = vmul.f32 %v1736, %v1664
        %v1741 = vadd.f32 %v1642, %v1737
        %v1742 = vadd.f32 %v1643, %v1738
        %v1743 = vadd.f32 %v1644, %v1739
        %v1744 = vadd.f32 %v1645, %v1740
        %s1745 = scalar_lea.vmem %s540, 64 [#allocation9]
        %v1746 = vld [vmem:[%s1745] sm:$0xff]
        %s1747 = scalar_lea.vmem %s530, 256 [#allocation7]
        %v1748 = vld [vmem:[%s1747] sm:$0xff]
        %v1749 = vld [vmem:[%s1747 + $0x8] sm:$0xff]
        %v1750 = vld [vmem:[%s1747 + $0x10] sm:$0xff]
        %v1751 = vld [vmem:[%s1747 + $0x18] sm:$0xff]
        %v1752 = vmul.f32 %v979, %v1748
        %v1753 = vmul.f32 %v980, %v1749
        %v1754 = vmul.f32 %v981, %v1750
        %v1755 = vmul.f32 %v982, %v1751
        %v1756 = vmul.f32 %v983, %v1746
        %v1757 = vmul.f32 %v984, %v1746
        %v1758 = vmul.f32 %v985, %v1746
        %v1759 = vmul.f32 %v986, %v1746
        %v1760 = vadd.f32 %v1752, %v1756
        %v1761 = vadd.f32 %v1753, %v1757
        %v1762 = vadd.f32 %v1754, %v1758
        %v1763 = vadd.f32 %v1755, %v1759
        %s1764 = sld [smem:[#allocation17 + $0x8]]
        %v1765 = vstv %s1764
        %v1766 = vmul.f32 %v1765, %v1760
        %v1767 = vmul.f32 %v1765, %v1761
        %v1768 = vmul.f32 %v1765, %v1762
        %v1769 = vmul.f32 %v1765, %v1763
        %v1770 = vadd.f32 %v1671, %v1766
        %v1771 = vadd.f32 %v1672, %v1767
        %v1772 = vadd.f32 %v1673, %v1768
        %v1773 = vadd.f32 %v1674, %v1769
        %s1774 = sld [smem:[#allocation17 + $0x88]]
        %v1775 = vstv %s1774
        %v1776 = vmul.f32 %v1775, %v1760
        %v1777 = vmul.f32 %v1775, %v1761
        %v1778 = vmul.f32 %v1775, %v1762
        %v1779 = vmul.f32 %v1775, %v1763
        %v1780 = vadd.f32 %v1681, %v1776
        %v1781 = vadd.f32 %v1682, %v1777
        %v1782 = vadd.f32 %v1683, %v1778
        %v1783 = vadd.f32 %v1684, %v1779
        %s1784 = sld [smem:[#allocation17 + $0x108]]
        %v1785 = vstv %s1784
        %v1786 = vmul.f32 %v1785, %v1760
        %v1787 = vmul.f32 %v1785, %v1761
        %v1788 = vmul.f32 %v1785, %v1762
        %v1789 = vmul.f32 %v1785, %v1763
        %v1790 = vadd.f32 %v1691, %v1786
        %v1791 = vadd.f32 %v1692, %v1787
        %v1792 = vadd.f32 %v1693, %v1788
        %v1793 = vadd.f32 %v1694, %v1789
        %s1794 = sld [smem:[#allocation17 + $0x188]]
        %v1795 = vstv %s1794
        %v1796 = vmul.f32 %v1795, %v1760
        %v1797 = vmul.f32 %v1795, %v1761
        %v1798 = vmul.f32 %v1795, %v1762
        %v1799 = vmul.f32 %v1795, %v1763
        %v1800 = vadd.f32 %v1701, %v1796
        %v1801 = vadd.f32 %v1702, %v1797
        %v1802 = vadd.f32 %v1703, %v1798
        %v1803 = vadd.f32 %v1704, %v1799
        %s1804 = sld [smem:[#allocation17 + $0x208]]
        %v1805 = vstv %s1804
        %v1806 = vmul.f32 %v1805, %v1760
        %v1807 = vmul.f32 %v1805, %v1761
        %v1808 = vmul.f32 %v1805, %v1762
        %v1809 = vmul.f32 %v1805, %v1763
        %v1810 = vadd.f32 %v1711, %v1806
        %v1811 = vadd.f32 %v1712, %v1807
        %v1812 = vadd.f32 %v1713, %v1808
        %v1813 = vadd.f32 %v1714, %v1809
        %s1814 = sld [smem:[#allocation17 + $0x288]]
        %v1815 = vstv %s1814
        %v1816 = vmul.f32 %v1815, %v1760
        %v1817 = vmul.f32 %v1815, %v1761
        %v1818 = vmul.f32 %v1815, %v1762
        %v1819 = vmul.f32 %v1815, %v1763
        %v1820 = vadd.f32 %v1721, %v1816
        %v1821 = vadd.f32 %v1722, %v1817
        %v1822 = vadd.f32 %v1723, %v1818
        %v1823 = vadd.f32 %v1724, %v1819
        %s1824 = sld [smem:[#allocation17 + $0x308]]
        %v1825 = vstv %s1824
        %v1826 = vmul.f32 %v1825, %v1760
        %v1827 = vmul.f32 %v1825, %v1761
        %v1828 = vmul.f32 %v1825, %v1762
        %v1829 = vmul.f32 %v1825, %v1763
        %v1830 = vadd.f32 %v1731, %v1826
        %v1831 = vadd.f32 %v1732, %v1827
        %v1832 = vadd.f32 %v1733, %v1828
        %v1833 = vadd.f32 %v1734, %v1829
        %s1834 = sld [smem:[#allocation17 + $0x388]]
        %v1835 = vstv %s1834
        %v1836 = vmul.f32 %v1835, %v1760
        %v1837 = vmul.f32 %v1835, %v1761
        %v1838 = vmul.f32 %v1835, %v1762
        %v1839 = vmul.f32 %v1835, %v1763
        %v1840 = vadd.f32 %v1741, %v1836
        %v1841 = vadd.f32 %v1742, %v1837
        %v1842 = vadd.f32 %v1743, %v1838
        %v1843 = vadd.f32 %v1744, %v1839
        %s1844 = scalar_lea.vmem %s540, 72 [#allocation9]
        %v1845 = vld [vmem:[%s1844] sm:$0xff]
        %s1846 = scalar_lea.vmem %s530, 288 [#allocation7]
        %v1847 = vld [vmem:[%s1846] sm:$0xff]
        %v1848 = vld [vmem:[%s1846 + $0x8] sm:$0xff]
        %v1849 = vld [vmem:[%s1846 + $0x10] sm:$0xff]
        %v1850 = vld [vmem:[%s1846 + $0x18] sm:$0xff]
        %v1851 = vmul.f32 %v979, %v1847
        %v1852 = vmul.f32 %v980, %v1848
        %v1853 = vmul.f32 %v981, %v1849
        %v1854 = vmul.f32 %v982, %v1850
        %v1855 = vmul.f32 %v983, %v1845
        %v1856 = vmul.f32 %v984, %v1845
        %v1857 = vmul.f32 %v985, %v1845
        %v1858 = vmul.f32 %v986, %v1845
        %v1859 = vadd.f32 %v1851, %v1855
        %v1860 = vadd.f32 %v1852, %v1856
        %v1861 = vadd.f32 %v1853, %v1857
        %v1862 = vadd.f32 %v1854, %v1858
        %s1863 = sld [smem:[#allocation17 + $0x9]]
        %v1864 = vstv %s1863
        %v1865 = vmul.f32 %v1864, %v1859
        %v1866 = vmul.f32 %v1864, %v1860
        %v1867 = vmul.f32 %v1864, %v1861
        %v1868 = vmul.f32 %v1864, %v1862
        %v1869 = vadd.f32 %v1770, %v1865
        %v1870 = vadd.f32 %v1771, %v1866
        %v1871 = vadd.f32 %v1772, %v1867
        %v1872 = vadd.f32 %v1773, %v1868
        %s1873 = sld [smem:[#allocation17 + $0x89]]
        %v1874 = vstv %s1873
        %v1875 = vmul.f32 %v1874, %v1859
        %v1876 = vmul.f32 %v1874, %v1860
        %v1877 = vmul.f32 %v1874, %v1861
        %v1878 = vmul.f32 %v1874, %v1862
        %v1879 = vadd.f32 %v1780, %v1875
        %v1880 = vadd.f32 %v1781, %v1876
        %v1881 = vadd.f32 %v1782, %v1877
        %v1882 = vadd.f32 %v1783, %v1878
        %s1883 = sld [smem:[#allocation17 + $0x109]]
        %v1884 = vstv %s1883
        %v1885 = vmul.f32 %v1884, %v1859
        %v1886 = vmul.f32 %v1884, %v1860
        %v1887 = vmul.f32 %v1884, %v1861
        %v1888 = vmul.f32 %v1884, %v1862
        %v1889 = vadd.f32 %v1790, %v1885
        %v1890 = vadd.f32 %v1791, %v1886
        %v1891 = vadd.f32 %v1792, %v1887
        %v1892 = vadd.f32 %v1793, %v1888
        %s1893 = sld [smem:[#allocation17 + $0x189]]
        %v1894 = vstv %s1893
        %v1895 = vmul.f32 %v1894, %v1859
        %v1896 = vmul.f32 %v1894, %v1860
        %v1897 = vmul.f32 %v1894, %v1861
        %v1898 = vmul.f32 %v1894, %v1862
        %v1899 = vadd.f32 %v1800, %v1895
        %v1900 = vadd.f32 %v1801, %v1896
        %v1901 = vadd.f32 %v1802, %v1897
        %v1902 = vadd.f32 %v1803, %v1898
        %s1903 = sld [smem:[#allocation17 + $0x209]]
        %v1904 = vstv %s1903
        %v1905 = vmul.f32 %v1904, %v1859
        %v1906 = vmul.f32 %v1904, %v1860
        %v1907 = vmul.f32 %v1904, %v1861
        %v1908 = vmul.f32 %v1904, %v1862
        %v1909 = vadd.f32 %v1810, %v1905
        %v1910 = vadd.f32 %v1811, %v1906
        %v1911 = vadd.f32 %v1812, %v1907
        %v1912 = vadd.f32 %v1813, %v1908
        %s1913 = sld [smem:[#allocation17 + $0x289]]
        %v1914 = vstv %s1913
        %v1915 = vmul.f32 %v1914, %v1859
        %v1916 = vmul.f32 %v1914, %v1860
        %v1917 = vmul.f32 %v1914, %v1861
        %v1918 = vmul.f32 %v1914, %v1862
        %v1919 = vadd.f32 %v1820, %v1915
        %v1920 = vadd.f32 %v1821, %v1916
        %v1921 = vadd.f32 %v1822, %v1917
        %v1922 = vadd.f32 %v1823, %v1918
        %s1923 = sld [smem:[#allocation17 + $0x309]]
        %v1924 = vstv %s1923
        %v1925 = vmul.f32 %v1924, %v1859
        %v1926 = vmul.f32 %v1924, %v1860
        %v1927 = vmul.f32 %v1924, %v1861
        %v1928 = vmul.f32 %v1924, %v1862
        %v1929 = vadd.f32 %v1830, %v1925
        %v1930 = vadd.f32 %v1831, %v1926
        %v1931 = vadd.f32 %v1832, %v1927
        %v1932 = vadd.f32 %v1833, %v1928
        %s1933 = sld [smem:[#allocation17 + $0x389]]
        %v1934 = vstv %s1933
        %v1935 = vmul.f32 %v1934, %v1859
        %v1936 = vmul.f32 %v1934, %v1860
        %v1937 = vmul.f32 %v1934, %v1861
        %v1938 = vmul.f32 %v1934, %v1862
        %v1939 = vadd.f32 %v1840, %v1935
        %v1940 = vadd.f32 %v1841, %v1936
        %v1941 = vadd.f32 %v1842, %v1937
        %v1942 = vadd.f32 %v1843, %v1938
        %s1943 = scalar_lea.vmem %s540, 80 [#allocation9]
        %v1944 = vld [vmem:[%s1943] sm:$0xff]
        %s1945 = scalar_lea.vmem %s530, 320 [#allocation7]
        %v1946 = vld [vmem:[%s1945] sm:$0xff]
        %v1947 = vld [vmem:[%s1945 + $0x8] sm:$0xff]
        %v1948 = vld [vmem:[%s1945 + $0x10] sm:$0xff]
        %v1949 = vld [vmem:[%s1945 + $0x18] sm:$0xff]
        %v1950 = vmul.f32 %v979, %v1946
        %v1951 = vmul.f32 %v980, %v1947
        %v1952 = vmul.f32 %v981, %v1948
        %v1953 = vmul.f32 %v982, %v1949
        %v1954 = vmul.f32 %v983, %v1944
        %v1955 = vmul.f32 %v984, %v1944
        %v1956 = vmul.f32 %v985, %v1944
        %v1957 = vmul.f32 %v986, %v1944
        %v1958 = vadd.f32 %v1950, %v1954
        %v1959 = vadd.f32 %v1951, %v1955
        %v1960 = vadd.f32 %v1952, %v1956
        %v1961 = vadd.f32 %v1953, %v1957
        %s1962 = sld [smem:[#allocation17 + $0xa]]
        %v1963 = vstv %s1962
        %v1964 = vmul.f32 %v1963, %v1958
        %v1965 = vmul.f32 %v1963, %v1959
        %v1966 = vmul.f32 %v1963, %v1960
        %v1967 = vmul.f32 %v1963, %v1961
        %v1968 = vadd.f32 %v1869, %v1964
        %v1969 = vadd.f32 %v1870, %v1965
        %v1970 = vadd.f32 %v1871, %v1966
        %v1971 = vadd.f32 %v1872, %v1967
        %s1972 = sld [smem:[#allocation17 + $0x8a]]
        %v1973 = vstv %s1972
        %v1974 = vmul.f32 %v1973, %v1958
        %v1975 = vmul.f32 %v1973, %v1959
        %v1976 = vmul.f32 %v1973, %v1960
        %v1977 = vmul.f32 %v1973, %v1961
        %v1978 = vadd.f32 %v1879, %v1974
        %v1979 = vadd.f32 %v1880, %v1975
        %v1980 = vadd.f32 %v1881, %v1976
        %v1981 = vadd.f32 %v1882, %v1977
        %s1982 = sld [smem:[#allocation17 + $0x10a]]
        %v1983 = vstv %s1982
        %v1984 = vmul.f32 %v1983, %v1958
        %v1985 = vmul.f32 %v1983, %v1959
        %v1986 = vmul.f32 %v1983, %v1960
        %v1987 = vmul.f32 %v1983, %v1961
        %v1988 = vadd.f32 %v1889, %v1984
        %v1989 = vadd.f32 %v1890, %v1985
        %v1990 = vadd.f32 %v1891, %v1986
        %v1991 = vadd.f32 %v1892, %v1987
        %s1992 = sld [smem:[#allocation17 + $0x18a]]
        %v1993 = vstv %s1992
        %v1994 = vmul.f32 %v1993, %v1958
        %v1995 = vmul.f32 %v1993, %v1959
        %v1996 = vmul.f32 %v1993, %v1960
        %v1997 = vmul.f32 %v1993, %v1961
        %v1998 = vadd.f32 %v1899, %v1994
        %v1999 = vadd.f32 %v1900, %v1995
        %v2000 = vadd.f32 %v1901, %v1996
        %v2001 = vadd.f32 %v1902, %v1997
        %s2002 = sld [smem:[#allocation17 + $0x20a]]
        %v2003 = vstv %s2002
        %v2004 = vmul.f32 %v2003, %v1958
        %v2005 = vmul.f32 %v2003, %v1959
        %v2006 = vmul.f32 %v2003, %v1960
        %v2007 = vmul.f32 %v2003, %v1961
        %v2008 = vadd.f32 %v1909, %v2004
        %v2009 = vadd.f32 %v1910, %v2005
        %v2010 = vadd.f32 %v1911, %v2006
        %v2011 = vadd.f32 %v1912, %v2007
        %s2012 = sld [smem:[#allocation17 + $0x28a]]
        %v2013 = vstv %s2012
        %v2014 = vmul.f32 %v2013, %v1958
        %v2015 = vmul.f32 %v2013, %v1959
        %v2016 = vmul.f32 %v2013, %v1960
        %v2017 = vmul.f32 %v2013, %v1961
        %v2018 = vadd.f32 %v1919, %v2014
        %v2019 = vadd.f32 %v1920, %v2015
        %v2020 = vadd.f32 %v1921, %v2016
        %v2021 = vadd.f32 %v1922, %v2017
        %s2022 = sld [smem:[#allocation17 + $0x30a]]
        %v2023 = vstv %s2022
        %v2024 = vmul.f32 %v2023, %v1958
        %v2025 = vmul.f32 %v2023, %v1959
        %v2026 = vmul.f32 %v2023, %v1960
        %v2027 = vmul.f32 %v2023, %v1961
        %v2028 = vadd.f32 %v1929, %v2024
        %v2029 = vadd.f32 %v1930, %v2025
        %v2030 = vadd.f32 %v1931, %v2026
        %v2031 = vadd.f32 %v1932, %v2027
        %s2032 = sld [smem:[#allocation17 + $0x38a]]
        %v2033 = vstv %s2032
        %v2034 = vmul.f32 %v2033, %v1958
        %v2035 = vmul.f32 %v2033, %v1959
        %v2036 = vmul.f32 %v2033, %v1960
        %v2037 = vmul.f32 %v2033, %v1961
        %v2038 = vadd.f32 %v1939, %v2034
        %v2039 = vadd.f32 %v1940, %v2035
        %v2040 = vadd.f32 %v1941, %v2036
        %v2041 = vadd.f32 %v1942, %v2037
        %v2042 = vld [vmem:[#allocation19] sm:$0xf]
        %v2043 = vld [vmem:[#allocation19 + $0x4] sm:$0xf]
        %v2044 = vld [vmem:[#allocation19 + $0x8] sm:$0xf]
        %v2045 = vld [vmem:[#allocation19 + $0xc] sm:$0xf]
        %v2046 = vld [vmem:[#allocation19 + $0x10] sm:$0xf]
        %v2047 = vld [vmem:[#allocation19 + $0x14] sm:$0xf]
        %v2048 = vld [vmem:[#allocation19 + $0x18] sm:$0xf]
        %v2049 = vld [vmem:[#allocation19 + $0x1c] sm:$0xf]
        %v2050 = vld [vmem:[#allocation21] sm:$0xf]
        %v2051 = vld [vmem:[#allocation21 + $0x4] sm:$0xf]
        %v2052 = vld [vmem:[#allocation21 + $0x8] sm:$0xf]
        %v2053 = vld [vmem:[#allocation21 + $0xc] sm:$0xf]
        %v2054 = vld [vmem:[#allocation21 + $0x10] sm:$0xf]
        %v2055 = vld [vmem:[#allocation21 + $0x14] sm:$0xf]
        %v2056 = vld [vmem:[#allocation21 + $0x18] sm:$0xf]
        %v2057 = vld [vmem:[#allocation21 + $0x1c] sm:$0xf]
        %v2058 = vadd.f32 %v1968, %v1969
        %v2059 = vadd.f32 %v2058, %v1970
        %v2060 = vadd.f32 %v2059, %v1971
        %2061 = vadd.xlane.f32.xlu0 %v2060
        %v2062 = vpop.xlane.xlu0 %2061
        %v2063 = vadd.f32 %v1978, %v1979
        %v2064 = vadd.f32 %v2063, %v1980
        %v2065 = vadd.f32 %v2064, %v1981
        %2066 = vadd.xlane.f32.xlu0 %v2065
        %v2067 = vpop.xlane.xlu0 %2066
        %v2068 = vadd.f32 %v1988, %v1989
        %v2069 = vadd.f32 %v2068, %v1990
        %v2070 = vadd.f32 %v2069, %v1991
        %2071 = vadd.xlane.f32.xlu0 %v2070
        %v2072 = vpop.xlane.xlu0 %2071
        %v2073 = vadd.f32 %v1998, %v1999
        %v2074 = vadd.f32 %v2073, %v2000
        %v2075 = vadd.f32 %v2074, %v2001
        %2076 = vadd.xlane.f32.xlu0 %v2075
        %v2077 = vpop.xlane.xlu0 %2076
        %v2078 = vadd.f32 %v2008, %v2009
        %v2079 = vadd.f32 %v2078, %v2010
        %v2080 = vadd.f32 %v2079, %v2011
        %2081 = vadd.xlane.f32.xlu0 %v2080
        %v2082 = vpop.xlane.xlu0 %2081
        %v2083 = vadd.f32 %v2018, %v2019
        %v2084 = vadd.f32 %v2083, %v2020
        %v2085 = vadd.f32 %v2084, %v2021
        %2086 = vadd.xlane.f32.xlu0 %v2085
        %v2087 = vpop.xlane.xlu0 %2086
        %v2088 = vadd.f32 %v2028, %v2029
        %v2089 = vadd.f32 %v2088, %v2030
        %v2090 = vadd.f32 %v2089, %v2031
        %2091 = vadd.xlane.f32.xlu0 %v2090
        %v2092 = vpop.xlane.xlu0 %2091
        %v2093 = vadd.f32 %v2038, %v2039
        %v2094 = vadd.f32 %v2093, %v2040
        %v2095 = vadd.f32 %v2094, %v2041
        %2096 = vadd.xlane.f32.xlu0 %v2095
        %v2097 = vpop.xlane.xlu0 %2096
        %v2098 = vmul.f32 %v2062, %v656
        %v2099 = vmul.f32 %v2067, %v656
        %v2100 = vmul.f32 %v2072, %v656
        %v2101 = vmul.f32 %v2077, %v656
        %v2102 = vmul.f32 %v2082, %v656
        %v2103 = vmul.f32 %v2087, %v656
        %v2104 = vmul.f32 %v2092, %v656
        %v2105 = vmul.f32 %v2097, %v656
        %v2106 = vadd.f32 %v2098, %v2099
        %v2107 = vadd.f32 %v2106, %v2100
        %v2108 = vadd.f32 %v2107, %v2101
        %v2109 = vadd.f32 %v2108, %v2102
        %v2110 = vadd.f32 %v2109, %v2103
        %v2111 = vadd.f32 %v2110, %v2104
        %v2112 = vadd.f32 %v2111, %v2105
        %v2113 = vrcp.pop 8.0
        %v2114 = vmul.f32 8.0, %v2113
        %v2115 = vsub.f32 1.0, %v2114
        %v2116 = vmul.f32 %v2113, %v2115
        %v2117 = vadd.f32 %v2113, %v2116
        %vm2118 = vweird.f32 %v2113
        %v2119 = vsel %vm2118, %v2113, %v2117
        %v2120 = vmul.f32 %v2112, %v2119
        %v2121 = vsub.f32 %v1968, %v2120
        %v2122 = vsub.f32 %v1969, %v2120
        %v2123 = vsub.f32 %v1970, %v2120
        %v2124 = vsub.f32 %v1971, %v2120
        %v2125 = vsub.f32 %v1978, %v2120
        %v2126 = vsub.f32 %v1979, %v2120
        %v2127 = vsub.f32 %v1980, %v2120
        %v2128 = vsub.f32 %v1981, %v2120
        %v2129 = vsub.f32 %v1988, %v2120
        %v2130 = vsub.f32 %v1989, %v2120
        %v2131 = vsub.f32 %v1990, %v2120
        %v2132 = vsub.f32 %v1991, %v2120
        %v2133 = vsub.f32 %v1998, %v2120
        %v2134 = vsub.f32 %v1999, %v2120
        %v2135 = vsub.f32 %v2000, %v2120
        %v2136 = vsub.f32 %v2001, %v2120
        %v2137 = vsub.f32 %v2008, %v2120
        %v2138 = vsub.f32 %v2009, %v2120
        %v2139 = vsub.f32 %v2010, %v2120
        %v2140 = vsub.f32 %v2011, %v2120
        %v2141 = vsub.f32 %v2018, %v2120
        %v2142 = vsub.f32 %v2019, %v2120
        %v2143 = vsub.f32 %v2020, %v2120
        %v2144 = vsub.f32 %v2021, %v2120
        %v2145 = vsub.f32 %v2028, %v2120
        %v2146 = vsub.f32 %v2029, %v2120
        %v2147 = vsub.f32 %v2030, %v2120
        %v2148 = vsub.f32 %v2031, %v2120
        %v2149 = vsub.f32 %v2038, %v2120
        %v2150 = vsub.f32 %v2039, %v2120
        %v2151 = vsub.f32 %v2040, %v2120
        %v2152 = vsub.f32 %v2041, %v2120
        %v2153 = vmul.f32 %v2121, %v2121
        %v2154 = vmul.f32 %v2122, %v2122
        %v2155 = vmul.f32 %v2123, %v2123
        %v2156 = vmul.f32 %v2124, %v2124
        %v2157 = vmul.f32 %v2125, %v2125
        %v2158 = vmul.f32 %v2126, %v2126
        %v2159 = vmul.f32 %v2127, %v2127
        %v2160 = vmul.f32 %v2128, %v2128
        %v2161 = vmul.f32 %v2129, %v2129
        %v2162 = vmul.f32 %v2130, %v2130
        %v2163 = vmul.f32 %v2131, %v2131
        %v2164 = vmul.f32 %v2132, %v2132
        %v2165 = vmul.f32 %v2133, %v2133
        %v2166 = vmul.f32 %v2134, %v2134
        %v2167 = vmul.f32 %v2135, %v2135
        %v2168 = vmul.f32 %v2136, %v2136
        %v2169 = vmul.f32 %v2137, %v2137
        %v2170 = vmul.f32 %v2138, %v2138
        %v2171 = vmul.f32 %v2139, %v2139
        %v2172 = vmul.f32 %v2140, %v2140
        %v2173 = vmul.f32 %v2141, %v2141
        %v2174 = vmul.f32 %v2142, %v2142
        %v2175 = vmul.f32 %v2143, %v2143
        %v2176 = vmul.f32 %v2144, %v2144
        %v2177 = vmul.f32 %v2145, %v2145
        %v2178 = vmul.f32 %v2146, %v2146
        %v2179 = vmul.f32 %v2147, %v2147
        %v2180 = vmul.f32 %v2148, %v2148
        %v2181 = vmul.f32 %v2149, %v2149
        %v2182 = vmul.f32 %v2150, %v2150
        %v2183 = vmul.f32 %v2151, %v2151
        %v2184 = vmul.f32 %v2152, %v2152
        %v2185 = vadd.f32 %v2153, %v2154
        %v2186 = vadd.f32 %v2185, %v2155
        %v2187 = vadd.f32 %v2186, %v2156
        %2188 = vadd.xlane.f32.xlu0 %v2187
        %v2189 = vpop.xlane.xlu0 %2188
        %v2190 = vadd.f32 %v2157, %v2158
        %v2191 = vadd.f32 %v2190, %v2159
        %v2192 = vadd.f32 %v2191, %v2160
        %2193 = vadd.xlane.f32.xlu0 %v2192
        %v2194 = vpop.xlane.xlu0 %2193
        %v2195 = vadd.f32 %v2161, %v2162
        %v2196 = vadd.f32 %v2195, %v2163
        %v2197 = vadd.f32 %v2196, %v2164
        %2198 = vadd.xlane.f32.xlu0 %v2197
        %v2199 = vpop.xlane.xlu0 %2198
        %v2200 = vadd.f32 %v2165, %v2166
        %v2201 = vadd.f32 %v2200, %v2167
        %v2202 = vadd.f32 %v2201, %v2168
        %2203 = vadd.xlane.f32.xlu0 %v2202
        %v2204 = vpop.xlane.xlu0 %2203
        %v2205 = vadd.f32 %v2169, %v2170
        %v2206 = vadd.f32 %v2205, %v2171
        %v2207 = vadd.f32 %v2206, %v2172
        %2208 = vadd.xlane.f32.xlu0 %v2207
        %v2209 = vpop.xlane.xlu0 %2208
        %v2210 = vadd.f32 %v2173, %v2174
        %v2211 = vadd.f32 %v2210, %v2175
        %v2212 = vadd.f32 %v2211, %v2176
        %2213 = vadd.xlane.f32.xlu0 %v2212
        %v2214 = vpop.xlane.xlu0 %2213
        %v2215 = vadd.f32 %v2177, %v2178
        %v2216 = vadd.f32 %v2215, %v2179
        %v2217 = vadd.f32 %v2216, %v2180
        %2218 = vadd.xlane.f32.xlu0 %v2217
        %v2219 = vpop.xlane.xlu0 %2218
        %v2220 = vadd.f32 %v2181, %v2182
        %v2221 = vadd.f32 %v2220, %v2183
        %v2222 = vadd.f32 %v2221, %v2184
        %2223 = vadd.xlane.f32.xlu0 %v2222
        %v2224 = vpop.xlane.xlu0 %2223
        %v2225 = vmul.f32 %v2189, %v656
        %v2226 = vmul.f32 %v2194, %v656
        %v2227 = vmul.f32 %v2199, %v656
        %v2228 = vmul.f32 %v2204, %v656
        %v2229 = vmul.f32 %v2209, %v656
        %v2230 = vmul.f32 %v2214, %v656
        %v2231 = vmul.f32 %v2219, %v656
        %v2232 = vmul.f32 %v2224, %v656
        %v2233 = vadd.f32 %v2225, %v2226
        %v2234 = vadd.f32 %v2233, %v2227
        %v2235 = vadd.f32 %v2234, %v2228
        %v2236 = vadd.f32 %v2235, %v2229
        %v2237 = vadd.f32 %v2236, %v2230
        %v2238 = vadd.f32 %v2237, %v2231
        %v2239 = vadd.f32 %v2238, %v2232
        %v2240 = vmul.f32 %v2239, %v2119
        %v2241 = vadd.f32 %v2240, 1e-05
        %v2242 = vrsqrt.pop %v2241
        %v2243 = vmul.f32 %v2242, %v2241
        %v2244 = vmul.f32 %v2243, %v2242
        %v2245 = vmul.f32 0.5, %v2244
        %v2246 = vsub.f32 1.5, %v2245
        %v2247 = vmul.f32 %v2242, %v2246
        %vm2248 = vweird.f32 %v2241
        %vm2249 = vweird.f32 %v2242
        %vm2250 = vmor %vm2248, %vm2249
        %v2251 = vsel %vm2250, %v2242, %v2247
        %v2252 = vmul.f32 %v2121, %v2251
        %v2253 = vmul.f32 %v2122, %v2251
        %v2254 = vmul.f32 %v2123, %v2251
        %v2255 = vmul.f32 %v2124, %v2251
        %v2256 = vmul.f32 %v2125, %v2251
        %v2257 = vmul.f32 %v2126, %v2251
        %v2258 = vmul.f32 %v2127, %v2251
        %v2259 = vmul.f32 %v2128, %v2251
        %v2260 = vmul.f32 %v2129, %v2251
        %v2261 = vmul.f32 %v2130, %v2251
        %v2262 = vmul.f32 %v2131, %v2251
        %v2263 = vmul.f32 %v2132, %v2251
        %v2264 = vmul.f32 %v2133, %v2251
        %v2265 = vmul.f32 %v2134, %v2251
        %v2266 = vmul.f32 %v2135, %v2251
        %v2267 = vmul.f32 %v2136, %v2251
        %v2268 = vmul.f32 %v2137, %v2251
        %v2269 = vmul.f32 %v2138, %v2251
        %v2270 = vmul.f32 %v2139, %v2251
        %v2271 = vmul.f32 %v2140, %v2251
        %v2272 = vmul.f32 %v2141, %v2251
        %v2273 = vmul.f32 %v2142, %v2251
        %v2274 = vmul.f32 %v2143, %v2251
        %v2275 = vmul.f32 %v2144, %v2251
        %v2276 = vmul.f32 %v2145, %v2251
        %v2277 = vmul.f32 %v2146, %v2251
        %v2278 = vmul.f32 %v2147, %v2251
        %v2279 = vmul.f32 %v2148, %v2251
        %v2280 = vmul.f32 %v2149, %v2251
        %v2281 = vmul.f32 %v2150, %v2251
        %v2282 = vmul.f32 %v2151, %v2251
        %v2283 = vmul.f32 %v2152, %v2251
        %v2292 = vperm.slane %v2042, 0
        %v2293 = vperm.slane %v2042, 1
        %v2294 = vperm.slane %v2042, 2
        %v2295 = vperm.slane %v2042, 3
        %v2296 = vperm.slane %v2043, 0
        %v2297 = vperm.slane %v2043, 1
        %v2298 = vperm.slane %v2043, 2
        %v2299 = vperm.slane %v2043, 3
        %v2300 = vperm.slane %v2044, 0
        %v2301 = vperm.slane %v2044, 1
        %v2302 = vperm.slane %v2044, 2
        %v2303 = vperm.slane %v2044, 3
        %v2304 = vperm.slane %v2045, 0
        %v2305 = vperm.slane %v2045, 1
        %v2306 = vperm.slane %v2045, 2
        %v2307 = vperm.slane %v2045, 3
        %v2308 = vperm.slane %v2046, 0
        %v2309 = vperm.slane %v2046, 1
        %v2310 = vperm.slane %v2046, 2
        %v2311 = vperm.slane %v2046, 3
        %v2312 = vperm.slane %v2047, 0
        %v2313 = vperm.slane %v2047, 1
        %v2314 = vperm.slane %v2047, 2
        %v2315 = vperm.slane %v2047, 3
        %v2316 = vperm.slane %v2048, 0
        %v2317 = vperm.slane %v2048, 1
        %v2318 = vperm.slane %v2048, 2
        %v2319 = vperm.slane %v2048, 3
        %v2320 = vperm.slane %v2049, 0
        %v2321 = vperm.slane %v2049, 1
        %v2322 = vperm.slane %v2049, 2
        %v2323 = vperm.slane %v2049, 3
        %v2356 = vmul.f32 %v2252, %v2292
        %v2357 = vmul.f32 %v2253, %v2293
        %v2358 = vmul.f32 %v2254, %v2294
        %v2359 = vmul.f32 %v2255, %v2295
        %v2360 = vmul.f32 %v2256, %v2296
        %v2361 = vmul.f32 %v2257, %v2297
        %v2362 = vmul.f32 %v2258, %v2298
        %v2363 = vmul.f32 %v2259, %v2299
        %v2364 = vmul.f32 %v2260, %v2300
        %v2365 = vmul.f32 %v2261, %v2301
        %v2366 = vmul.f32 %v2262, %v2302
        %v2367 = vmul.f32 %v2263, %v2303
        %v2368 = vmul.f32 %v2264, %v2304
        %v2369 = vmul.f32 %v2265, %v2305
        %v2370 = vmul.f32 %v2266, %v2306
        %v2371 = vmul.f32 %v2267, %v2307
        %v2372 = vmul.f32 %v2268, %v2308
        %v2373 = vmul.f32 %v2269, %v2309
        %v2374 = vmul.f32 %v2270, %v2310
        %v2375 = vmul.f32 %v2271, %v2311
        %v2376 = vmul.f32 %v2272, %v2312
        %v2377 = vmul.f32 %v2273, %v2313
        %v2378 = vmul.f32 %v2274, %v2314
        %v2379 = vmul.f32 %v2275, %v2315
        %v2380 = vmul.f32 %v2276, %v2316
        %v2381 = vmul.f32 %v2277, %v2317
        %v2382 = vmul.f32 %v2278, %v2318
        %v2383 = vmul.f32 %v2279, %v2319
        %v2384 = vmul.f32 %v2280, %v2320
        %v2385 = vmul.f32 %v2281, %v2321
        %v2386 = vmul.f32 %v2282, %v2322
        %v2387 = vmul.f32 %v2283, %v2323
        %v2396 = vperm.slane %v2050, 0
        %v2397 = vperm.slane %v2050, 1
        %v2398 = vperm.slane %v2050, 2
        %v2399 = vperm.slane %v2050, 3
        %v2400 = vperm.slane %v2051, 0
        %v2401 = vperm.slane %v2051, 1
        %v2402 = vperm.slane %v2051, 2
        %v2403 = vperm.slane %v2051, 3
        %v2404 = vperm.slane %v2052, 0
        %v2405 = vperm.slane %v2052, 1
        %v2406 = vperm.slane %v2052, 2
        %v2407 = vperm.slane %v2052, 3
        %v2408 = vperm.slane %v2053, 0
        %v2409 = vperm.slane %v2053, 1
        %v2410 = vperm.slane %v2053, 2
        %v2411 = vperm.slane %v2053, 3
        %v2412 = vperm.slane %v2054, 0
        %v2413 = vperm.slane %v2054, 1
        %v2414 = vperm.slane %v2054, 2
        %v2415 = vperm.slane %v2054, 3
        %v2416 = vperm.slane %v2055, 0
        %v2417 = vperm.slane %v2055, 1
        %v2418 = vperm.slane %v2055, 2
        %v2419 = vperm.slane %v2055, 3
        %v2420 = vperm.slane %v2056, 0
        %v2421 = vperm.slane %v2056, 1
        %v2422 = vperm.slane %v2056, 2
        %v2423 = vperm.slane %v2056, 3
        %v2424 = vperm.slane %v2057, 0
        %v2425 = vperm.slane %v2057, 1
        %v2426 = vperm.slane %v2057, 2
        %v2427 = vperm.slane %v2057, 3
        %v2460 = vadd.f32 %v2356, %v2396
        %v2461 = vadd.f32 %v2357, %v2397
        %v2462 = vadd.f32 %v2358, %v2398
        %v2463 = vadd.f32 %v2359, %v2399
        %v2464 = vadd.f32 %v2360, %v2400
        %v2465 = vadd.f32 %v2361, %v2401
        %v2466 = vadd.f32 %v2362, %v2402
        %v2467 = vadd.f32 %v2363, %v2403
        %v2468 = vadd.f32 %v2364, %v2404
        %v2469 = vadd.f32 %v2365, %v2405
        %v2470 = vadd.f32 %v2366, %v2406
        %v2471 = vadd.f32 %v2367, %v2407
        %v2472 = vadd.f32 %v2368, %v2408
        %v2473 = vadd.f32 %v2369, %v2409
        %v2474 = vadd.f32 %v2370, %v2410
        %v2475 = vadd.f32 %v2371, %v2411
        %v2476 = vadd.f32 %v2372, %v2412
        %v2477 = vadd.f32 %v2373, %v2413
        %v2478 = vadd.f32 %v2374, %v2414
        %v2479 = vadd.f32 %v2375, %v2415
        %v2480 = vadd.f32 %v2376, %v2416
        %v2481 = vadd.f32 %v2377, %v2417
        %v2482 = vadd.f32 %v2378, %v2418
        %v2483 = vadd.f32 %v2379, %v2419
        %v2484 = vadd.f32 %v2380, %v2420
        %v2485 = vadd.f32 %v2381, %v2421
        %v2486 = vadd.f32 %v2382, %v2422
        %v2487 = vadd.f32 %v2383, %v2423
        %v2488 = vadd.f32 %v2384, %v2424
        %v2489 = vadd.f32 %v2385, %v2425
        %v2490 = vadd.f32 %v2386, %v2426
        %v2491 = vadd.f32 %v2387, %v2427
        %vm2492 = vcmp.ge.f32.partialorder %v2460, 0.0
        %vm2493 = vcmp.ge.f32.partialorder %v2461, 0.0
        %vm2494 = vcmp.ge.f32.partialorder %v2462, 0.0
        %vm2495 = vcmp.ge.f32.partialorder %v2463, 0.0
        %vm2496 = vcmp.ge.f32.partialorder %v2464, 0.0
        %vm2497 = vcmp.ge.f32.partialorder %v2465, 0.0
        %vm2498 = vcmp.ge.f32.partialorder %v2466, 0.0
        %vm2499 = vcmp.ge.f32.partialorder %v2467, 0.0
        %vm2500 = vcmp.ge.f32.partialorder %v2468, 0.0
        %vm2501 = vcmp.ge.f32.partialorder %v2469, 0.0
        %vm2502 = vcmp.ge.f32.partialorder %v2470, 0.0
        %vm2503 = vcmp.ge.f32.partialorder %v2471, 0.0
        %vm2504 = vcmp.ge.f32.partialorder %v2472, 0.0
        %vm2505 = vcmp.ge.f32.partialorder %v2473, 0.0
        %vm2506 = vcmp.ge.f32.partialorder %v2474, 0.0
        %vm2507 = vcmp.ge.f32.partialorder %v2475, 0.0
        %vm2508 = vcmp.ge.f32.partialorder %v2476, 0.0
        %vm2509 = vcmp.ge.f32.partialorder %v2477, 0.0
        %vm2510 = vcmp.ge.f32.partialorder %v2478, 0.0
        %vm2511 = vcmp.ge.f32.partialorder %v2479, 0.0
        %vm2512 = vcmp.ge.f32.partialorder %v2480, 0.0
        %vm2513 = vcmp.ge.f32.partialorder %v2481, 0.0
        %vm2514 = vcmp.ge.f32.partialorder %v2482, 0.0
        %vm2515 = vcmp.ge.f32.partialorder %v2483, 0.0
        %vm2516 = vcmp.ge.f32.partialorder %v2484, 0.0
        %vm2517 = vcmp.ge.f32.partialorder %v2485, 0.0
        %vm2518 = vcmp.ge.f32.partialorder %v2486, 0.0
        %vm2519 = vcmp.ge.f32.partialorder %v2487, 0.0
        %vm2520 = vcmp.ge.f32.partialorder %v2488, 0.0
        %vm2521 = vcmp.ge.f32.partialorder %v2489, 0.0
        %vm2522 = vcmp.ge.f32.partialorder %v2490, 0.0
        %vm2523 = vcmp.ge.f32.partialorder %v2491, 0.0
        %v2524 = vmul.f32 %v2460, 0.02
        %v2525 = vmul.f32 %v2461, 0.02
        %v2526 = vmul.f32 %v2462, 0.02
        %v2527 = vmul.f32 %v2463, 0.02
        %v2528 = vmul.f32 %v2464, 0.02
        %v2529 = vmul.f32 %v2465, 0.02
        %v2530 = vmul.f32 %v2466, 0.02
        %v2531 = vmul.f32 %v2467, 0.02
        %v2532 = vmul.f32 %v2468, 0.02
        %v2533 = vmul.f32 %v2469, 0.02
        %v2534 = vmul.f32 %v2470, 0.02
        %v2535 = vmul.f32 %v2471, 0.02
        %v2536 = vmul.f32 %v2472, 0.02
        %v2537 = vmul.f32 %v2473, 0.02
        %v2538 = vmul.f32 %v2474, 0.02
        %v2539 = vmul.f32 %v2475, 0.02
        %v2540 = vmul.f32 %v2476, 0.02
        %v2541 = vmul.f32 %v2477, 0.02
        %v2542 = vmul.f32 %v2478, 0.02
        %v2543 = vmul.f32 %v2479, 0.02
        %v2544 = vmul.f32 %v2480, 0.02
        %v2545 = vmul.f32 %v2481, 0.02
        %v2546 = vmul.f32 %v2482, 0.02
        %v2547 = vmul.f32 %v2483, 0.02
        %v2548 = vmul.f32 %v2484, 0.02
        %v2549 = vmul.f32 %v2485, 0.02
        %v2550 = vmul.f32 %v2486, 0.02
        %v2551 = vmul.f32 %v2487, 0.02
        %v2552 = vmul.f32 %v2488, 0.02
        %v2553 = vmul.f32 %v2489, 0.02
        %v2554 = vmul.f32 %v2490, 0.02
        %v2555 = vmul.f32 %v2491, 0.02
        %v2556 = vsel %vm2492, %v2460, %v2524
        %v2557 = vsel %vm2493, %v2461, %v2525
        %v2558 = vsel %vm2494, %v2462, %v2526
        %v2559 = vsel %vm2495, %v2463, %v2527
        %v2560 = vsel %vm2496, %v2464, %v2528
        %v2561 = vsel %vm2497, %v2465, %v2529
        %v2562 = vsel %vm2498, %v2466, %v2530
        %v2563 = vsel %vm2499, %v2467, %v2531
        %v2564 = vsel %vm2500, %v2468, %v2532
        %v2565 = vsel %vm2501, %v2469, %v2533
        %v2566 = vsel %vm2502, %v2470, %v2534
        %v2567 = vsel %vm2503, %v2471, %v2535
        %v2568 = vsel %vm2504, %v2472, %v2536
        %v2569 = vsel %vm2505, %v2473, %v2537
        %v2570 = vsel %vm2506, %v2474, %v2538
        %v2571 = vsel %vm2507, %v2475, %v2539
        %v2572 = vsel %vm2508, %v2476, %v2540
        %v2573 = vsel %vm2509, %v2477, %v2541
        %v2574 = vsel %vm2510, %v2478, %v2542
        %v2575 = vsel %vm2511, %v2479, %v2543
        %v2576 = vsel %vm2512, %v2480, %v2544
        %v2577 = vsel %vm2513, %v2481, %v2545
        %v2578 = vsel %vm2514, %v2482, %v2546
        %v2579 = vsel %vm2515, %v2483, %v2547
        %v2580 = vsel %vm2516, %v2484, %v2548
        %v2581 = vsel %vm2517, %v2485, %v2549
        %v2582 = vsel %vm2518, %v2486, %v2550
        %v2583 = vsel %vm2519, %v2487, %v2551
        %v2584 = vsel %vm2520, %v2488, %v2552
        %v2585 = vsel %vm2521, %v2489, %v2553
        %v2586 = vsel %vm2522, %v2490, %v2554
        %v2587 = vsel %vm2523, %v2491, %v2555
        %v2588 = vadd.f32 %v2556, %v2557
        %v2589 = vadd.f32 %v2560, %v2561
        %v2590 = vadd.f32 %v2564, %v2565
        %v2591 = vadd.f32 %v2568, %v2569
        %v2592 = vadd.f32 %v2572, %v2573
        %v2593 = vadd.f32 %v2576, %v2577
        %v2594 = vadd.f32 %v2580, %v2581
        %v2595 = vadd.f32 %v2584, %v2585
        %v2596 = vadd.f32 %v2588, %v2558
        %v2597 = vadd.f32 %v2589, %v2562
        %v2598 = vadd.f32 %v2590, %v2566
        %v2599 = vadd.f32 %v2591, %v2570
        %v2600 = vadd.f32 %v2592, %v2574
        %v2601 = vadd.f32 %v2593, %v2578
        %v2602 = vadd.f32 %v2594, %v2582
        %v2603 = vadd.f32 %v2595, %v2586
        %v2604 = vadd.f32 %v2596, %v2559
        %v2605 = vadd.f32 %v2597, %v2563
        %v2606 = vadd.f32 %v2598, %v2567
        %v2607 = vadd.f32 %v2599, %v2571
        %v2608 = vadd.f32 %v2600, %v2575
        %v2609 = vadd.f32 %v2601, %v2579
        %v2610 = vadd.f32 %v2602, %v2583
        %v2611 = vadd.f32 %v2603, %v2587
        %v2612 = vmul.f32 %v2604, 0.25
        %v2613 = vmul.f32 %v2605, 0.25
        %v2614 = vmul.f32 %v2606, 0.25
        %v2615 = vmul.f32 %v2607, 0.25
        %v2616 = vmul.f32 %v2608, 0.25
        %v2617 = vmul.f32 %v2609, 0.25
        %v2618 = vmul.f32 %v2610, 0.25
        %v2619 = vmul.f32 %v2611, 0.25
        %2620 = vst [vmem:[%s632] sm:$0xff] %v2612
        %2621 = vst [vmem:[%s632 + $0x8] sm:$0xff] %v2613
        %2622 = vst [vmem:[%s632 + $0x10] sm:$0xff] %v2614
        %2623 = vst [vmem:[%s632 + $0x18] sm:$0xff] %v2615
        %2624 = vst [vmem:[%s632 + $0x20] sm:$0xff] %v2616
        %2625 = vst [vmem:[%s632 + $0x28] sm:$0xff] %v2617
        %2626 = vst [vmem:[%s632 + $0x30] sm:$0xff] %v2618
        %2627 = vst [vmem:[%s632 + $0x38] sm:$0xff] %v2619
        %s2628 = sand.u32 %s313, 1
        %s2629 = scalar_lea.sflag [#allocation5], %s2628
        %s2630 = sand.u32 %s313, 1
        %s2631 = smul.addr %s2630, 64
        %s2632 = scalar_lea.vmem [#allocation22], %s2631
        // Predicated region
        $region113: #{tpu_custom_call.1} parent=67 // pred_check
          %p2633 = pneg %p323
        $region114: #{tpu_custom_call.1} parent=67 // pred_check_branch
          %2635 = sbr.rel (%p2633) target = $region116
        $region115: #{tpu_custom_call.1} parent=67 // pred_region
          %2637 = vsyncadd %s2629, 0
          %s2638 = smul.addr %s38, 8
          %s2639 = scalar_lea.hbm %s12, %s2638
          %s2640 = sshll.u32 %s2632, 4
          %s2641 = int_to_ptr.vmem [resolvable:$true] %s2640
          %s2642 = sshll.u32 %s2639, 4
          %s2643 = int_to_ptr.hbm [resolvable:$true] %s2642
          %2648 = dma.vmem_to_hbm [thread:$0]  %s2641, 1024, %s2643, %s2629, 128, 256, 8
        $region116: #{tpu_custom_call.1} parent=67 // pred_fallthru
          _
      $region68: #{tpu_custom_call.1} parent=5 // pred_fallthru
        _
      %p2649 = scmp.le.s32.totalorder 2, %s33
      // Predicated region
      $region117: #{tpu_custom_call.1} parent=5 // pred_check
        %p2650 = pneg %p2649
      $region118: #{tpu_custom_call.1} parent=5 // pred_check_branch
        %2652 = sbr.rel (%p2650) target = $region120
      $region119: #{tpu_custom_call.1} parent=5 // pred_region
        %s2653 = ssub.s32 %s33, 2
        // Predicated region
        $region121: #{tpu_custom_call.1} parent=119 // pred_check
          %p2654 = pneg %p329
        $region122: #{tpu_custom_call.1} parent=119 // pred_check_branch
          %2656 = sbr.rel (%p2654) target = $region124
        $region123: #{tpu_custom_call.1} parent=119 // pred_region
          %s2657 = sand.u32 %s314, 1
          %s2658 = scalar_lea.sflag [#allocation5], %s2657
          %s2659 = sand.u32 %s314, 1
          %s2660 = smul.addr %s2659, 64
          %s2661 = scalar_lea.vmem [#allocation22], %s2660
          %2663 = dma.done %s2658, 1024
        $region124: #{tpu_custom_call.1} parent=119 // pred_fallthru
          _
      $region120: #{tpu_custom_call.1} parent=5 // pred_fallthru
        _
    $region6: #{tpu_custom_call.1} parent=1 // loop_footer
      %s37 = sadd.s32 1, %s33
    $region7: #{tpu_custom_call.1} parent=1 // loop_footer_branch
      %32 = sbr.rel target = $region3
    $region8: #{tpu_custom_call.1} parent=1 // loop_exit
      _
    %2664 = vsyncpa [#allocation4], 1
    %s2665 = scalar_lea.sflag [#allocation4], 1
    %2666 = vsyncpa %s2665, 1
    %2667 = vsyncpa [#allocation8], 1
    %s2668 = scalar_lea.sflag [#allocation8], 1
    %2669 = vsyncpa %s2668, 1
    %2670 = vsyncpa [#allocation12], 1
    %2671 = vsyncpa [#allocation15], 1
    %2672 = vsyncpa [#allocation20], 1
    %2673 = vsyncpa [#allocation5], 1
    %s2674 = scalar_lea.sflag [#allocation5], 1
    %2675 = vsyncpa %s2674, 1
    %2676 = vsyncpa [#allocation6], 1
    %s2677 = scalar_lea.sflag [#allocation6], 1
    %2678 = vsyncpa %s2677, 1
    %2679 = vsyncpa [#allocation18], 1

</llo_original>
